<compile_context>
chip_gen: v7x
topology: tpu7x:2x2x1
jax: 0.10.0
libtpu: 0.0.40
codegen_flags: <defaults>
</compile_context>

<pallas_src>
import math

import jax
import jax.numpy as jnp
from jax import lax
from jax.experimental import pallas as pl
from jax.experimental.pallas import tpu as pltpu

# ---------------- config (small, consistent with the module) ----------------
VOCAB = 64
D_MODEL = 32
N_HEADS = 4
D_HEAD = D_MODEL // N_HEADS
D_FF = 64
N_LAYERS = 2
SEQ = 8
BATCH = 2
NEG_INF = -1e9
LN_EPS = 1e-5


# ------------------------------ in-kernel helpers ------------------------------
def _layernorm(x, g, b):
    mu = jnp.mean(x, axis=-1, keepdims=True)
    var = jnp.mean((x - mu) ** 2, axis=-1, keepdims=True)
    return (x - mu) * lax.rsqrt(var + LN_EPS) * g + b


def _mm(a, b):
    # bf16 MXU operands, f32 accumulation (bf16-native on v6e/v7x; v5e MXU also
    # accepts bf16 operands).  Vector math stays f32 outside the dots.
    return jnp.dot(a.astype(jnp.bfloat16), b.astype(jnp.bfloat16),
                   preferred_element_type=jnp.float32)


def _mm_t(a, b):
    # a @ b.T (contract last dims) without materializing a transpose.
    return lax.dot_general(a.astype(jnp.bfloat16), b.astype(jnp.bfloat16),
                           (((1,), (1,)), ((), ())),
                           preferred_element_type=jnp.float32)


# ------------------------------ fused Pallas kernel ------------------------------
def _gpt_fused_kernel(x_ref, bias_ref,
                      ln1_g_ref, ln1_b_ref, wqkv_ref, bqkv_ref, wo_ref, bo_ref,
                      ln2_g_ref, ln2_b_ref, w1_ref, b1_ref, w2_ref, b2_ref,
                      lnf_g_ref, lnf_b_ref, wg_ref, bg_ref,
                      o_ref):
    x = x_ref[...].astype(jnp.float32)          # (B*S, D) activations, VMEM-resident
    bias = bias_ref[...]                        # (B*S, B*S) additive mask bias
    scale = 1.0 / math.sqrt(D_HEAD)

    for l in range(N_LAYERS):                   # static unroll over decoder layers
        # ---- pre-LN masked multi-head self-attention + residual ----
        g1 = ln1_g_ref[l]
        be1 = ln1_b_ref[l]
        wqkv = wqkv_ref[l]                      # (D, 3D) fused QKV weight
        bqkv = bqkv_ref[l]                      # (1, 3D)
        wo = wo_ref[l]                          # (D, D)
        bo = bo_ref[l]                          # (1, D)

        xn = _layernorm(x, g1, be1)
        qkv = _mm(xn, wqkv) + bqkv              # (B*S, 3D) single fused projection

        attn = jnp.zeros_like(x)
        for h in range(N_HEADS):                # static unrolled head loop
            lo = h * D_HEAD
            q_h = qkv[:, lo:lo + D_HEAD]
            k_h = qkv[:, D_MODEL + lo:D_MODEL + lo + D_HEAD]
            v_h = qkv[:, 2 * D_MODEL + lo:2 * D_MODEL + lo + D_HEAD]

            s = _mm_t(q_h, k_h) * scale + bias  # (B*S, B*S), block-causal bias
            s = s - jnp.max(s, axis=-1, keepdims=True)
            e = jnp.exp(s)
            p = e * pl.reciprocal(jnp.sum(e, axis=-1, keepdims=True), approx=True)

            ctx = _mm(p, v_h)                   # (B*S, D_HEAD)
            # concat_h(ctx_h) @ Wo  ==  sum_h ctx_h @ Wo[h*Dh:(h+1)*Dh, :]
            attn = attn + _mm(ctx, wo[lo:lo + D_HEAD, :])

        x = x + attn + bo                       # residual (+ output-proj bias)

        # ---- pre-LN position-wise FFN + residual ----
        xn2 = _layernorm(x, ln2_g_ref[l], ln2_b_ref[l])
        hdn = jnp.maximum(_mm(xn2, w1_ref[l]) + b1_ref[l], 0.0)   # ReLU
        x = x + _mm(hdn, w2_ref[l]) + b2_ref[l]

    # ---- generator: final LayerNorm + vocab projection + log_softmax ----
    xn = _layernorm(x, lnf_g_ref[...], lnf_b_ref[...])
    z = _mm(xn, wg_ref[...]) + bg_ref[...]
    z = z - jnp.max(z, axis=-1, keepdims=True)
    o_ref[...] = (z - jnp.log(jnp.sum(jnp.exp(z), axis=-1, keepdims=True))
                  ).astype(o_ref.dtype)


# ------------------------------ host-side glue ------------------------------
def sinusoidal_pe(seq, d):
    pos = jnp.arange(seq, dtype=jnp.float32)[:, None]
    div = jnp.exp(jnp.arange(0, d, 2, dtype=jnp.float32) * (-math.log(10000.0) / d))
    pe = jnp.zeros((seq, d), jnp.float32)
    pe = pe.at[:, 0::2].set(jnp.sin(pos * div))
    pe = pe.at[:, 1::2].set(jnp.cos(pos * div))
    return pe


def _stack_params(params):
    """Stack per-layer params so the fused kernel indexes them with a static layer id."""
    layers = params["layers"]

    def stk(name):
        return jnp.stack([lyr[name] for lyr in layers])

    st = {
        "ln1_g": stk("ln1_g").reshape(N_LAYERS, 1, D_MODEL),
        "ln1_b": stk("ln1_b").reshape(N_LAYERS, 1, D_MODEL),
        "wqkv": jnp.stack([jnp.concatenate([l["wq"], l["wk"], l["wv"]], axis=1)
                           for l in layers]),                      # (L, D, 3D)
        "bqkv": jnp.stack([jnp.concatenate([l["bq"], l["bk"], l["bv"]])
                           for l in layers]).reshape(N_LAYERS, 1, 3 * D_MODEL),
        "wo": stk("wo"),                                           # (L, D, D)
        "bo": stk("bo").reshape(N_LAYERS, 1, D_MODEL),
        "ln2_g": stk("ln2_g").reshape(N_LAYERS, 1, D_MODEL),
        "ln2_b": stk("ln2_b").reshape(N_LAYERS, 1, D_MODEL),
        "w1": stk("w1"),                                           # (L, D, D_FF)
        "b1": stk("b1").reshape(N_LAYERS, 1, D_FF),
        "w2": stk("w2"),                                           # (L, D_FF, D)
        "b2": stk("b2").reshape(N_LAYERS, 1, D_MODEL),
        "lnf_g": params["lnf_g"].reshape(1, D_MODEL),
        "lnf_b": params["lnf_b"].reshape(1, D_MODEL),
        "wg": params["wg"],                                        # (D, V)
        "bg": params["bg"].reshape(1, VOCAB),
    }
    return st


def gpt_forward(params, tokens, mask):
    """forward(x, mask): decoder stack, take last position, generator log-probs."""
    B, S = tokens.shape
    BS = B * S

    # embed (glue): Embedding(vocab, d_model) * sqrt(d_model) + PositionalEncoding
    x = jnp.take(params["tok_emb"], tokens, axis=0) * math.sqrt(D_MODEL)
    x = x + sinusoidal_pe(S, D_MODEL)[None]
    x2d = x.reshape(BS, D_MODEL).astype(jnp.float32)

    # Block-diagonal additive attention bias: causal (per `mask`) inside each batch
    # block, -1e9 across batches -> one kernel handles all B*S rows at once.
    keep = jnp.kron(jnp.eye(B, dtype=jnp.float32),
                    (mask > 0.0).astype(jnp.float32))              # (BS, BS)
    bias = jnp.where(keep > 0.0, 0.0, NEG_INF).astype(jnp.float32)

    st = _stack_params(params)
    args = [x2d, bias,
            st["ln1_g"], st["ln1_b"], st["wqkv"], st["bqkv"], st["wo"], st["bo"],
            st["ln2_g"], st["ln2_b"], st["w1"], st["b1"], st["w2"], st["b2"],
            st["lnf_g"], st["lnf_b"], st["wg"], st["bg"]]

    # full-array blocks: everything lives in VMEM for the single grid step
    in_specs = [pl.BlockSpec(a.shape, (lambda i, n=a.ndim: (0,) * n)) for a in args]

    # advisory cost hint for XLA's scheduling of the surrounding glue
    flops = N_LAYERS * (
        2 * BS * D_MODEL * 3 * D_MODEL
        + N_HEADS * (2 * BS * BS * D_HEAD + 2 * BS * BS * D_HEAD
                     + 2 * BS * D_HEAD * D_MODEL)
        + 2 * BS * D_MODEL * D_FF + 2 * BS * D_FF * D_MODEL
    ) + 2 * BS * D_MODEL * VOCAB
    transcendentals = N_LAYERS * N_HEADS * BS * BS + BS * VOCAB
    bytes_accessed = int(sum(a.size * a.dtype.itemsize for a in args) + BS * VOCAB * 4)

    logits_all = pl.pallas_call(
        _gpt_fused_kernel,
        out_shape=jax.ShapeDtypeStruct((BS, VOCAB), jnp.float32),
        grid=(1,),
        in_specs=in_specs,
        out_specs=pl.BlockSpec((BS, VOCAB), lambda i: (0, 0)),
        compiler_params=pltpu.CompilerParams(dimension_semantics=("arbitrary",)),
        cost_estimate=pl.CostEstimate(flops=flops,
                                      transcendentals=transcendentals,
                                      bytes_accessed=bytes_accessed),
    )(*args)

    # `decode(x, mask)[-1]` -> last sequence position (generator is row-wise, so
    # selecting after the fused generator is identical).
    return logits_all.reshape(B, S, VOCAB)[:, -1, :]


# ------------------------------ parameter init ------------------------------
def init_params(key):
    keys = jax.random.split(key, 2 + 6 * N_LAYERS)
    idx = 0
    scale = 0.02

    def nrm(shape):
        nonlocal idx
        k = keys[idx]
        idx += 1
        return scale * jax.random.normal(k, shape, jnp.float32)

    params = {"tok_emb": nrm((VOCAB, D_MODEL)), "layers": []}
    for _ in range(N_LAYERS):
        params["layers"].append({
            "ln1_g": jnp.ones((D_MODEL,), jnp.float32),
            "ln1_b": jnp.zeros((D_MODEL,), jnp.float32),
            "wq": nrm((D_MODEL, D_MODEL)), "bq": jnp.zeros((D_MODEL,), jnp.float32),
            "wk": nrm((D_MODEL, D_MODEL)), "bk": jnp.zeros((D_MODEL,), jnp.float32),
            "wv": nrm((D_MODEL, D_MODEL)), "bv": jnp.zeros((D_MODEL,), jnp.float32),
            "wo": nrm((D_MODEL, D_MODEL)), "bo": jnp.zeros((D_MODEL,), jnp.float32),
            "ln2_g": jnp.ones((D_MODEL,), jnp.float32),
            "ln2_b": jnp.zeros((D_MODEL,), jnp.float32),
            "w1": nrm((D_MODEL, D_FF)), "b1": jnp.zeros((D_FF,), jnp.float32),
            "w2": nrm((D_FF, D_MODEL)), "b2": jnp.zeros((D_MODEL,), jnp.float32),
        })
    params["lnf_g"] = jnp.ones((D_MODEL,), jnp.float32)
    params["lnf_b"] = jnp.zeros((D_MODEL,), jnp.float32)
    params["wg"] = nrm((D_MODEL, VOCAB))
    params["bg"] = jnp.zeros((VOCAB,), jnp.float32)
    return params


if __name__ == "__main__":
    key = jax.random.PRNGKey(0)
    pkey, xkey = jax.random.split(key)
    params = init_params(pkey)

    tokens = jax.random.randint(xkey, (BATCH, SEQ), 0, VOCAB, dtype=jnp.int32)
    # subsequent_mask(S): lower-triangular causal mask (1 = attend)
    mask = jnp.tril(jnp.ones((SEQ, SEQ), jnp.float32))

    # TODO(synk): reference `forward` returns an undefined `prob`; we return the
    # generator's log-probabilities for the last position, shape (BATCH, VOCAB).
    log_probs = gpt_forward(params, tokens, mask)
    jax.block_until_ready(log_probs)
    assert log_probs.shape == (BATCH, VOCAB)
    assert bool(jnp.all(jnp.isfinite(log_probs)))
    print("KERNEL_OK")
</pallas_src>

<mosaic_0001>
module attributes {stable_mosaic.version = 11 : i64} {
  func.func @_gpt_fused_kernel(%arg0: i32, %arg1: memref<16x32xf32, #tpu.memory_space<vmem>>, %arg2: memref<16x16xf32, #tpu.memory_space<vmem>>, %arg3: memref<2x1x32xf32, #tpu.memory_space<vmem>>, %arg4: memref<2x1x32xf32, #tpu.memory_space<vmem>>, %arg5: memref<2x32x96xf32, #tpu.memory_space<vmem>>, %arg6: memref<2x1x96xf32, #tpu.memory_space<vmem>>, %arg7: memref<2x32x32xf32, #tpu.memory_space<vmem>>, %arg8: memref<2x1x32xf32, #tpu.memory_space<vmem>>, %arg9: memref<2x1x32xf32, #tpu.memory_space<vmem>>, %arg10: memref<2x1x32xf32, #tpu.memory_space<vmem>>, %arg11: memref<2x32x64xf32, #tpu.memory_space<vmem>>, %arg12: memref<2x1x64xf32, #tpu.memory_space<vmem>>, %arg13: memref<2x64x32xf32, #tpu.memory_space<vmem>>, %arg14: memref<2x1x32xf32, #tpu.memory_space<vmem>>, %arg15: memref<1x32xf32, #tpu.memory_space<vmem>>, %arg16: memref<1x32xf32, #tpu.memory_space<vmem>>, %arg17: memref<32x64xf32, #tpu.memory_space<vmem>>, %arg18: memref<1x64xf32, #tpu.memory_space<vmem>>, %arg19: memref<16x64xf32, #tpu.memory_space<vmem>>) attributes {dimension_semantics = [#tpu.dimension_semantics<arbitrary>], iteration_bounds = array<i64: 1>, scalar_prefetch = 0 : i64, scratch_operands = 0 : i64, tpu.core_type = #tpu.core_type<tc>, window_params = [{pipeline_mode = #tpu.pipeline_mode<synchronous>, transform_indices = @transform_0, window_bounds = array<i64: 16, 32>}, {pipeline_mode = #tpu.pipeline_mode<synchronous>, transform_indices = @transform_1, window_bounds = array<i64: 16, 16>}, {pipeline_mode = #tpu.pipeline_mode<synchronous>, transform_indices = @transform_2, window_bounds = array<i64: 2, 1, 32>}, {pipeline_mode = #tpu.pipeline_mode<synchronous>, transform_indices = @transform_3, window_bounds = array<i64: 2, 1, 32>}, {pipeline_mode = #tpu.pipeline_mode<synchronous>, transform_indices = @transform_4, window_bounds = array<i64: 2, 32, 96>}, {pipeline_mode = #tpu.pipeline_mode<synchronous>, transform_indices = @transform_5, window_bounds = array<i64: 2, 1, 96>}, {pipeline_mode = #tpu.pipeline_mode<synchronous>, transform_indices = @transform_6, window_bounds = array<i64: 2, 32, 32>}, {pipeline_mode = #tpu.pipeline_mode<synchronous>, transform_indices = @transform_7, window_bounds = array<i64: 2, 1, 32>}, {pipeline_mode = #tpu.pipeline_mode<synchronous>, transform_indices = @transform_8, window_bounds = array<i64: 2, 1, 32>}, {pipeline_mode = #tpu.pipeline_mode<synchronous>, transform_indices = @transform_9, window_bounds = array<i64: 2, 1, 32>}, {pipeline_mode = #tpu.pipeline_mode<synchronous>, transform_indices = @transform_10, window_bounds = array<i64: 2, 32, 64>}, {pipeline_mode = #tpu.pipeline_mode<synchronous>, transform_indices = @transform_11, window_bounds = array<i64: 2, 1, 64>}, {pipeline_mode = #tpu.pipeline_mode<synchronous>, transform_indices = @transform_12, window_bounds = array<i64: 2, 64, 32>}, {pipeline_mode = #tpu.pipeline_mode<synchronous>, transform_indices = @transform_13, window_bounds = array<i64: 2, 1, 32>}, {pipeline_mode = #tpu.pipeline_mode<synchronous>, transform_indices = @transform_14, window_bounds = array<i64: 1, 32>}, {pipeline_mode = #tpu.pipeline_mode<synchronous>, transform_indices = @transform_15, window_bounds = array<i64: 1, 32>}, {pipeline_mode = #tpu.pipeline_mode<synchronous>, transform_indices = @transform_16, window_bounds = array<i64: 32, 64>}, {pipeline_mode = #tpu.pipeline_mode<synchronous>, transform_indices = @transform_17, window_bounds = array<i64: 1, 64>}, {pipeline_mode = #tpu.pipeline_mode<synchronous>, transform_indices = @transform_18, window_bounds = array<i64: 16, 64>}]} {
    %c0 = arith.constant 0 : index
    %c0_0 = arith.constant 0 : index
    %0 = vector.load %arg1[%c0, %c0_0] : memref<16x32xf32, #tpu.memory_space<vmem>>, vector<16x32xf32>
    %c0_1 = arith.constant 0 : index
    %c0_2 = arith.constant 0 : index
    %1 = vector.load %arg2[%c0_1, %c0_2] : memref<16x16xf32, #tpu.memory_space<vmem>>, vector<16x16xf32>
    %c0_3 = arith.constant 0 : index
    %c0_4 = arith.constant 0 : index
    %c0_5 = arith.constant 0 : index
    %2 = vector.load %arg3[%c0_3, %c0_4, %c0_5] : memref<2x1x32xf32, #tpu.memory_space<vmem>>, vector<1x1x32xf32>
    %3 = vector.shape_cast %2 : vector<1x1x32xf32> to vector<1x32xf32>
    %c0_6 = arith.constant 0 : index
    %c0_7 = arith.constant 0 : index
    %c0_8 = arith.constant 0 : index
    %4 = vector.load %arg4[%c0_6, %c0_7, %c0_8] : memref<2x1x32xf32, #tpu.memory_space<vmem>>, vector<1x1x32xf32>
    %5 = vector.shape_cast %4 : vector<1x1x32xf32> to vector<1x32xf32>
    %c0_9 = arith.constant 0 : index
    %c0_10 = arith.constant 0 : index
    %c0_11 = arith.constant 0 : index
    %6 = vector.load %arg5[%c0_9, %c0_10, %c0_11] : memref<2x32x96xf32, #tpu.memory_space<vmem>>, vector<1x32x96xf32>
    %7 = vector.shape_cast %6 : vector<1x32x96xf32> to vector<32x96xf32>
    %c0_12 = arith.constant 0 : index
    %c0_13 = arith.constant 0 : index
    %c0_14 = arith.constant 0 : index
    %8 = vector.load %arg6[%c0_12, %c0_13, %c0_14] : memref<2x1x96xf32, #tpu.memory_space<vmem>>, vector<1x1x96xf32>
    %9 = vector.shape_cast %8 : vector<1x1x96xf32> to vector<1x96xf32>
    %c0_15 = arith.constant 0 : index
    %c0_16 = arith.constant 0 : index
    %c0_17 = arith.constant 0 : index
    %10 = vector.load %arg7[%c0_15, %c0_16, %c0_17] : memref<2x32x32xf32, #tpu.memory_space<vmem>>, vector<1x32x32xf32>
    %11 = vector.shape_cast %10 : vector<1x32x32xf32> to vector<32x32xf32>
    %c0_18 = arith.constant 0 : index
    %c0_19 = arith.constant 0 : index
    %c0_20 = arith.constant 0 : index
    %12 = vector.load %arg8[%c0_18, %c0_19, %c0_20] : memref<2x1x32xf32, #tpu.memory_space<vmem>>, vector<1x1x32xf32>
    %13 = vector.shape_cast %12 : vector<1x1x32xf32> to vector<1x32xf32>
    %cst = arith.constant dense<0.000000e+00> : vector<16xf32>
    %14 = vector.multi_reduction <add>, %0, %cst [1] : vector<16x32xf32> to vector<16xf32>
    %15 = vector.shape_cast %14 : vector<16xf32> to vector<16x1xf32>
    %cst_21 = arith.constant 3.200000e+01 : f32
    %16 = vector.broadcast %cst_21 : f32 to vector<16x1xf32>
    %17 = arith.divf %15, %16 : vector<16x1xf32>
    %18 = vector.broadcast %17 : vector<16x1xf32> to vector<16x32xf32>
    %19 = arith.subf %0, %18 : vector<16x32xf32>
    %20 = arith.mulf %19, %19 : vector<16x32xf32>
    %cst_22 = arith.constant dense<0.000000e+00> : vector<16xf32>
    %21 = vector.multi_reduction <add>, %20, %cst_22 [1] : vector<16x32xf32> to vector<16xf32>
    %22 = vector.shape_cast %21 : vector<16xf32> to vector<16x1xf32>
    %cst_23 = arith.constant 3.200000e+01 : f32
    %23 = vector.broadcast %cst_23 : f32 to vector<16x1xf32>
    %24 = arith.divf %22, %23 : vector<16x1xf32>
    %25 = vector.broadcast %17 : vector<16x1xf32> to vector<16x32xf32>
    %26 = arith.subf %0, %25 : vector<16x32xf32>
    %cst_24 = arith.constant 9.99999974E-6 : f32
    %27 = vector.broadcast %cst_24 : f32 to vector<16x1xf32>
    %28 = arith.addf %24, %27 : vector<16x1xf32>
    %29 = math.rsqrt %28 : vector<16x1xf32>
    %30 = vector.broadcast %29 : vector<16x1xf32> to vector<16x32xf32>
    %31 = arith.mulf %26, %30 : vector<16x32xf32>
    %32 = vector.broadcast %3 : vector<1x32xf32> to vector<16x32xf32>
    %33 = arith.mulf %31, %32 : vector<16x32xf32>
    %34 = vector.broadcast %5 : vector<1x32xf32> to vector<16x32xf32>
    %35 = arith.addf %33, %34 : vector<16x32xf32>
    %36 = arith.truncf %35 : vector<16x32xf32> to vector<16x32xbf16>
    %37 = arith.truncf %7 : vector<32x96xf32> to vector<32x96xbf16>
    %cst_25 = arith.constant dense<0.000000e+00> : vector<16x96xf32>
    %38 = tpu.matmul %36, %37, %cst_25 {dimension_numbers = #tpu.dot_dimension_numbers<[1], [0], [0], [1], [0, 0, 1, 1], [], []>} : vector<16x32xbf16>, vector<32x96xbf16>, vector<16x96xf32> -> vector<16x96xf32>
    %39 = vector.broadcast %9 : vector<1x96xf32> to vector<16x96xf32>
    %40 = arith.addf %38, %39 : vector<16x96xf32>
    %cst_26 = arith.constant 0.000000e+00 : f32
    %41 = vector.broadcast %cst_26 : f32 to vector<16x32xf32>
    %42 = vector.extract_strided_slice %40 {offsets = [0, 0], sizes = [16, 8], strides = [1, 1]} : vector<16x96xf32> to vector<16x8xf32>
    %43 = vector.extract_strided_slice %40 {offsets = [0, 32], sizes = [16, 8], strides = [1, 1]} : vector<16x96xf32> to vector<16x8xf32>
    %44 = vector.extract_strided_slice %40 {offsets = [0, 64], sizes = [16, 8], strides = [1, 1]} : vector<16x96xf32> to vector<16x8xf32>
    %45 = arith.truncf %42 : vector<16x8xf32> to vector<16x8xbf16>
    %46 = arith.truncf %43 : vector<16x8xf32> to vector<16x8xbf16>
    %cst_27 = arith.constant dense<0.000000e+00> : vector<16x16xf32>
    %47 = tpu.matmul %45, %46, %cst_27 {dimension_numbers = #tpu.dot_dimension_numbers<[1], [1], [0], [0], [0, 0, 1, 0], [], []>} : vector<16x8xbf16>, vector<16x8xbf16>, vector<16x16xf32> -> vector<16x16xf32>
    %cst_28 = arith.constant 0.353553385 : f32
    %48 = vector.broadcast %cst_28 : f32 to vector<16x16xf32>
    %49 = arith.mulf %47, %48 : vector<16x16xf32>
    %50 = arith.addf %49, %1 : vector<16x16xf32>
    %cst_29 = arith.constant dense<0xFF800000> : vector<16xf32>
    %51 = vector.multi_reduction <maximumf>, %50, %cst_29 [1] : vector<16x16xf32> to vector<16xf32>
    %52 = vector.shape_cast %51 : vector<16xf32> to vector<16x1xf32>
    %53 = vector.broadcast %52 : vector<16x1xf32> to vector<16x16xf32>
    %54 = arith.subf %50, %53 : vector<16x16xf32>
    %55 = math.exp %54 : vector<16x16xf32>
    %cst_30 = arith.constant dense<0.000000e+00> : vector<16xf32>
    %56 = vector.multi_reduction <add>, %55, %cst_30 [1] : vector<16x16xf32> to vector<16xf32>
    %57 = vector.shape_cast %56 : vector<16xf32> to vector<16x1xf32>
    %58 = tpu.reciprocal %57 {approx = true} : vector<16x1xf32> -> vector<16x1xf32>
    %59 = vector.broadcast %58 : vector<16x1xf32> to vector<16x16xf32>
    %60 = arith.mulf %55, %59 : vector<16x16xf32>
    %61 = arith.truncf %60 : vector<16x16xf32> to vector<16x16xbf16>
    %62 = arith.truncf %44 : vector<16x8xf32> to vector<16x8xbf16>
    %cst_31 = arith.constant dense<0.000000e+00> : vector<16x8xf32>
    %63 = tpu.matmul %61, %62, %cst_31 {dimension_numbers = #tpu.dot_dimension_numbers<[1], [0], [0], [1], [0, 0, 1, 1], [], []>} : vector<16x16xbf16>, vector<16x8xbf16>, vector<16x8xf32> -> vector<16x8xf32>
    %64 = vector.extract_strided_slice %11 {offsets = [0, 0], sizes = [8, 32], strides = [1, 1]} : vector<32x32xf32> to vector<8x32xf32>
    %65 = arith.truncf %63 : vector<16x8xf32> to vector<16x8xbf16>
    %66 = arith.truncf %64 : vector<8x32xf32> to vector<8x32xbf16>
    %cst_32 = arith.constant dense<0.000000e+00> : vector<16x32xf32>
    %67 = tpu.matmul %65, %66, %cst_32 {dimension_numbers = #tpu.dot_dimension_numbers<[1], [0], [0], [1], [0, 0, 1, 1], [], []>} : vector<16x8xbf16>, vector<8x32xbf16>, vector<16x32xf32> -> vector<16x32xf32>
    %68 = arith.addf %41, %67 : vector<16x32xf32>
    %69 = vector.extract_strided_slice %40 {offsets = [0, 8], sizes = [16, 8], strides = [1, 1]} : vector<16x96xf32> to vector<16x8xf32>
    %70 = vector.extract_strided_slice %40 {offsets = [0, 40], sizes = [16, 8], strides = [1, 1]} : vector<16x96xf32> to vector<16x8xf32>
    %71 = vector.extract_strided_slice %40 {offsets = [0, 72], sizes = [16, 8], strides = [1, 1]} : vector<16x96xf32> to vector<16x8xf32>
    %72 = arith.truncf %69 : vector<16x8xf32> to vector<16x8xbf16>
    %73 = arith.truncf %70 : vector<16x8xf32> to vector<16x8xbf16>
    %cst_33 = arith.constant dense<0.000000e+00> : vector<16x16xf32>
    %74 = tpu.matmul %72, %73, %cst_33 {dimension_numbers = #tpu.dot_dimension_numbers<[1], [1], [0], [0], [0, 0, 1, 0], [], []>} : vector<16x8xbf16>, vector<16x8xbf16>, vector<16x16xf32> -> vector<16x16xf32>
    %cst_34 = arith.constant 0.353553385 : f32
    %75 = vector.broadcast %cst_34 : f32 to vector<16x16xf32>
    %76 = arith.mulf %74, %75 : vector<16x16xf32>
    %77 = arith.addf %76, %1 : vector<16x16xf32>
    %cst_35 = arith.constant dense<0xFF800000> : vector<16xf32>
    %78 = vector.multi_reduction <maximumf>, %77, %cst_35 [1] : vector<16x16xf32> to vector<16xf32>
    %79 = vector.shape_cast %78 : vector<16xf32> to vector<16x1xf32>
    %80 = vector.broadcast %79 : vector<16x1xf32> to vector<16x16xf32>
    %81 = arith.subf %77, %80 : vector<16x16xf32>
    %82 = math.exp %81 : vector<16x16xf32>
    %cst_36 = arith.constant dense<0.000000e+00> : vector<16xf32>
    %83 = vector.multi_reduction <add>, %82, %cst_36 [1] : vector<16x16xf32> to vector<16xf32>
    %84 = vector.shape_cast %83 : vector<16xf32> to vector<16x1xf32>
    %85 = tpu.reciprocal %84 {approx = true} : vector<16x1xf32> -> vector<16x1xf32>
    %86 = vector.broadcast %85 : vector<16x1xf32> to vector<16x16xf32>
    %87 = arith.mulf %82, %86 : vector<16x16xf32>
    %88 = arith.truncf %87 : vector<16x16xf32> to vector<16x16xbf16>
    %89 = arith.truncf %71 : vector<16x8xf32> to vector<16x8xbf16>
    %cst_37 = arith.constant dense<0.000000e+00> : vector<16x8xf32>
    %90 = tpu.matmul %88, %89, %cst_37 {dimension_numbers = #tpu.dot_dimension_numbers<[1], [0], [0], [1], [0, 0, 1, 1], [], []>} : vector<16x16xbf16>, vector<16x8xbf16>, vector<16x8xf32> -> vector<16x8xf32>
    %91 = vector.extract_strided_slice %11 {offsets = [8, 0], sizes = [8, 32], strides = [1, 1]} : vector<32x32xf32> to vector<8x32xf32>
    %92 = arith.truncf %90 : vector<16x8xf32> to vector<16x8xbf16>
    %93 = arith.truncf %91 : vector<8x32xf32> to vector<8x32xbf16>
    %cst_38 = arith.constant dense<0.000000e+00> : vector<16x32xf32>
    %94 = tpu.matmul %92, %93, %cst_38 {dimension_numbers = #tpu.dot_dimension_numbers<[1], [0], [0], [1], [0, 0, 1, 1], [], []>} : vector<16x8xbf16>, vector<8x32xbf16>, vector<16x32xf32> -> vector<16x32xf32>
    %95 = arith.addf %68, %94 : vector<16x32xf32>
    %96 = vector.extract_strided_slice %40 {offsets = [0, 16], sizes = [16, 8], strides = [1, 1]} : vector<16x96xf32> to vector<16x8xf32>
    %97 = vector.extract_strided_slice %40 {offsets = [0, 48], sizes = [16, 8], strides = [1, 1]} : vector<16x96xf32> to vector<16x8xf32>
    %98 = vector.extract_strided_slice %40 {offsets = [0, 80], sizes = [16, 8], strides = [1, 1]} : vector<16x96xf32> to vector<16x8xf32>
    %99 = arith.truncf %96 : vector<16x8xf32> to vector<16x8xbf16>
    %100 = arith.truncf %97 : vector<16x8xf32> to vector<16x8xbf16>
    %cst_39 = arith.constant dense<0.000000e+00> : vector<16x16xf32>
    %101 = tpu.matmul %99, %100, %cst_39 {dimension_numbers = #tpu.dot_dimension_numbers<[1], [1], [0], [0], [0, 0, 1, 0], [], []>} : vector<16x8xbf16>, vector<16x8xbf16>, vector<16x16xf32> -> vector<16x16xf32>
    %cst_40 = arith.constant 0.353553385 : f32
    %102 = vector.broadcast %cst_40 : f32 to vector<16x16xf32>
    %103 = arith.mulf %101, %102 : vector<16x16xf32>
    %104 = arith.addf %103, %1 : vector<16x16xf32>
    %cst_41 = arith.constant dense<0xFF800000> : vector<16xf32>
    %105 = vector.multi_reduction <maximumf>, %104, %cst_41 [1] : vector<16x16xf32> to vector<16xf32>
    %106 = vector.shape_cast %105 : vector<16xf32> to vector<16x1xf32>
    %107 = vector.broadcast %106 : vector<16x1xf32> to vector<16x16xf32>
    %108 = arith.subf %104, %107 : vector<16x16xf32>
    %109 = math.exp %108 : vector<16x16xf32>
    %cst_42 = arith.constant dense<0.000000e+00> : vector<16xf32>
    %110 = vector.multi_reduction <add>, %109, %cst_42 [1] : vector<16x16xf32> to vector<16xf32>
    %111 = vector.shape_cast %110 : vector<16xf32> to vector<16x1xf32>
    %112 = tpu.reciprocal %111 {approx = true} : vector<16x1xf32> -> vector<16x1xf32>
    %113 = vector.broadcast %112 : vector<16x1xf32> to vector<16x16xf32>
    %114 = arith.mulf %109, %113 : vector<16x16xf32>
    %115 = arith.truncf %114 : vector<16x16xf32> to vector<16x16xbf16>
    %116 = arith.truncf %98 : vector<16x8xf32> to vector<16x8xbf16>
    %cst_43 = arith.constant dense<0.000000e+00> : vector<16x8xf32>
    %117 = tpu.matmul %115, %116, %cst_43 {dimension_numbers = #tpu.dot_dimension_numbers<[1], [0], [0], [1], [0, 0, 1, 1], [], []>} : vector<16x16xbf16>, vector<16x8xbf16>, vector<16x8xf32> -> vector<16x8xf32>
    %118 = vector.extract_strided_slice %11 {offsets = [16, 0], sizes = [8, 32], strides = [1, 1]} : vector<32x32xf32> to vector<8x32xf32>
    %119 = arith.truncf %117 : vector<16x8xf32> to vector<16x8xbf16>
    %120 = arith.truncf %118 : vector<8x32xf32> to vector<8x32xbf16>
    %cst_44 = arith.constant dense<0.000000e+00> : vector<16x32xf32>
    %121 = tpu.matmul %119, %120, %cst_44 {dimension_numbers = #tpu.dot_dimension_numbers<[1], [0], [0], [1], [0, 0, 1, 1], [], []>} : vector<16x8xbf16>, vector<8x32xbf16>, vector<16x32xf32> -> vector<16x32xf32>
    %122 = arith.addf %95, %121 : vector<16x32xf32>
    %123 = vector.extract_strided_slice %40 {offsets = [0, 24], sizes = [16, 8], strides = [1, 1]} : vector<16x96xf32> to vector<16x8xf32>
    %124 = vector.extract_strided_slice %40 {offsets = [0, 56], sizes = [16, 8], strides = [1, 1]} : vector<16x96xf32> to vector<16x8xf32>
    %125 = vector.extract_strided_slice %40 {offsets = [0, 88], sizes = [16, 8], strides = [1, 1]} : vector<16x96xf32> to vector<16x8xf32>
    %126 = arith.truncf %123 : vector<16x8xf32> to vector<16x8xbf16>
    %127 = arith.truncf %124 : vector<16x8xf32> to vector<16x8xbf16>
    %cst_45 = arith.constant dense<0.000000e+00> : vector<16x16xf32>
    %128 = tpu.matmul %126, %127, %cst_45 {dimension_numbers = #tpu.dot_dimension_numbers<[1], [1], [0], [0], [0, 0, 1, 0], [], []>} : vector<16x8xbf16>, vector<16x8xbf16>, vector<16x16xf32> -> vector<16x16xf32>
    %cst_46 = arith.constant 0.353553385 : f32
    %129 = vector.broadcast %cst_46 : f32 to vector<16x16xf32>
    %130 = arith.mulf %128, %129 : vector<16x16xf32>
    %131 = arith.addf %130, %1 : vector<16x16xf32>
    %cst_47 = arith.constant dense<0xFF800000> : vector<16xf32>
    %132 = vector.multi_reduction <maximumf>, %131, %cst_47 [1] : vector<16x16xf32> to vector<16xf32>
    %133 = vector.shape_cast %132 : vector<16xf32> to vector<16x1xf32>
    %134 = vector.broadcast %133 : vector<16x1xf32> to vector<16x16xf32>
    %135 = arith.subf %131, %134 : vector<16x16xf32>
    %136 = math.exp %135 : vector<16x16xf32>
    %cst_48 = arith.constant dense<0.000000e+00> : vector<16xf32>
    %137 = vector.multi_reduction <add>, %136, %cst_48 [1] : vector<16x16xf32> to vector<16xf32>
    %138 = vector.shape_cast %137 : vector<16xf32> to vector<16x1xf32>
    %139 = tpu.reciprocal %138 {approx = true} : vector<16x1xf32> -> vector<16x1xf32>
    %140 = vector.broadcast %139 : vector<16x1xf32> to vector<16x16xf32>
    %141 = arith.mulf %136, %140 : vector<16x16xf32>
    %142 = arith.truncf %141 : vector<16x16xf32> to vector<16x16xbf16>
    %143 = arith.truncf %125 : vector<16x8xf32> to vector<16x8xbf16>
    %cst_49 = arith.constant dense<0.000000e+00> : vector<16x8xf32>
    %144 = tpu.matmul %142, %143, %cst_49 {dimension_numbers = #tpu.dot_dimension_numbers<[1], [0], [0], [1], [0, 0, 1, 1], [], []>} : vector<16x16xbf16>, vector<16x8xbf16>, vector<16x8xf32> -> vector<16x8xf32>
    %145 = vector.extract_strided_slice %11 {offsets = [24, 0], sizes = [8, 32], strides = [1, 1]} : vector<32x32xf32> to vector<8x32xf32>
    %146 = arith.truncf %144 : vector<16x8xf32> to vector<16x8xbf16>
    %147 = arith.truncf %145 : vector<8x32xf32> to vector<8x32xbf16>
    %cst_50 = arith.constant dense<0.000000e+00> : vector<16x32xf32>
    %148 = tpu.matmul %146, %147, %cst_50 {dimension_numbers = #tpu.dot_dimension_numbers<[1], [0], [0], [1], [0, 0, 1, 1], [], []>} : vector<16x8xbf16>, vector<8x32xbf16>, vector<16x32xf32> -> vector<16x32xf32>
    %149 = arith.addf %122, %148 : vector<16x32xf32>
    %150 = arith.addf %0, %149 : vector<16x32xf32>
    %151 = vector.broadcast %13 : vector<1x32xf32> to vector<16x32xf32>
    %152 = arith.addf %150, %151 : vector<16x32xf32>
    %c0_51 = arith.constant 0 : index
    %c0_52 = arith.constant 0 : index
    %c0_53 = arith.constant 0 : index
    %153 = vector.load %arg9[%c0_51, %c0_52, %c0_53] : memref<2x1x32xf32, #tpu.memory_space<vmem>>, vector<1x1x32xf32>
    %154 = vector.shape_cast %153 : vector<1x1x32xf32> to vector<1x32xf32>
    %c0_54 = arith.constant 0 : index
    %c0_55 = arith.constant 0 : index
    %c0_56 = arith.constant 0 : index
    %155 = vector.load %arg10[%c0_54, %c0_55, %c0_56] : memref<2x1x32xf32, #tpu.memory_space<vmem>>, vector<1x1x32xf32>
    %156 = vector.shape_cast %155 : vector<1x1x32xf32> to vector<1x32xf32>
    %cst_57 = arith.constant dense<0.000000e+00> : vector<16xf32>
    %157 = vector.multi_reduction <add>, %152, %cst_57 [1] : vector<16x32xf32> to vector<16xf32>
    %158 = vector.shape_cast %157 : vector<16xf32> to vector<16x1xf32>
    %cst_58 = arith.constant 3.200000e+01 : f32
    %159 = vector.broadcast %cst_58 : f32 to vector<16x1xf32>
    %160 = arith.divf %158, %159 : vector<16x1xf32>
    %161 = vector.broadcast %160 : vector<16x1xf32> to vector<16x32xf32>
    %162 = arith.subf %152, %161 : vector<16x32xf32>
    %163 = arith.mulf %162, %162 : vector<16x32xf32>
    %cst_59 = arith.constant dense<0.000000e+00> : vector<16xf32>
    %164 = vector.multi_reduction <add>, %163, %cst_59 [1] : vector<16x32xf32> to vector<16xf32>
    %165 = vector.shape_cast %164 : vector<16xf32> to vector<16x1xf32>
    %cst_60 = arith.constant 3.200000e+01 : f32
    %166 = vector.broadcast %cst_60 : f32 to vector<16x1xf32>
    %167 = arith.divf %165, %166 : vector<16x1xf32>
    %168 = vector.broadcast %160 : vector<16x1xf32> to vector<16x32xf32>
    %169 = arith.subf %152, %168 : vector<16x32xf32>
    %cst_61 = arith.constant 9.99999974E-6 : f32
    %170 = vector.broadcast %cst_61 : f32 to vector<16x1xf32>
    %171 = arith.addf %167, %170 : vector<16x1xf32>
    %172 = math.rsqrt %171 : vector<16x1xf32>
    %173 = vector.broadcast %172 : vector<16x1xf32> to vector<16x32xf32>
    %174 = arith.mulf %169, %173 : vector<16x32xf32>
    %175 = vector.broadcast %154 : vector<1x32xf32> to vector<16x32xf32>
    %176 = arith.mulf %174, %175 : vector<16x32xf32>
    %177 = vector.broadcast %156 : vector<1x32xf32> to vector<16x32xf32>
    %178 = arith.addf %176, %177 : vector<16x32xf32>
    %c0_62 = arith.constant 0 : index
    %c0_63 = arith.constant 0 : index
    %c0_64 = arith.constant 0 : index
    %179 = vector.load %arg11[%c0_62, %c0_63, %c0_64] : memref<2x32x64xf32, #tpu.memory_space<vmem>>, vector<1x32x64xf32>
    %180 = vector.shape_cast %179 : vector<1x32x64xf32> to vector<32x64xf32>
    %181 = arith.truncf %178 : vector<16x32xf32> to vector<16x32xbf16>
    %182 = arith.truncf %180 : vector<32x64xf32> to vector<32x64xbf16>
    %cst_65 = arith.constant dense<0.000000e+00> : vector<16x64xf32>
    %183 = tpu.matmul %181, %182, %cst_65 {dimension_numbers = #tpu.dot_dimension_numbers<[1], [0], [0], [1], [0, 0, 1, 1], [], []>} : vector<16x32xbf16>, vector<32x64xbf16>, vector<16x64xf32> -> vector<16x64xf32>
    %c0_66 = arith.constant 0 : index
    %c0_67 = arith.constant 0 : index
    %c0_68 = arith.constant 0 : index
    %184 = vector.load %arg12[%c0_66, %c0_67, %c0_68] : memref<2x1x64xf32, #tpu.memory_space<vmem>>, vector<1x1x64xf32>
    %185 = vector.shape_cast %184 : vector<1x1x64xf32> to vector<1x64xf32>
    %186 = vector.broadcast %185 : vector<1x64xf32> to vector<16x64xf32>
    %187 = arith.addf %183, %186 : vector<16x64xf32>
    %cst_69 = arith.constant 0.000000e+00 : f32
    %188 = vector.broadcast %cst_69 : f32 to vector<16x64xf32>
    %189 = arith.maximumf %187, %188 : vector<16x64xf32>
    %c0_70 = arith.constant 0 : index
    %c0_71 = arith.constant 0 : index
    %c0_72 = arith.constant 0 : index
    %190 = vector.load %arg13[%c0_70, %c0_71, %c0_72] : memref<2x64x32xf32, #tpu.memory_space<vmem>>, vector<1x64x32xf32>
    %191 = vector.shape_cast %190 : vector<1x64x32xf32> to vector<64x32xf32>
    %192 = arith.truncf %189 : vector<16x64xf32> to vector<16x64xbf16>
    %193 = arith.truncf %191 : vector<64x32xf32> to vector<64x32xbf16>
    %cst_73 = arith.constant dense<0.000000e+00> : vector<16x32xf32>
    %194 = tpu.matmul %192, %193, %cst_73 {dimension_numbers = #tpu.dot_dimension_numbers<[1], [0], [0], [1], [0, 0, 1, 1], [], []>} : vector<16x64xbf16>, vector<64x32xbf16>, vector<16x32xf32> -> vector<16x32xf32>
    %195 = arith.addf %152, %194 : vector<16x32xf32>
    %c0_74 = arith.constant 0 : index
    %c0_75 = arith.constant 0 : index
    %c0_76 = arith.constant 0 : index
    %196 = vector.load %arg14[%c0_74, %c0_75, %c0_76] : memref<2x1x32xf32, #tpu.memory_space<vmem>>, vector<1x1x32xf32>
    %197 = vector.shape_cast %196 : vector<1x1x32xf32> to vector<1x32xf32>
    %198 = vector.broadcast %197 : vector<1x32xf32> to vector<16x32xf32>
    %199 = arith.addf %195, %198 : vector<16x32xf32>
    %c1 = arith.constant 1 : index
    %c0_77 = arith.constant 0 : index
    %c0_78 = arith.constant 0 : index
    %200 = vector.load %arg3[%c1, %c0_77, %c0_78] : memref<2x1x32xf32, #tpu.memory_space<vmem>>, vector<1x1x32xf32>
    %201 = vector.shape_cast %200 : vector<1x1x32xf32> to vector<1x32xf32>
    %c1_79 = arith.constant 1 : index
    %c0_80 = arith.constant 0 : index
    %c0_81 = arith.constant 0 : index
    %202 = vector.load %arg4[%c1_79, %c0_80, %c0_81] : memref<2x1x32xf32, #tpu.memory_space<vmem>>, vector<1x1x32xf32>
    %203 = vector.shape_cast %202 : vector<1x1x32xf32> to vector<1x32xf32>
    %c1_82 = arith.constant 1 : index
    %c0_83 = arith.constant 0 : index
    %c0_84 = arith.constant 0 : index
    %204 = vector.load %arg5[%c1_82, %c0_83, %c0_84] : memref<2x32x96xf32, #tpu.memory_space<vmem>>, vector<1x32x96xf32>
    %205 = vector.shape_cast %204 : vector<1x32x96xf32> to vector<32x96xf32>
    %c1_85 = arith.constant 1 : index
    %c0_86 = arith.constant 0 : index
    %c0_87 = arith.constant 0 : index
    %206 = vector.load %arg6[%c1_85, %c0_86, %c0_87] : memref<2x1x96xf32, #tpu.memory_space<vmem>>, vector<1x1x96xf32>
    %207 = vector.shape_cast %206 : vector<1x1x96xf32> to vector<1x96xf32>
    %c1_88 = arith.constant 1 : index
    %c0_89 = arith.constant 0 : index
    %c0_90 = arith.constant 0 : index
    %208 = vector.load %arg7[%c1_88, %c0_89, %c0_90] : memref<2x32x32xf32, #tpu.memory_space<vmem>>, vector<1x32x32xf32>
    %209 = vector.shape_cast %208 : vector<1x32x32xf32> to vector<32x32xf32>
    %c1_91 = arith.constant 1 : index
    %c0_92 = arith.constant 0 : index
    %c0_93 = arith.constant 0 : index
    %210 = vector.load %arg8[%c1_91, %c0_92, %c0_93] : memref<2x1x32xf32, #tpu.memory_space<vmem>>, vector<1x1x32xf32>
    %211 = vector.shape_cast %210 : vector<1x1x32xf32> to vector<1x32xf32>
    %cst_94 = arith.constant dense<0.000000e+00> : vector<16xf32>
    %212 = vector.multi_reduction <add>, %199, %cst_94 [1] : vector<16x32xf32> to vector<16xf32>
    %213 = vector.shape_cast %212 : vector<16xf32> to vector<16x1xf32>
    %cst_95 = arith.constant 3.200000e+01 : f32
    %214 = vector.broadcast %cst_95 : f32 to vector<16x1xf32>
    %215 = arith.divf %213, %214 : vector<16x1xf32>
    %216 = vector.broadcast %215 : vector<16x1xf32> to vector<16x32xf32>
    %217 = arith.subf %199, %216 : vector<16x32xf32>
    %218 = arith.mulf %217, %217 : vector<16x32xf32>
    %cst_96 = arith.constant dense<0.000000e+00> : vector<16xf32>
    %219 = vector.multi_reduction <add>, %218, %cst_96 [1] : vector<16x32xf32> to vector<16xf32>
    %220 = vector.shape_cast %219 : vector<16xf32> to vector<16x1xf32>
    %cst_97 = arith.constant 3.200000e+01 : f32
    %221 = vector.broadcast %cst_97 : f32 to vector<16x1xf32>
    %222 = arith.divf %220, %221 : vector<16x1xf32>
    %223 = vector.broadcast %215 : vector<16x1xf32> to vector<16x32xf32>
    %224 = arith.subf %199, %223 : vector<16x32xf32>
    %cst_98 = arith.constant 9.99999974E-6 : f32
    %225 = vector.broadcast %cst_98 : f32 to vector<16x1xf32>
    %226 = arith.addf %222, %225 : vector<16x1xf32>
    %227 = math.rsqrt %226 : vector<16x1xf32>
    %228 = vector.broadcast %227 : vector<16x1xf32> to vector<16x32xf32>
    %229 = arith.mulf %224, %228 : vector<16x32xf32>
    %230 = vector.broadcast %201 : vector<1x32xf32> to vector<16x32xf32>
    %231 = arith.mulf %229, %230 : vector<16x32xf32>
    %232 = vector.broadcast %203 : vector<1x32xf32> to vector<16x32xf32>
    %233 = arith.addf %231, %232 : vector<16x32xf32>
    %234 = arith.truncf %233 : vector<16x32xf32> to vector<16x32xbf16>
    %235 = arith.truncf %205 : vector<32x96xf32> to vector<32x96xbf16>
    %cst_99 = arith.constant dense<0.000000e+00> : vector<16x96xf32>
    %236 = tpu.matmul %234, %235, %cst_99 {dimension_numbers = #tpu.dot_dimension_numbers<[1], [0], [0], [1], [0, 0, 1, 1], [], []>} : vector<16x32xbf16>, vector<32x96xbf16>, vector<16x96xf32> -> vector<16x96xf32>
    %237 = vector.broadcast %207 : vector<1x96xf32> to vector<16x96xf32>
    %238 = arith.addf %236, %237 : vector<16x96xf32>
    %cst_100 = arith.constant 0.000000e+00 : f32
    %239 = vector.broadcast %cst_100 : f32 to vector<16x32xf32>
    %240 = vector.extract_strided_slice %238 {offsets = [0, 0], sizes = [16, 8], strides = [1, 1]} : vector<16x96xf32> to vector<16x8xf32>
    %241 = vector.extract_strided_slice %238 {offsets = [0, 32], sizes = [16, 8], strides = [1, 1]} : vector<16x96xf32> to vector<16x8xf32>
    %242 = vector.extract_strided_slice %238 {offsets = [0, 64], sizes = [16, 8], strides = [1, 1]} : vector<16x96xf32> to vector<16x8xf32>
    %243 = arith.truncf %240 : vector<16x8xf32> to vector<16x8xbf16>
    %244 = arith.truncf %241 : vector<16x8xf32> to vector<16x8xbf16>
    %cst_101 = arith.constant dense<0.000000e+00> : vector<16x16xf32>
    %245 = tpu.matmul %243, %244, %cst_101 {dimension_numbers = #tpu.dot_dimension_numbers<[1], [1], [0], [0], [0, 0, 1, 0], [], []>} : vector<16x8xbf16>, vector<16x8xbf16>, vector<16x16xf32> -> vector<16x16xf32>
    %cst_102 = arith.constant 0.353553385 : f32
    %246 = vector.broadcast %cst_102 : f32 to vector<16x16xf32>
    %247 = arith.mulf %245, %246 : vector<16x16xf32>
    %248 = arith.addf %247, %1 : vector<16x16xf32>
    %cst_103 = arith.constant dense<0xFF800000> : vector<16xf32>
    %249 = vector.multi_reduction <maximumf>, %248, %cst_103 [1] : vector<16x16xf32> to vector<16xf32>
    %250 = vector.shape_cast %249 : vector<16xf32> to vector<16x1xf32>
    %251 = vector.broadcast %250 : vector<16x1xf32> to vector<16x16xf32>
    %252 = arith.subf %248, %251 : vector<16x16xf32>
    %253 = math.exp %252 : vector<16x16xf32>
    %cst_104 = arith.constant dense<0.000000e+00> : vector<16xf32>
    %254 = vector.multi_reduction <add>, %253, %cst_104 [1] : vector<16x16xf32> to vector<16xf32>
    %255 = vector.shape_cast %254 : vector<16xf32> to vector<16x1xf32>
    %256 = tpu.reciprocal %255 {approx = true} : vector<16x1xf32> -> vector<16x1xf32>
    %257 = vector.broadcast %256 : vector<16x1xf32> to vector<16x16xf32>
    %258 = arith.mulf %253, %257 : vector<16x16xf32>
    %259 = arith.truncf %258 : vector<16x16xf32> to vector<16x16xbf16>
    %260 = arith.truncf %242 : vector<16x8xf32> to vector<16x8xbf16>
    %cst_105 = arith.constant dense<0.000000e+00> : vector<16x8xf32>
    %261 = tpu.matmul %259, %260, %cst_105 {dimension_numbers = #tpu.dot_dimension_numbers<[1], [0], [0], [1], [0, 0, 1, 1], [], []>} : vector<16x16xbf16>, vector<16x8xbf16>, vector<16x8xf32> -> vector<16x8xf32>
    %262 = vector.extract_strided_slice %209 {offsets = [0, 0], sizes = [8, 32], strides = [1, 1]} : vector<32x32xf32> to vector<8x32xf32>
    %263 = arith.truncf %261 : vector<16x8xf32> to vector<16x8xbf16>
    %264 = arith.truncf %262 : vector<8x32xf32> to vector<8x32xbf16>
    %cst_106 = arith.constant dense<0.000000e+00> : vector<16x32xf32>
    %265 = tpu.matmul %263, %264, %cst_106 {dimension_numbers = #tpu.dot_dimension_numbers<[1], [0], [0], [1], [0, 0, 1, 1], [], []>} : vector<16x8xbf16>, vector<8x32xbf16>, vector<16x32xf32> -> vector<16x32xf32>
    %266 = arith.addf %239, %265 : vector<16x32xf32>
    %267 = vector.extract_strided_slice %238 {offsets = [0, 8], sizes = [16, 8], strides = [1, 1]} : vector<16x96xf32> to vector<16x8xf32>
    %268 = vector.extract_strided_slice %238 {offsets = [0, 40], sizes = [16, 8], strides = [1, 1]} : vector<16x96xf32> to vector<16x8xf32>
    %269 = vector.extract_strided_slice %238 {offsets = [0, 72], sizes = [16, 8], strides = [1, 1]} : vector<16x96xf32> to vector<16x8xf32>
    %270 = arith.truncf %267 : vector<16x8xf32> to vector<16x8xbf16>
    %271 = arith.truncf %268 : vector<16x8xf32> to vector<16x8xbf16>
    %cst_107 = arith.constant dense<0.000000e+00> : vector<16x16xf32>
    %272 = tpu.matmul %270, %271, %cst_107 {dimension_numbers = #tpu.dot_dimension_numbers<[1], [1], [0], [0], [0, 0, 1, 0], [], []>} : vector<16x8xbf16>, vector<16x8xbf16>, vector<16x16xf32> -> vector<16x16xf32>
    %cst_108 = arith.constant 0.353553385 : f32
    %273 = vector.broadcast %cst_108 : f32 to vector<16x16xf32>
    %274 = arith.mulf %272, %273 : vector<16x16xf32>
    %275 = arith.addf %274, %1 : vector<16x16xf32>
    %cst_109 = arith.constant dense<0xFF800000> : vector<16xf32>
    %276 = vector.multi_reduction <maximumf>, %275, %cst_109 [1] : vector<16x16xf32> to vector<16xf32>
    %277 = vector.shape_cast %276 : vector<16xf32> to vector<16x1xf32>
    %278 = vector.broadcast %277 : vector<16x1xf32> to vector<16x16xf32>
    %279 = arith.subf %275, %278 : vector<16x16xf32>
    %280 = math.exp %279 : vector<16x16xf32>
    %cst_110 = arith.constant dense<0.000000e+00> : vector<16xf32>
    %281 = vector.multi_reduction <add>, %280, %cst_110 [1] : vector<16x16xf32> to vector<16xf32>
    %282 = vector.shape_cast %281 : vector<16xf32> to vector<16x1xf32>
    %283 = tpu.reciprocal %282 {approx = true} : vector<16x1xf32> -> vector<16x1xf32>
    %284 = vector.broadcast %283 : vector<16x1xf32> to vector<16x16xf32>
    %285 = arith.mulf %280, %284 : vector<16x16xf32>
    %286 = arith.truncf %285 : vector<16x16xf32> to vector<16x16xbf16>
    %287 = arith.truncf %269 : vector<16x8xf32> to vector<16x8xbf16>
    %cst_111 = arith.constant dense<0.000000e+00> : vector<16x8xf32>
    %288 = tpu.matmul %286, %287, %cst_111 {dimension_numbers = #tpu.dot_dimension_numbers<[1], [0], [0], [1], [0, 0, 1, 1], [], []>} : vector<16x16xbf16>, vector<16x8xbf16>, vector<16x8xf32> -> vector<16x8xf32>
    %289 = vector.extract_strided_slice %209 {offsets = [8, 0], sizes = [8, 32], strides = [1, 1]} : vector<32x32xf32> to vector<8x32xf32>
    %290 = arith.truncf %288 : vector<16x8xf32> to vector<16x8xbf16>
    %291 = arith.truncf %289 : vector<8x32xf32> to vector<8x32xbf16>
    %cst_112 = arith.constant dense<0.000000e+00> : vector<16x32xf32>
    %292 = tpu.matmul %290, %291, %cst_112 {dimension_numbers = #tpu.dot_dimension_numbers<[1], [0], [0], [1], [0, 0, 1, 1], [], []>} : vector<16x8xbf16>, vector<8x32xbf16>, vector<16x32xf32> -> vector<16x32xf32>
    %293 = arith.addf %266, %292 : vector<16x32xf32>
    %294 = vector.extract_strided_slice %238 {offsets = [0, 16], sizes = [16, 8], strides = [1, 1]} : vector<16x96xf32> to vector<16x8xf32>
    %295 = vector.extract_strided_slice %238 {offsets = [0, 48], sizes = [16, 8], strides = [1, 1]} : vector<16x96xf32> to vector<16x8xf32>
    %296 = vector.extract_strided_slice %238 {offsets = [0, 80], sizes = [16, 8], strides = [1, 1]} : vector<16x96xf32> to vector<16x8xf32>
    %297 = arith.truncf %294 : vector<16x8xf32> to vector<16x8xbf16>
    %298 = arith.truncf %295 : vector<16x8xf32> to vector<16x8xbf16>
    %cst_113 = arith.constant dense<0.000000e+00> : vector<16x16xf32>
    %299 = tpu.matmul %297, %298, %cst_113 {dimension_numbers = #tpu.dot_dimension_numbers<[1], [1], [0], [0], [0, 0, 1, 0], [], []>} : vector<16x8xbf16>, vector<16x8xbf16>, vector<16x16xf32> -> vector<16x16xf32>
    %cst_114 = arith.constant 0.353553385 : f32
    %300 = vector.broadcast %cst_114 : f32 to vector<16x16xf32>
    %301 = arith.mulf %299, %300 : vector<16x16xf32>
    %302 = arith.addf %301, %1 : vector<16x16xf32>
    %cst_115 = arith.constant dense<0xFF800000> : vector<16xf32>
    %303 = vector.multi_reduction <maximumf>, %302, %cst_115 [1] : vector<16x16xf32> to vector<16xf32>
    %304 = vector.shape_cast %303 : vector<16xf32> to vector<16x1xf32>
    %305 = vector.broadcast %304 : vector<16x1xf32> to vector<16x16xf32>
    %306 = arith.subf %302, %305 : vector<16x16xf32>
    %307 = math.exp %306 : vector<16x16xf32>
    %cst_116 = arith.constant dense<0.000000e+00> : vector<16xf32>
    %308 = vector.multi_reduction <add>, %307, %cst_116 [1] : vector<16x16xf32> to vector<16xf32>
    %309 = vector.shape_cast %308 : vector<16xf32> to vector<16x1xf32>
    %310 = tpu.reciprocal %309 {approx = true} : vector<16x1xf32> -> vector<16x1xf32>
    %311 = vector.broadcast %310 : vector<16x1xf32> to vector<16x16xf32>
    %312 = arith.mulf %307, %311 : vector<16x16xf32>
    %313 = arith.truncf %312 : vector<16x16xf32> to vector<16x16xbf16>
    %314 = arith.truncf %296 : vector<16x8xf32> to vector<16x8xbf16>
    %cst_117 = arith.constant dense<0.000000e+00> : vector<16x8xf32>
    %315 = tpu.matmul %313, %314, %cst_117 {dimension_numbers = #tpu.dot_dimension_numbers<[1], [0], [0], [1], [0, 0, 1, 1], [], []>} : vector<16x16xbf16>, vector<16x8xbf16>, vector<16x8xf32> -> vector<16x8xf32>
    %316 = vector.extract_strided_slice %209 {offsets = [16, 0], sizes = [8, 32], strides = [1, 1]} : vector<32x32xf32> to vector<8x32xf32>
    %317 = arith.truncf %315 : vector<16x8xf32> to vector<16x8xbf16>
    %318 = arith.truncf %316 : vector<8x32xf32> to vector<8x32xbf16>
    %cst_118 = arith.constant dense<0.000000e+00> : vector<16x32xf32>
    %319 = tpu.matmul %317, %318, %cst_118 {dimension_numbers = #tpu.dot_dimension_numbers<[1], [0], [0], [1], [0, 0, 1, 1], [], []>} : vector<16x8xbf16>, vector<8x32xbf16>, vector<16x32xf32> -> vector<16x32xf32>
    %320 = arith.addf %293, %319 : vector<16x32xf32>
    %321 = vector.extract_strided_slice %238 {offsets = [0, 24], sizes = [16, 8], strides = [1, 1]} : vector<16x96xf32> to vector<16x8xf32>
    %322 = vector.extract_strided_slice %238 {offsets = [0, 56], sizes = [16, 8], strides = [1, 1]} : vector<16x96xf32> to vector<16x8xf32>
    %323 = vector.extract_strided_slice %238 {offsets = [0, 88], sizes = [16, 8], strides = [1, 1]} : vector<16x96xf32> to vector<16x8xf32>
    %324 = arith.truncf %321 : vector<16x8xf32> to vector<16x8xbf16>
    %325 = arith.truncf %322 : vector<16x8xf32> to vector<16x8xbf16>
    %cst_119 = arith.constant dense<0.000000e+00> : vector<16x16xf32>
    %326 = tpu.matmul %324, %325, %cst_119 {dimension_numbers = #tpu.dot_dimension_numbers<[1], [1], [0], [0], [0, 0, 1, 0], [], []>} : vector<16x8xbf16>, vector<16x8xbf16>, vector<16x16xf32> -> vector<16x16xf32>
    %cst_120 = arith.constant 0.353553385 : f32
    %327 = vector.broadcast %cst_120 : f32 to vector<16x16xf32>
    %328 = arith.mulf %326, %327 : vector<16x16xf32>
    %329 = arith.addf %328, %1 : vector<16x16xf32>
    %cst_121 = arith.constant dense<0xFF800000> : vector<16xf32>
    %330 = vector.multi_reduction <maximumf>, %329, %cst_121 [1] : vector<16x16xf32> to vector<16xf32>
    %331 = vector.shape_cast %330 : vector<16xf32> to vector<16x1xf32>
    %332 = vector.broadcast %331 : vector<16x1xf32> to vector<16x16xf32>
    %333 = arith.subf %329, %332 : vector<16x16xf32>
    %334 = math.exp %333 : vector<16x16xf32>
    %cst_122 = arith.constant dense<0.000000e+00> : vector<16xf32>
    %335 = vector.multi_reduction <add>, %334, %cst_122 [1] : vector<16x16xf32> to vector<16xf32>
    %336 = vector.shape_cast %335 : vector<16xf32> to vector<16x1xf32>
    %337 = tpu.reciprocal %336 {approx = true} : vector<16x1xf32> -> vector<16x1xf32>
    %338 = vector.broadcast %337 : vector<16x1xf32> to vector<16x16xf32>
    %339 = arith.mulf %334, %338 : vector<16x16xf32>
    %340 = arith.truncf %339 : vector<16x16xf32> to vector<16x16xbf16>
    %341 = arith.truncf %323 : vector<16x8xf32> to vector<16x8xbf16>
    %cst_123 = arith.constant dense<0.000000e+00> : vector<16x8xf32>
    %342 = tpu.matmul %340, %341, %cst_123 {dimension_numbers = #tpu.dot_dimension_numbers<[1], [0], [0], [1], [0, 0, 1, 1], [], []>} : vector<16x16xbf16>, vector<16x8xbf16>, vector<16x8xf32> -> vector<16x8xf32>
    %343 = vector.extract_strided_slice %209 {offsets = [24, 0], sizes = [8, 32], strides = [1, 1]} : vector<32x32xf32> to vector<8x32xf32>
    %344 = arith.truncf %342 : vector<16x8xf32> to vector<16x8xbf16>
    %345 = arith.truncf %343 : vector<8x32xf32> to vector<8x32xbf16>
    %cst_124 = arith.constant dense<0.000000e+00> : vector<16x32xf32>
    %346 = tpu.matmul %344, %345, %cst_124 {dimension_numbers = #tpu.dot_dimension_numbers<[1], [0], [0], [1], [0, 0, 1, 1], [], []>} : vector<16x8xbf16>, vector<8x32xbf16>, vector<16x32xf32> -> vector<16x32xf32>
    %347 = arith.addf %320, %346 : vector<16x32xf32>
    %348 = arith.addf %199, %347 : vector<16x32xf32>
    %349 = vector.broadcast %211 : vector<1x32xf32> to vector<16x32xf32>
    %350 = arith.addf %348, %349 : vector<16x32xf32>
    %c1_125 = arith.constant 1 : index
    %c0_126 = arith.constant 0 : index
    %c0_127 = arith.constant 0 : index
    %351 = vector.load %arg9[%c1_125, %c0_126, %c0_127] : memref<2x1x32xf32, #tpu.memory_space<vmem>>, vector<1x1x32xf32>
    %352 = vector.shape_cast %351 : vector<1x1x32xf32> to vector<1x32xf32>
    %c1_128 = arith.constant 1 : index
    %c0_129 = arith.constant 0 : index
    %c0_130 = arith.constant 0 : index
    %353 = vector.load %arg10[%c1_128, %c0_129, %c0_130] : memref<2x1x32xf32, #tpu.memory_space<vmem>>, vector<1x1x32xf32>
    %354 = vector.shape_cast %353 : vector<1x1x32xf32> to vector<1x32xf32>
    %cst_131 = arith.constant dense<0.000000e+00> : vector<16xf32>
    %355 = vector.multi_reduction <add>, %350, %cst_131 [1] : vector<16x32xf32> to vector<16xf32>
    %356 = vector.shape_cast %355 : vector<16xf32> to vector<16x1xf32>
    %cst_132 = arith.constant 3.200000e+01 : f32
    %357 = vector.broadcast %cst_132 : f32 to vector<16x1xf32>
    %358 = arith.divf %356, %357 : vector<16x1xf32>
    %359 = vector.broadcast %358 : vector<16x1xf32> to vector<16x32xf32>
    %360 = arith.subf %350, %359 : vector<16x32xf32>
    %361 = arith.mulf %360, %360 : vector<16x32xf32>
    %cst_133 = arith.constant dense<0.000000e+00> : vector<16xf32>
    %362 = vector.multi_reduction <add>, %361, %cst_133 [1] : vector<16x32xf32> to vector<16xf32>
    %363 = vector.shape_cast %362 : vector<16xf32> to vector<16x1xf32>
    %cst_134 = arith.constant 3.200000e+01 : f32
    %364 = vector.broadcast %cst_134 : f32 to vector<16x1xf32>
    %365 = arith.divf %363, %364 : vector<16x1xf32>
    %366 = vector.broadcast %358 : vector<16x1xf32> to vector<16x32xf32>
    %367 = arith.subf %350, %366 : vector<16x32xf32>
    %cst_135 = arith.constant 9.99999974E-6 : f32
    %368 = vector.broadcast %cst_135 : f32 to vector<16x1xf32>
    %369 = arith.addf %365, %368 : vector<16x1xf32>
    %370 = math.rsqrt %369 : vector<16x1xf32>
    %371 = vector.broadcast %370 : vector<16x1xf32> to vector<16x32xf32>
    %372 = arith.mulf %367, %371 : vector<16x32xf32>
    %373 = vector.broadcast %352 : vector<1x32xf32> to vector<16x32xf32>
    %374 = arith.mulf %372, %373 : vector<16x32xf32>
    %375 = vector.broadcast %354 : vector<1x32xf32> to vector<16x32xf32>
    %376 = arith.addf %374, %375 : vector<16x32xf32>
    %c1_136 = arith.constant 1 : index
    %c0_137 = arith.constant 0 : index
    %c0_138 = arith.constant 0 : index
    %377 = vector.load %arg11[%c1_136, %c0_137, %c0_138] : memref<2x32x64xf32, #tpu.memory_space<vmem>>, vector<1x32x64xf32>
    %378 = vector.shape_cast %377 : vector<1x32x64xf32> to vector<32x64xf32>
    %379 = arith.truncf %376 : vector<16x32xf32> to vector<16x32xbf16>
    %380 = arith.truncf %378 : vector<32x64xf32> to vector<32x64xbf16>
    %cst_139 = arith.constant dense<0.000000e+00> : vector<16x64xf32>
    %381 = tpu.matmul %379, %380, %cst_139 {dimension_numbers = #tpu.dot_dimension_numbers<[1], [0], [0], [1], [0, 0, 1, 1], [], []>} : vector<16x32xbf16>, vector<32x64xbf16>, vector<16x64xf32> -> vector<16x64xf32>
    %c1_140 = arith.constant 1 : index
    %c0_141 = arith.constant 0 : index
    %c0_142 = arith.constant 0 : index
    %382 = vector.load %arg12[%c1_140, %c0_141, %c0_142] : memref<2x1x64xf32, #tpu.memory_space<vmem>>, vector<1x1x64xf32>
    %383 = vector.shape_cast %382 : vector<1x1x64xf32> to vector<1x64xf32>
    %384 = vector.broadcast %383 : vector<1x64xf32> to vector<16x64xf32>
    %385 = arith.addf %381, %384 : vector<16x64xf32>
    %cst_143 = arith.constant 0.000000e+00 : f32
    %386 = vector.broadcast %cst_143 : f32 to vector<16x64xf32>
    %387 = arith.maximumf %385, %386 : vector<16x64xf32>
    %c1_144 = arith.constant 1 : index
    %c0_145 = arith.constant 0 : index
    %c0_146 = arith.constant 0 : index
    %388 = vector.load %arg13[%c1_144, %c0_145, %c0_146] : memref<2x64x32xf32, #tpu.memory_space<vmem>>, vector<1x64x32xf32>
    %389 = vector.shape_cast %388 : vector<1x64x32xf32> to vector<64x32xf32>
    %390 = arith.truncf %387 : vector<16x64xf32> to vector<16x64xbf16>
    %391 = arith.truncf %389 : vector<64x32xf32> to vector<64x32xbf16>
    %cst_147 = arith.constant dense<0.000000e+00> : vector<16x32xf32>
    %392 = tpu.matmul %390, %391, %cst_147 {dimension_numbers = #tpu.dot_dimension_numbers<[1], [0], [0], [1], [0, 0, 1, 1], [], []>} : vector<16x64xbf16>, vector<64x32xbf16>, vector<16x32xf32> -> vector<16x32xf32>
    %393 = arith.addf %350, %392 : vector<16x32xf32>
    %c1_148 = arith.constant 1 : index
    %c0_149 = arith.constant 0 : index
    %c0_150 = arith.constant 0 : index
    %394 = vector.load %arg14[%c1_148, %c0_149, %c0_150] : memref<2x1x32xf32, #tpu.memory_space<vmem>>, vector<1x1x32xf32>
    %395 = vector.shape_cast %394 : vector<1x1x32xf32> to vector<1x32xf32>
    %396 = vector.broadcast %395 : vector<1x32xf32> to vector<16x32xf32>
    %397 = arith.addf %393, %396 : vector<16x32xf32>
    %c0_151 = arith.constant 0 : index
    %c0_152 = arith.constant 0 : index
    %398 = vector.load %arg15[%c0_151, %c0_152] : memref<1x32xf32, #tpu.memory_space<vmem>>, vector<1x32xf32>
    %c0_153 = arith.constant 0 : index
    %c0_154 = arith.constant 0 : index
    %399 = vector.load %arg16[%c0_153, %c0_154] : memref<1x32xf32, #tpu.memory_space<vmem>>, vector<1x32xf32>
    %cst_155 = arith.constant dense<0.000000e+00> : vector<16xf32>
    %400 = vector.multi_reduction <add>, %397, %cst_155 [1] : vector<16x32xf32> to vector<16xf32>
    %401 = vector.shape_cast %400 : vector<16xf32> to vector<16x1xf32>
    %cst_156 = arith.constant 3.200000e+01 : f32
    %402 = vector.broadcast %cst_156 : f32 to vector<16x1xf32>
    %403 = arith.divf %401, %402 : vector<16x1xf32>
    %404 = vector.broadcast %403 : vector<16x1xf32> to vector<16x32xf32>
    %405 = arith.subf %397, %404 : vector<16x32xf32>
    %406 = arith.mulf %405, %405 : vector<16x32xf32>
    %cst_157 = arith.constant dense<0.000000e+00> : vector<16xf32>
    %407 = vector.multi_reduction <add>, %406, %cst_157 [1] : vector<16x32xf32> to vector<16xf32>
    %408 = vector.shape_cast %407 : vector<16xf32> to vector<16x1xf32>
    %cst_158 = arith.constant 3.200000e+01 : f32
    %409 = vector.broadcast %cst_158 : f32 to vector<16x1xf32>
    %410 = arith.divf %408, %409 : vector<16x1xf32>
    %411 = vector.broadcast %403 : vector<16x1xf32> to vector<16x32xf32>
    %412 = arith.subf %397, %411 : vector<16x32xf32>
    %cst_159 = arith.constant 9.99999974E-6 : f32
    %413 = vector.broadcast %cst_159 : f32 to vector<16x1xf32>
    %414 = arith.addf %410, %413 : vector<16x1xf32>
    %415 = math.rsqrt %414 : vector<16x1xf32>
    %416 = vector.broadcast %415 : vector<16x1xf32> to vector<16x32xf32>
    %417 = arith.mulf %412, %416 : vector<16x32xf32>
    %418 = vector.broadcast %398 : vector<1x32xf32> to vector<16x32xf32>
    %419 = arith.mulf %417, %418 : vector<16x32xf32>
    %420 = vector.broadcast %399 : vector<1x32xf32> to vector<16x32xf32>
    %421 = arith.addf %419, %420 : vector<16x32xf32>
    %c0_160 = arith.constant 0 : index
    %c0_161 = arith.constant 0 : index
    %422 = vector.load %arg17[%c0_160, %c0_161] : memref<32x64xf32, #tpu.memory_space<vmem>>, vector<32x64xf32>
    %423 = arith.truncf %421 : vector<16x32xf32> to vector<16x32xbf16>
    %424 = arith.truncf %422 : vector<32x64xf32> to vector<32x64xbf16>
    %cst_162 = arith.constant dense<0.000000e+00> : vector<16x64xf32>
    %425 = tpu.matmul %423, %424, %cst_162 {dimension_numbers = #tpu.dot_dimension_numbers<[1], [0], [0], [1], [0, 0, 1, 1], [], []>} : vector<16x32xbf16>, vector<32x64xbf16>, vector<16x64xf32> -> vector<16x64xf32>
    %c0_163 = arith.constant 0 : index
    %c0_164 = arith.constant 0 : index
    %426 = vector.load %arg18[%c0_163, %c0_164] : memref<1x64xf32, #tpu.memory_space<vmem>>, vector<1x64xf32>
    %427 = vector.broadcast %426 : vector<1x64xf32> to vector<16x64xf32>
    %428 = arith.addf %425, %427 : vector<16x64xf32>
    %cst_165 = arith.constant dense<0xFF800000> : vector<16xf32>
    %429 = vector.multi_reduction <maximumf>, %428, %cst_165 [1] : vector<16x64xf32> to vector<16xf32>
    %430 = vector.shape_cast %429 : vector<16xf32> to vector<16x1xf32>
    %431 = vector.broadcast %430 : vector<16x1xf32> to vector<16x64xf32>
    %432 = arith.subf %428, %431 : vector<16x64xf32>
    %433 = math.exp %432 : vector<16x64xf32>
    %cst_166 = arith.constant dense<0.000000e+00> : vector<16xf32>
    %434 = vector.multi_reduction <add>, %433, %cst_166 [1] : vector<16x64xf32> to vector<16xf32>
    %435 = vector.shape_cast %434 : vector<16xf32> to vector<16x1xf32>
    %436 = math.log %435 : vector<16x1xf32>
    %437 = vector.broadcast %436 : vector<16x1xf32> to vector<16x64xf32>
    %438 = arith.subf %432, %437 : vector<16x64xf32>
    %c0_167 = arith.constant 0 : index
    %c0_168 = arith.constant 0 : index
    %439 = vector.load %arg19[%c0_167, %c0_168] : memref<16x64xf32, #tpu.memory_space<vmem>>, vector<16x64xf32>
    tpu.vector_store %arg19[%c0_167, %c0_168], %438 {strides = array<i32>} : memref<16x64xf32, #tpu.memory_space<vmem>>, vector<16x64xf32>,
    return
  }
  func.func @transform_0(%arg0: i32) -> (i32, i32) {
    %c0_i32 = arith.constant 0 : i32
    %c0_i32_0 = arith.constant 0 : i32
    %c0_i32_1 = arith.constant 0 : i32
    return %c0_i32, %c0_i32_0 : i32, i32
  }
  func.func @transform_1(%arg0: i32) -> (i32, i32) {
    %c0_i32 = arith.constant 0 : i32
    %c0_i32_0 = arith.constant 0 : i32
    %c0_i32_1 = arith.constant 0 : i32
    return %c0_i32, %c0_i32_0 : i32, i32
  }
  func.func @transform_2(%arg0: i32) -> (i32, i32, i32) {
    %c0_i32 = arith.constant 0 : i32
    %c0_i32_0 = arith.constant 0 : i32
    %c0_i32_1 = arith.constant 0 : i32
    %c0_i32_2 = arith.constant 0 : i32
    return %c0_i32, %c0_i32_0, %c0_i32_1 : i32, i32, i32
  }
  func.func @transform_3(%arg0: i32) -> (i32, i32, i32) {
    %c0_i32 = arith.constant 0 : i32
    %c0_i32_0 = arith.constant 0 : i32
    %c0_i32_1 = arith.constant 0 : i32
    %c0_i32_2 = arith.constant 0 : i32
    return %c0_i32, %c0_i32_0, %c0_i32_1 : i32, i32, i32
  }
  func.func @transform_4(%arg0: i32) -> (i32, i32, i32) {
    %c0_i32 = arith.constant 0 : i32
    %c0_i32_0 = arith.constant 0 : i32
    %c0_i32_1 = arith.constant 0 : i32
    %c0_i32_2 = arith.constant 0 : i32
    return %c0_i32, %c0_i32_0, %c0_i32_1 : i32, i32, i32
  }
  func.func @transform_5(%arg0: i32) -> (i32, i32, i32) {
    %c0_i32 = arith.constant 0 : i32
    %c0_i32_0 = arith.constant 0 : i32
    %c0_i32_1 = arith.constant 0 : i32
    %c0_i32_2 = arith.constant 0 : i32
    return %c0_i32, %c0_i32_0, %c0_i32_1 : i32, i32, i32
  }
  func.func @transform_6(%arg0: i32) -> (i32, i32, i32) {
    %c0_i32 = arith.constant 0 : i32
    %c0_i32_0 = arith.constant 0 : i32
    %c0_i32_1 = arith.constant 0 : i32
    %c0_i32_2 = arith.constant 0 : i32
    return %c0_i32, %c0_i32_0, %c0_i32_1 : i32, i32, i32
  }
  func.func @transform_7(%arg0: i32) -> (i32, i32, i32) {
    %c0_i32 = arith.constant 0 : i32
    %c0_i32_0 = arith.constant 0 : i32
    %c0_i32_1 = arith.constant 0 : i32
    %c0_i32_2 = arith.constant 0 : i32
    return %c0_i32, %c0_i32_0, %c0_i32_1 : i32, i32, i32
  }
  func.func @transform_8(%arg0: i32) -> (i32, i32, i32) {
    %c0_i32 = arith.constant 0 : i32
    %c0_i32_0 = arith.constant 0 : i32
    %c0_i32_1 = arith.constant 0 : i32
    %c0_i32_2 = arith.constant 0 : i32
    return %c0_i32, %c0_i32_0, %c0_i32_1 : i32, i32, i32
  }
  func.func @transform_9(%arg0: i32) -> (i32, i32, i32) {
    %c0_i32 = arith.constant 0 : i32
    %c0_i32_0 = arith.constant 0 : i32
    %c0_i32_1 = arith.constant 0 : i32
    %c0_i32_2 = arith.constant 0 : i32
    return %c0_i32, %c0_i32_0, %c0_i32_1 : i32, i32, i32
  }
  func.func @transform_10(%arg0: i32) -> (i32, i32, i32) {
    %c0_i32 = arith.constant 0 : i32
    %c0_i32_0 = arith.constant 0 : i32
    %c0_i32_1 = arith.constant 0 : i32
    %c0_i32_2 = arith.constant 0 : i32
    return %c0_i32, %c0_i32_0, %c0_i32_1 : i32, i32, i32
  }
  func.func @transform_11(%arg0: i32) -> (i32, i32, i32) {
    %c0_i32 = arith.constant 0 : i32
    %c0_i32_0 = arith.constant 0 : i32
    %c0_i32_1 = arith.constant 0 : i32
    %c0_i32_2 = arith.constant 0 : i32
    return %c0_i32, %c0_i32_0, %c0_i32_1 : i32, i32, i32
  }
  func.func @transform_12(%arg0: i32) -> (i32, i32, i32) {
    %c0_i32 = arith.constant 0 : i32
    %c0_i32_0 = arith.constant 0 : i32
    %c0_i32_1 = arith.constant 0 : i32
    %c0_i32_2 = arith.constant 0 : i32
    return %c0_i32, %c0_i32_0, %c0_i32_1 : i32, i32, i32
  }
  func.func @transform_13(%arg0: i32) -> (i32, i32, i32) {
    %c0_i32 = arith.constant 0 : i32
    %c0_i32_0 = arith.constant 0 : i32
    %c0_i32_1 = arith.constant 0 : i32
    %c0_i32_2 = arith.constant 0 : i32
    return %c0_i32, %c0_i32_0, %c0_i32_1 : i32, i32, i32
  }
  func.func @transform_14(%arg0: i32) -> (i32, i32) {
    %c0_i32 = arith.constant 0 : i32
    %c0_i32_0 = arith.constant 0 : i32
    %c0_i32_1 = arith.constant 0 : i32
    return %c0_i32, %c0_i32_0 : i32, i32
  }
  func.func @transform_15(%arg0: i32) -> (i32, i32) {
    %c0_i32 = arith.constant 0 : i32
    %c0_i32_0 = arith.constant 0 : i32
    %c0_i32_1 = arith.constant 0 : i32
    return %c0_i32, %c0_i32_0 : i32, i32
  }
  func.func @transform_16(%arg0: i32) -> (i32, i32) {
    %c0_i32 = arith.constant 0 : i32
    %c0_i32_0 = arith.constant 0 : i32
    %c0_i32_1 = arith.constant 0 : i32
    return %c0_i32, %c0_i32_0 : i32, i32
  }
  func.func @transform_17(%arg0: i32) -> (i32, i32) {
    %c0_i32 = arith.constant 0 : i32
    %c0_i32_0 = arith.constant 0 : i32
    %c0_i32_1 = arith.constant 0 : i32
    return %c0_i32, %c0_i32_0 : i32, i32
  }
  func.func @transform_18(%arg0: i32) -> (i32, i32) {
    %c0_i32 = arith.constant 0 : i32
    %c0_i32_0 = arith.constant 0 : i32
    %c0_i32_1 = arith.constant 0 : i32
    return %c0_i32, %c0_i32_0 : i32, i32
  }
}

</mosaic_0001>

<llo_original>
// kernel: tpu_custom_call.1
$region0: #{tpu_custom_call.1}
  #allocation0 [shape = 'u32[]', space=smem, size = 0x4, offset = 0x4, fixed_abs, tag = 'smem constant byte address 0x4 - core index']
  #allocation1 [shape = 'u32[144,128]{1,0:T(1,128)}', space=vmem, size = 0x12000, scoped, tag = 'internal scratch']
  %s0 = inlined_call_operand.hbm [shape: f32[16,32], index: 0, kind: input, shape index: {}]
  %s1 = inlined_call_operand.hbm [shape: f32[16,16], index: 1, kind: input, shape index: {}]
  %s2 = inlined_call_operand.vmem [shape: f32[2,1,32], index: 2, kind: input, shape index: {}]
  %s3 = inlined_call_operand.hbm [shape: f32[2,1,32], index: 3, kind: input, shape index: {}]
  %s4 = inlined_call_operand.vmem [shape: f32[2,32,96], index: 4, kind: input, shape index: {}]
  %s5 = inlined_call_operand.hbm [shape: f32[2,1,96], index: 5, kind: input, shape index: {}]
  %s6 = inlined_call_operand.vmem [shape: f32[2,32,32], index: 6, kind: input, shape index: {}]
  %s7 = inlined_call_operand.hbm [shape: f32[2,1,32], index: 7, kind: input, shape index: {}]
  %s8 = inlined_call_operand.hbm [shape: f32[2,1,32], index: 8, kind: input, shape index: {}]
  %s9 = inlined_call_operand.hbm [shape: f32[2,1,32], index: 9, kind: input, shape index: {}]
  %s10 = inlined_call_operand.vmem [shape: f32[2,32,64], index: 10, kind: input, shape index: {}]
  %s11 = inlined_call_operand.vmem [shape: f32[2,1,64], index: 11, kind: input, shape index: {}]
  %s12 = inlined_call_operand.vmem [shape: f32[2,64,32], index: 12, kind: input, shape index: {}]
  %s13 = inlined_call_operand.vmem [shape: f32[2,1,32], index: 13, kind: input, shape index: {}]
  %s14 = inlined_call_operand.vmem [shape: f32[1,32], index: 14, kind: input, shape index: {}]
  %s15 = inlined_call_operand.vmem [shape: f32[1,32], index: 15, kind: input, shape index: {}]
  %s16 = inlined_call_operand.vmem [shape: f32[32,64], index: 16, kind: input, shape index: {}]
  %s17 = inlined_call_operand.vmem [shape: f32[1,64], index: 17, kind: input, shape index: {}]
  %s18 = inlined_call_operand.hbm [shape: f32[16,64], index: 18, kind: output, shape index: {}]
  %s19 = sld [smem:[#allocation0]]
  $region110: #{tpu_custom_call.1} parent=0
    _
  %s21 = ssub.s32 1, %s19
  %s22 = scalar_select 0, %s21, %s19
  $region1: #{tpu_custom_call.1} parent=0
    #allocation2 [shape = 'u8[8192]{0}', space=vmem, size = 0x2000, scoped, tag = 'input window, operand 0, single buffered']
    #allocation3 [shape = 's32[1]{0}', space=sflag, size = 0x4, scoped, tag = 'scoped memory for tpu_custom_call.1']
    #allocation4 [shape = 's32[1]{0}', space=sflag, size = 0x4, scoped, tag = 'scoped memory for tpu_custom_call.1']
    #allocation5 [shape = 'u8[8192]{0}', space=vmem, size = 0x2000, scoped, tag = 'input window, operand 1, single buffered']
    #allocation6 [shape = 's32[1]{0}', space=sflag, size = 0x4, scoped, tag = 'scoped memory for tpu_custom_call.1']
    #allocation7 [shape = 'u8[1024]{0}', space=vmem, size = 0x400, scoped, tag = 'input window, operand 3, single buffered']
    #allocation8 [shape = 'u8[1024]{0}', space=vmem, size = 0x400, scoped, tag = 'input window, operand 5, single buffered']
    #allocation9 [shape = 's32[1]{0}', space=sflag, size = 0x4, scoped, tag = 'scoped memory for tpu_custom_call.1']
    #allocation10 [shape = 'u8[1024]{0}', space=vmem, size = 0x400, scoped, tag = 'input window, operand 7, single buffered']
    #allocation11 [shape = 'u8[1024]{0}', space=vmem, size = 0x400, scoped, tag = 'input window, operand 8, single buffered']
    #allocation12 [shape = 's32[1]{0}', space=sflag, size = 0x4, scoped, tag = 'scoped memory for tpu_custom_call.1']
    #allocation13 [shape = 'u8[1024]{0}', space=vmem, size = 0x400, scoped, tag = 'input window, operand 9, single buffered']
    #allocation14 [shape = 'u8[8192]{0}', space=vmem, size = 0x2000, scoped, tag = 'output window, operand 0, single buffered']
    %23 = vsyncpa [#allocation3], 0
    %24 = vsyncpa [#allocation6], 0
    %25 = vsyncpa [#allocation9], 0
    %26 = vsyncpa [#allocation12], 0
    %27 = vsyncpa [#allocation4], 0
    // Predicated region
    $region2: #{tpu_custom_call.1} parent=1 // pred_check
      _
    $region3: #{tpu_custom_call.1} parent=1 // pred_check_branch
      %29 = sbr.rel (0) target = $region5
    $region4: #{tpu_custom_call.1} parent=1 // pred_region
      %s31 = ssub.s32 256, 256
      %32 = vsyncadd [#allocation3], %s31
      %s33 = sshll.u32 [#allocation2], 4
      %s34 = int_to_ptr.vmem [resolvable:$true] %s33
      %39 = dma.hbm_to_vmem [thread:$0]  %s0, 256, %s34, [#allocation3], 128, 128, 8
    $region5: #{tpu_custom_call.1} parent=1 // pred_fallthru
      _
    // Predicated region
    $region6: #{tpu_custom_call.1} parent=1 // pred_check
      _
    $region7: #{tpu_custom_call.1} parent=1 // pred_check_branch
      %41 = sbr.rel (0) target = $region9
    $region8: #{tpu_custom_call.1} parent=1 // pred_region
      %s43 = ssub.s32 256, 256
      %44 = vsyncadd [#allocation6], %s43
      %s45 = sshll.u32 [#allocation5], 4
      %s46 = int_to_ptr.vmem [resolvable:$true] %s45
      %51 = dma.hbm_to_vmem [thread:$0]  %s1, 256, %s46, [#allocation6], 128, 128, 8
    $region9: #{tpu_custom_call.1} parent=1 // pred_fallthru
      _
    // Predicated region
    $region10: #{tpu_custom_call.1} parent=1 // pred_check
      _
    $region11: #{tpu_custom_call.1} parent=1 // pred_check_branch
      %53 = sbr.rel (0) target = $region13
    $region12: #{tpu_custom_call.1} parent=1 // pred_region
      _
    $region13: #{tpu_custom_call.1} parent=1 // pred_fallthru
      _
    // Predicated region
    $region14: #{tpu_custom_call.1} parent=1 // pred_check
      _
    $region15: #{tpu_custom_call.1} parent=1 // pred_check_branch
      %55 = sbr.rel (0) target = $region17
    $region16: #{tpu_custom_call.1} parent=1 // pred_region
      %s57 = ssub.s32 32, 32
      %58 = vsyncadd [#allocation6], %s57
      %s59 = sshll.u32 [#allocation7], 4
      %s60 = int_to_ptr.vmem [resolvable:$true] %s59
      %65 = dma.hbm_to_vmem [thread:$0]  %s3, 32, %s60, [#allocation6], 16, 16, 1
    $region17: #{tpu_custom_call.1} parent=1 // pred_fallthru
      _
    // Predicated region
    $region18: #{tpu_custom_call.1} parent=1 // pred_check
      _
    $region19: #{tpu_custom_call.1} parent=1 // pred_check_branch
      %67 = sbr.rel (0) target = $region21
    $region20: #{tpu_custom_call.1} parent=1 // pred_region
      _
    $region21: #{tpu_custom_call.1} parent=1 // pred_fallthru
      _
    // Predicated region
    $region22: #{tpu_custom_call.1} parent=1 // pred_check
      _
    $region23: #{tpu_custom_call.1} parent=1 // pred_check_branch
      %69 = sbr.rel (0) target = $region25
    $region24: #{tpu_custom_call.1} parent=1 // pred_region
      %s71 = ssub.s32 32, 32
      %72 = vsyncadd [#allocation9], %s71
      %s73 = sshll.u32 [#allocation8], 4
      %s74 = int_to_ptr.vmem [resolvable:$true] %s73
      %79 = dma.hbm_to_vmem [thread:$0]  %s5, 32, %s74, [#allocation9], 16, 16, 1
    $region25: #{tpu_custom_call.1} parent=1 // pred_fallthru
      _
    // Predicated region
    $region26: #{tpu_custom_call.1} parent=1 // pred_check
      _
    $region27: #{tpu_custom_call.1} parent=1 // pred_check_branch
      %81 = sbr.rel (0) target = $region29
    $region28: #{tpu_custom_call.1} parent=1 // pred_region
      _
    $region29: #{tpu_custom_call.1} parent=1 // pred_fallthru
      _
    // Predicated region
    $region30: #{tpu_custom_call.1} parent=1 // pred_check
      _
    $region31: #{tpu_custom_call.1} parent=1 // pred_check_branch
      %83 = sbr.rel (0) target = $region33
    $region32: #{tpu_custom_call.1} parent=1 // pred_region
      %s85 = ssub.s32 32, 32
      %86 = vsyncadd [#allocation9], %s85
      %s87 = sshll.u32 [#allocation10], 4
      %s88 = int_to_ptr.vmem [resolvable:$true] %s87
      %93 = dma.hbm_to_vmem [thread:$0]  %s7, 32, %s88, [#allocation9], 16, 16, 1
    $region33: #{tpu_custom_call.1} parent=1 // pred_fallthru
      _
    // Predicated region
    $region34: #{tpu_custom_call.1} parent=1 // pred_check
      _
    $region35: #{tpu_custom_call.1} parent=1 // pred_check_branch
      %95 = sbr.rel (0) target = $region37
    $region36: #{tpu_custom_call.1} parent=1 // pred_region
      %s97 = ssub.s32 32, 32
      %98 = vsyncadd [#allocation12], %s97
      %s99 = sshll.u32 [#allocation11], 4
      %s100 = int_to_ptr.vmem [resolvable:$true] %s99
      %105 = dma.hbm_to_vmem [thread:$0]  %s8, 32, %s100, [#allocation12], 16, 16, 1
    $region37: #{tpu_custom_call.1} parent=1 // pred_fallthru
      _
    // Predicated region
    $region38: #{tpu_custom_call.1} parent=1 // pred_check
      _
    $region39: #{tpu_custom_call.1} parent=1 // pred_check_branch
      %107 = sbr.rel (0) target = $region41
    $region40: #{tpu_custom_call.1} parent=1 // pred_region
      %s109 = ssub.s32 32, 32
      %110 = vsyncadd [#allocation12], %s109
      %s111 = sshll.u32 [#allocation13], 4
      %s112 = int_to_ptr.vmem [resolvable:$true] %s111
      %117 = dma.hbm_to_vmem [thread:$0]  %s9, 32, %s112, [#allocation12], 16, 16, 1
    $region41: #{tpu_custom_call.1} parent=1 // pred_fallthru
      _
    // Predicated region
    $region42: #{tpu_custom_call.1} parent=1 // pred_check
      _
    $region43: #{tpu_custom_call.1} parent=1 // pred_check_branch
      %119 = sbr.rel (0) target = $region45
    $region44: #{tpu_custom_call.1} parent=1 // pred_region
      _
    $region45: #{tpu_custom_call.1} parent=1 // pred_fallthru
      _
    // Predicated region
    $region46: #{tpu_custom_call.1} parent=1 // pred_check
      _
    $region47: #{tpu_custom_call.1} parent=1 // pred_check_branch
      %121 = sbr.rel (0) target = $region49
    $region48: #{tpu_custom_call.1} parent=1 // pred_region
      _
    $region49: #{tpu_custom_call.1} parent=1 // pred_fallthru
      _
    // Predicated region
    $region50: #{tpu_custom_call.1} parent=1 // pred_check
      _
    $region51: #{tpu_custom_call.1} parent=1 // pred_check_branch
      %123 = sbr.rel (0) target = $region53
    $region52: #{tpu_custom_call.1} parent=1 // pred_region
      _
    $region53: #{tpu_custom_call.1} parent=1 // pred_fallthru
      _
    // Predicated region
    $region54: #{tpu_custom_call.1} parent=1 // pred_check
      _
    $region55: #{tpu_custom_call.1} parent=1 // pred_check_branch
      %125 = sbr.rel (0) target = $region57
    $region56: #{tpu_custom_call.1} parent=1 // pred_region
      _
    $region57: #{tpu_custom_call.1} parent=1 // pred_fallthru
      _
    // Predicated region
    $region58: #{tpu_custom_call.1} parent=1 // pred_check
      _
    $region59: #{tpu_custom_call.1} parent=1 // pred_check_branch
      %127 = sbr.rel (0) target = $region61
    $region60: #{tpu_custom_call.1} parent=1 // pred_region
      _
    $region61: #{tpu_custom_call.1} parent=1 // pred_fallthru
      _
    // Predicated region
    $region62: #{tpu_custom_call.1} parent=1 // pred_check
      _
    $region63: #{tpu_custom_call.1} parent=1 // pred_check_branch
      %129 = sbr.rel (0) target = $region65
    $region64: #{tpu_custom_call.1} parent=1 // pred_region
      _
    $region65: #{tpu_custom_call.1} parent=1 // pred_fallthru
      _
    // Predicated region
    $region66: #{tpu_custom_call.1} parent=1 // pred_check
      _
    $region67: #{tpu_custom_call.1} parent=1 // pred_check_branch
      %131 = sbr.rel (0) target = $region69
    $region68: #{tpu_custom_call.1} parent=1 // pred_region
      _
    $region69: #{tpu_custom_call.1} parent=1 // pred_fallthru
      _
    // Predicated region
    $region70: #{tpu_custom_call.1} parent=1 // pred_check
      _
    $region71: #{tpu_custom_call.1} parent=1 // pred_check_branch
      %133 = sbr.rel (0) target = $region73
    $region72: #{tpu_custom_call.1} parent=1 // pred_region
      _
    $region73: #{tpu_custom_call.1} parent=1 // pred_fallthru
      _
    // Predicated region
    $region74: #{tpu_custom_call.1} parent=1 // pred_check
      _
    $region75: #{tpu_custom_call.1} parent=1 // pred_check_branch
      %135 = sbr.rel (0) target = $region77
    $region76: #{tpu_custom_call.1} parent=1 // pred_region
      %136 = dma.done [#allocation3], 256
    $region77: #{tpu_custom_call.1} parent=1 // pred_fallthru
      _
    // Predicated region
    $region78: #{tpu_custom_call.1} parent=1 // pred_check
      _
    $region79: #{tpu_custom_call.1} parent=1 // pred_check_branch
      %138 = sbr.rel (0) target = $region81
    $region80: #{tpu_custom_call.1} parent=1 // pred_region
      %139 = dma.done [#allocation6], 256
    $region81: #{tpu_custom_call.1} parent=1 // pred_fallthru
      _
    // Predicated region
    $region82: #{tpu_custom_call.1} parent=1 // pred_check
      _
    $region83: #{tpu_custom_call.1} parent=1 // pred_check_branch
      %141 = sbr.rel (0) target = $region85
    $region84: #{tpu_custom_call.1} parent=1 // pred_region
      %142 = dma.done [#allocation6], 32
    $region85: #{tpu_custom_call.1} parent=1 // pred_fallthru
      _
    // Predicated region
    $region86: #{tpu_custom_call.1} parent=1 // pred_check
      _
    $region87: #{tpu_custom_call.1} parent=1 // pred_check_branch
      %144 = sbr.rel (0) target = $region89
    $region88: #{tpu_custom_call.1} parent=1 // pred_region
      %145 = dma.done [#allocation9], 32
    $region89: #{tpu_custom_call.1} parent=1 // pred_fallthru
      _
    // Predicated region
    $region90: #{tpu_custom_call.1} parent=1 // pred_check
      _
    $region91: #{tpu_custom_call.1} parent=1 // pred_check_branch
      %147 = sbr.rel (0) target = $region93
    $region92: #{tpu_custom_call.1} parent=1 // pred_region
      %148 = dma.done [#allocation9], 32
    $region93: #{tpu_custom_call.1} parent=1 // pred_fallthru
      _
    // Predicated region
    $region94: #{tpu_custom_call.1} parent=1 // pred_check
      _
    $region95: #{tpu_custom_call.1} parent=1 // pred_check_branch
      %150 = sbr.rel (0) target = $region97
    $region96: #{tpu_custom_call.1} parent=1 // pred_region
      %151 = dma.done [#allocation12], 32
    $region97: #{tpu_custom_call.1} parent=1 // pred_fallthru
      _
    // Predicated region
    $region98: #{tpu_custom_call.1} parent=1 // pred_check
      _
    $region99: #{tpu_custom_call.1} parent=1 // pred_check_branch
      %153 = sbr.rel (0) target = $region101
    $region100: #{tpu_custom_call.1} parent=1 // pred_region
      %154 = dma.done [#allocation12], 32
    $region101: #{tpu_custom_call.1} parent=1 // pred_fallthru
      _
    %v156 = vld [vmem:[#allocation2] sm:$0xff]
    %v157 = vld [vmem:[#allocation2 + $0x8] sm:$0xff]
    %v158 = vld [vmem:[#allocation5] sm:$0xff]
    %v159 = vld [vmem:[#allocation5 + $0x8] sm:$0xff]
    %v160 = vld [vmem:[%s2] sm:$0x1]
    %v161 = vld [vmem:[#allocation7] sm:$0x1]
    %v162 = vld [vmem:[%s4] sm:$0xff]
    %v163 = vld [vmem:[%s4 + $0x8] sm:$0xff]
    %v164 = vld [vmem:[%s4 + $0x10] sm:$0xff]
    %v165 = vld [vmem:[%s4 + $0x18] sm:$0xff]
    %v166 = vld [vmem:[#allocation8] sm:$0x1]
    %v167 = vld [vmem:[%s6] sm:$0xff]
    %v168 = vld [vmem:[%s6 + $0x8] sm:$0xff]
    %v169 = vld [vmem:[%s6 + $0x10] sm:$0xff]
    %v170 = vld [vmem:[%s6 + $0x18] sm:$0xff]
    %v171 = vld [vmem:[#allocation10] sm:$0x1]
    %vm172 = vcmask 261120
    %v173 = vsel %vm172, %v156, 0.0
    %174 = vadd.xlane.f32.xlu0 %v173
    %v175 = vpop.xlane.xlu0 %174
    %v176 = vsel %vm172, %v157, 0.0
    %177 = vadd.xlane.f32.xlu0 %v176
    %v178 = vpop.xlane.xlu0 %177
    %v179 = vrcp.pop 32.0
    %v180 = vmul.f32 %v175, %v179
    %v181 = vmul.f32 %v178, %v179
    %v182 = vsub.f32 %v156, %v180
    %v183 = vsub.f32 %v157, %v181
    %v184 = vmul.f32 %v182, %v182
    %v185 = vmul.f32 %v183, %v183
    %v186 = vsel %vm172, %v184, 0.0
    %187 = vadd.xlane.f32.xlu0 %v186
    %v188 = vpop.xlane.xlu0 %187
    %v189 = vsel %vm172, %v185, 0.0
    %190 = vadd.xlane.f32.xlu0 %v189
    %v191 = vpop.xlane.xlu0 %190
    %v192 = vmul.f32 %v188, %v179
    %v193 = vmul.f32 %v191, %v179
    %v194 = vadd.f32 %v192, 1e-05
    %v195 = vadd.f32 %v193, 1e-05
    %v196 = vrsqrt.pop %v194
    %v197 = vrsqrt.pop %v195
    %v198 = vmul.f32 %v182, %v196
    %v199 = vmul.f32 %v183, %v197
    %v201 = vlaneseq
    %v202 = vshrl.u32 %v201, 7
    %v203 = vsub.s32 0, %v202
    %v204 = vrot.slane %v160, %v203
    %v206 = vmul.f32 %v198, %v204
    %v207 = vmul.f32 %v199, %v204
    %v209 = vlaneseq
    %v210 = vshrl.u32 %v209, 7
    %v211 = vsub.s32 0, %v210
    %v212 = vrot.slane %v161, %v211
    %v214 = vadd.f32 %v206, %v212
    %v215 = vadd.f32 %v207, %v212
    %v216 = vpack.c.bf16 %v215, %v214
    %v217 = vpack.c.bf16 %v163, %v162
    %v218 = vpack.c.bf16 %v165, %v164
    %v220 = vlaneseq
    %v221 = vshrl.u32 %v220, 7
    %v222 = vsub.s32 0, %v221
    %v223 = vrot.slane %v166, %v222
    %v226 = vsel %vm172, %v216, 0
    %228 = vmatprep.subr.bf16.mxu0 0
    %229 = vmatpush1.bf16.msra.mxu0 %v217
    %230 = vmatprep.subr.bf16.mxu0 0
    %231 = vmatpush1.bf16.msra.mxu0 %v218
    %232 = vmatprep.subr.bf16.mxu0 0
    %233 = vmatpush1.bf16.msra.mxu0 0
    %234 = vmatprep.subr.bf16.mxu0 0
    %235 = vmatpush1.bf16.msra.mxu0 0
    %236 = vmatprep.subr.bf16.mxu0 0
    %237 = vmatpush1.bf16.msra.mxu0 0
    %238 = vmatprep.subr.bf16.mxu0 0
    %239 = vmatpush1.bf16.msra.mxu0 0
    %240 = vmatprep.subr.bf16.mxu0 0
    %241 = vmatpush1.bf16.msra.mxu0 0
    %242 = vmatprep.subr.bf16.mxu0 0
    %243 = vmatpush1.bf16.msra.mxu0 0
    %244 = vmatprep.subr.bf16.mxu0 0
    %245 = vmatpush1.bf16.msra.mxu0 0
    %246 = vmatprep.subr.bf16.mxu0 0
    %247 = vmatpush1.bf16.msra.mxu0 0
    %248 = vmatprep.subr.bf16.mxu0 0
    %249 = vmatpush1.bf16.msra.mxu0 0
    %250 = vmatprep.subr.bf16.mxu0 0
    %251 = vmatpush1.bf16.msra.mxu0 0
    %252 = vmatprep.subr.bf16.mxu0 0
    %253 = vmatpush1.bf16.msra.mxu0 0
    %254 = vmatprep.subr.bf16.mxu0 0
    %255 = vmatpush1.bf16.msra.mxu0 0
    %256 = vmatprep.subr.bf16.mxu0 0
    %257 = vmatpush1.bf16.msra.mxu0 0
    %258 = vmatprep.subr.bf16.mxu0 0
    %259 = vmatpush1.bf16.msra.mxu0 0
    %260 = vmatprep.mubr.bf16.mxu0 0
    %261 = vmatmul.mubr.bf16.gmra.mrb[0].mxu0 %v226
    %v262 = vpop.f32.mrb[0].mxu0
    %v263 = vadd.f32 %v223, %v262
    %v264 = vpop.f32.mrb[0].mxu0
    %v265 = vpop.f32.mrb[0].mxu0
    %v266 = vadd.f32 %v223, %v265
    %v267 = vpop.f32.mrb[0].mxu0
    %268 = vdwg.mxu0
    %v269 = vpack.c.bf16 %v266, %v263
    %271 = vrot.lane.b32.xlu0 %v269, 96
    %v272 = vpop.permute.xlu0 %271
    %vm273 = vcmask 64512
    %v275 = vsel %vm273, %v269, 0
    %v278 = vsel %vm273, %v272, 0
    %280 = vmatprep.subr.bf16.mxu0 0
    %281 = vmatpush1.bf16.xpose.msra.mxu0 %v278
    %282 = vmatprep.subr.bf16.mxu0 0
    %283 = vmatpush1.bf16.xpose.msra.mxu0 0
    %284 = vmatprep.subr.bf16.mxu0 0
    %285 = vmatpush1.bf16.xpose.msra.mxu0 0
    %286 = vmatprep.subr.bf16.mxu0 0
    %287 = vmatpush1.bf16.xpose.msra.mxu0 0
    %288 = vmatprep.subr.bf16.mxu0 0
    %289 = vmatpush1.bf16.xpose.msra.mxu0 0
    %290 = vmatprep.subr.bf16.mxu0 0
    %291 = vmatpush1.bf16.xpose.msra.mxu0 0
    %292 = vmatprep.subr.bf16.mxu0 0
    %293 = vmatpush1.bf16.xpose.msra.mxu0 0
    %294 = vmatprep.subr.bf16.mxu0 0
    %295 = vmatpush1.bf16.xpose.msra.mxu0 0
    %296 = vmatprep.subr.bf16.mxu0 0
    %297 = vmatpush1.bf16.xpose.msra.mxu0 0
    %298 = vmatprep.subr.bf16.mxu0 0
    %299 = vmatpush1.bf16.xpose.msra.mxu0 0
    %300 = vmatprep.subr.bf16.mxu0 0
    %301 = vmatpush1.bf16.xpose.msra.mxu0 0
    %302 = vmatprep.subr.bf16.mxu0 0
    %303 = vmatpush1.bf16.xpose.msra.mxu0 0
    %304 = vmatprep.subr.bf16.mxu0 0
    %305 = vmatpush1.bf16.xpose.msra.mxu0 0
    %306 = vmatprep.subr.bf16.mxu0 0
    %307 = vmatpush1.bf16.xpose.msra.mxu0 0
    %308 = vmatprep.subr.bf16.mxu0 0
    %309 = vmatpush1.bf16.xpose.msra.mxu0 0
    %310 = vmatprep.subr.bf16.mxu0 0
    %311 = vmatpush1.bf16.xpose.msra.mxu0 0
    %312 = vmatprep.mubr.bf16.mxu0 0
    %313 = vmatmul.mubr.bf16.gmra.mrb[0].mxu0 %v275
    %v314 = vpop.f32.mrb[0].mxu0
    %v315 = vadd.f32 0.0, %v314
    %v316 = vpop.f32.mrb[0].mxu0
    %v317 = vpop.f32.mrb[0].mxu0
    %v318 = vadd.f32 0.0, %v317
    %v319 = vpop.f32.mrb[0].mxu0
    %320 = vdwg.mxu0
    %v321 = vmul.f32 %v315, 0.35355338
    %v322 = vmul.f32 %v318, 0.35355338
    %v323 = vadd.f32 %v321, %v158
    %v324 = vadd.f32 %v322, %v159
    %vm325 = vcmask 130048
    %v326 = vsel %vm325, %v323, -inf
    %327 = vmax.xlane.f32.xlu0 %v326
    %v328 = vpop.xlane.xlu0 %327
    %v329 = vsel %vm325, %v324, -inf
    %330 = vmax.xlane.f32.xlu0 %v329
    %v331 = vpop.xlane.xlu0 %330
    %v332 = vsub.f32 %v323, %v328
    %v333 = vsub.f32 %v324, %v331
    %v334 = vmul.f32 %v332, 1.442695
    %v335 = vpow.pop %v334
    %v336 = vmul.f32 %v333, 1.442695
    %v337 = vpow.pop %v336
    %v338 = vsel %vm325, %v335, 0.0
    %339 = vadd.xlane.f32.xlu0 %v338
    %v340 = vpop.xlane.xlu0 %339
    %v341 = vsel %vm325, %v337, 0.0
    %342 = vadd.xlane.f32.xlu0 %v341
    %v343 = vpop.xlane.xlu0 %342
    %v344 = vrcp.pop %v340
    %v345 = vrcp.pop %v343
    %v346 = vmul.f32 %v335, %v344
    %v347 = vmul.f32 %v337, %v345
    %v348 = vpack.c.bf16 %v347, %v346
    %349 = vrot.lane.b32.xlu0 %v269, 64
    %v350 = vpop.permute.xlu0 %349
    %v353 = vsel %vm325, %v348, 0
    %355 = vmatprep.subr.bf16.mxu0 0
    %356 = vmatpush1.bf16.msra.mxu0 %v350
    %357 = vmatprep.subr.bf16.mxu0 0
    %358 = vmatpush1.bf16.msra.mxu0 0
    %359 = vmatprep.subr.bf16.mxu0 0
    %360 = vmatpush1.bf16.msra.mxu0 0
    %361 = vmatprep.subr.bf16.mxu0 0
    %362 = vmatpush1.bf16.msra.mxu0 0
    %363 = vmatprep.subr.bf16.mxu0 0
    %364 = vmatpush1.bf16.msra.mxu0 0
    %365 = vmatprep.subr.bf16.mxu0 0
    %366 = vmatpush1.bf16.msra.mxu0 0
    %367 = vmatprep.subr.bf16.mxu0 0
    %368 = vmatpush1.bf16.msra.mxu0 0
    %369 = vmatprep.subr.bf16.mxu0 0
    %370 = vmatpush1.bf16.msra.mxu0 0
    %371 = vmatprep.subr.bf16.mxu0 0
    %372 = vmatpush1.bf16.msra.mxu0 0
    %373 = vmatprep.subr.bf16.mxu0 0
    %374 = vmatpush1.bf16.msra.mxu0 0
    %375 = vmatprep.subr.bf16.mxu0 0
    %376 = vmatpush1.bf16.msra.mxu0 0
    %377 = vmatprep.subr.bf16.mxu0 0
    %378 = vmatpush1.bf16.msra.mxu0 0
    %379 = vmatprep.subr.bf16.mxu0 0
    %380 = vmatpush1.bf16.msra.mxu0 0
    %381 = vmatprep.subr.bf16.mxu0 0
    %382 = vmatpush1.bf16.msra.mxu0 0
    %383 = vmatprep.subr.bf16.mxu0 0
    %384 = vmatpush1.bf16.msra.mxu0 0
    %385 = vmatprep.subr.bf16.mxu0 0
    %386 = vmatpush1.bf16.msra.mxu0 0
    %387 = vmatprep.mubr.bf16.mxu0 0
    %388 = vmatmul.mubr.bf16.gmra.mrb[0].mxu0 %v353
    %v389 = vpop.f32.mrb[0].mxu0
    %v390 = vadd.f32 0.0, %v389
    %v391 = vpop.f32.mrb[0].mxu0
    %v392 = vpop.f32.mrb[0].mxu0
    %v393 = vadd.f32 0.0, %v392
    %v394 = vpop.f32.mrb[0].mxu0
    %395 = vdwg.mxu0
    %v396 = vpack.c.bf16 %v393, %v390
    %v397 = vpack.c.bf16 %v167, %v167
    %398 = vrot.lane.b32.xlu0 %v269, 120
    %v399 = vpop.permute.xlu0 %398
    %400 = vrot.lane.b32.xlu0 %v269, 88
    %v401 = vpop.permute.xlu0 %400
    %v403 = vsel %vm273, %v399, 0
    %v406 = vsel %vm273, %v401, 0
    %408 = vmatprep.subr.bf16.mxu0 0
    %409 = vmatpush1.bf16.xpose.msra.mxu0 %v406
    %410 = vmatprep.subr.bf16.mxu0 0
    %411 = vmatpush1.bf16.xpose.msra.mxu0 0
    %412 = vmatprep.subr.bf16.mxu0 0
    %413 = vmatpush1.bf16.xpose.msra.mxu0 0
    %414 = vmatprep.subr.bf16.mxu0 0
    %415 = vmatpush1.bf16.xpose.msra.mxu0 0
    %416 = vmatprep.subr.bf16.mxu0 0
    %417 = vmatpush1.bf16.xpose.msra.mxu0 0
    %418 = vmatprep.subr.bf16.mxu0 0
    %419 = vmatpush1.bf16.xpose.msra.mxu0 0
    %420 = vmatprep.subr.bf16.mxu0 0
    %421 = vmatpush1.bf16.xpose.msra.mxu0 0
    %422 = vmatprep.subr.bf16.mxu0 0
    %423 = vmatpush1.bf16.xpose.msra.mxu0 0
    %424 = vmatprep.subr.bf16.mxu0 0
    %425 = vmatpush1.bf16.xpose.msra.mxu0 0
    %426 = vmatprep.subr.bf16.mxu0 0
    %427 = vmatpush1.bf16.xpose.msra.mxu0 0
    %428 = vmatprep.subr.bf16.mxu0 0
    %429 = vmatpush1.bf16.xpose.msra.mxu0 0
    %430 = vmatprep.subr.bf16.mxu0 0
    %431 = vmatpush1.bf16.xpose.msra.mxu0 0
    %432 = vmatprep.subr.bf16.mxu0 0
    %433 = vmatpush1.bf16.xpose.msra.mxu0 0
    %434 = vmatprep.subr.bf16.mxu0 0
    %435 = vmatpush1.bf16.xpose.msra.mxu0 0
    %436 = vmatprep.subr.bf16.mxu0 0
    %437 = vmatpush1.bf16.xpose.msra.mxu0 0
    %438 = vmatprep.subr.bf16.mxu0 0
    %439 = vmatpush1.bf16.xpose.msra.mxu0 0
    %440 = vmatprep.mubr.bf16.mxu0 0
    %441 = vmatmul.mubr.bf16.gmra.mrb[0].mxu0 %v403
    %v442 = vpop.f32.mrb[0].mxu0
    %v443 = vadd.f32 0.0, %v442
    %v444 = vpop.f32.mrb[0].mxu0
    %v445 = vpop.f32.mrb[0].mxu0
    %v446 = vadd.f32 0.0, %v445
    %v447 = vpop.f32.mrb[0].mxu0
    %448 = vdwg.mxu0
    %v449 = vmul.f32 %v443, 0.35355338
    %v450 = vmul.f32 %v446, 0.35355338
    %v451 = vadd.f32 %v449, %v158
    %v452 = vadd.f32 %v450, %v159
    %v453 = vsel %vm325, %v451, -inf
    %454 = vmax.xlane.f32.xlu0 %v453
    %v455 = vpop.xlane.xlu0 %454
    %v456 = vsel %vm325, %v452, -inf
    %457 = vmax.xlane.f32.xlu0 %v456
    %v458 = vpop.xlane.xlu0 %457
    %v459 = vsub.f32 %v451, %v455
    %v460 = vsub.f32 %v452, %v458
    %v461 = vmul.f32 %v459, 1.442695
    %v462 = vpow.pop %v461
    %v463 = vmul.f32 %v460, 1.442695
    %v464 = vpow.pop %v463
    %v465 = vsel %vm325, %v462, 0.0
    %466 = vadd.xlane.f32.xlu0 %v465
    %v467 = vpop.xlane.xlu0 %466
    %v468 = vsel %vm325, %v464, 0.0
    %469 = vadd.xlane.f32.xlu0 %v468
    %v470 = vpop.xlane.xlu0 %469
    %v471 = vrcp.pop %v467
    %v472 = vrcp.pop %v470
    %v473 = vmul.f32 %v462, %v471
    %v474 = vmul.f32 %v464, %v472
    %v475 = vpack.c.bf16 %v474, %v473
    %476 = vrot.lane.b32.xlu0 %v269, 56
    %v477 = vpop.permute.xlu0 %476
    %v480 = vsel %vm325, %v475, 0
    %482 = vmatprep.subr.bf16.mxu0 0
    %483 = vmatpush1.bf16.msra.mxu0 %v477
    %484 = vmatprep.subr.bf16.mxu0 0
    %485 = vmatpush1.bf16.msra.mxu0 0
    %486 = vmatprep.subr.bf16.mxu0 0
    %487 = vmatpush1.bf16.msra.mxu0 0
    %488 = vmatprep.subr.bf16.mxu0 0
    %489 = vmatpush1.bf16.msra.mxu0 0
    %490 = vmatprep.subr.bf16.mxu0 0
    %491 = vmatpush1.bf16.msra.mxu0 0
    %492 = vmatprep.subr.bf16.mxu0 0
    %493 = vmatpush1.bf16.msra.mxu0 0
    %494 = vmatprep.subr.bf16.mxu0 0
    %495 = vmatpush1.bf16.msra.mxu0 0
    %496 = vmatprep.subr.bf16.mxu0 0
    %497 = vmatpush1.bf16.msra.mxu0 0
    %498 = vmatprep.subr.bf16.mxu0 0
    %499 = vmatpush1.bf16.msra.mxu0 0
    %500 = vmatprep.subr.bf16.mxu0 0
    %501 = vmatpush1.bf16.msra.mxu0 0
    %502 = vmatprep.subr.bf16.mxu0 0
    %503 = vmatpush1.bf16.msra.mxu0 0
    %504 = vmatprep.subr.bf16.mxu0 0
    %505 = vmatpush1.bf16.msra.mxu0 0
    %506 = vmatprep.subr.bf16.mxu0 0
    %507 = vmatpush1.bf16.msra.mxu0 0
    %508 = vmatprep.subr.bf16.mxu0 0
    %509 = vmatpush1.bf16.msra.mxu0 0
    %510 = vmatprep.subr.bf16.mxu0 0
    %511 = vmatpush1.bf16.msra.mxu0 0
    %512 = vmatprep.subr.bf16.mxu0 0
    %513 = vmatpush1.bf16.msra.mxu0 0
    %514 = vmatprep.mubr.bf16.mxu0 0
    %515 = vmatmul.mubr.bf16.gmra.mrb[0].mxu0 %v480
    %v516 = vpop.f32.mrb[0].mxu0
    %v517 = vadd.f32 0.0, %v516
    %v518 = vpop.f32.mrb[0].mxu0
    %v519 = vpop.f32.mrb[0].mxu0
    %v520 = vadd.f32 0.0, %v519
    %v521 = vpop.f32.mrb[0].mxu0
    %522 = vdwg.mxu0
    %v523 = vpack.c.bf16 %v520, %v517
    %v524 = vpack.c.bf16 %v168, %v168
    %v526 = vsel %vm273, %v523, 0
    %vm528 = vcmask 1043456
    %v530 = vsel %vm528, %v524, 0
    %532 = vmatprep.subr.bf16.mxu0 0
    %533 = vmatpush1.bf16.msra.mxu0 %v530
    %534 = vmatprep.subr.bf16.mxu0 0
    %535 = vmatpush1.bf16.msra.mxu0 0
    %536 = vmatprep.subr.bf16.mxu0 0
    %537 = vmatpush1.bf16.msra.mxu0 0
    %538 = vmatprep.subr.bf16.mxu0 0
    %539 = vmatpush1.bf16.msra.mxu0 0
    %540 = vmatprep.subr.bf16.mxu0 0
    %541 = vmatpush1.bf16.msra.mxu0 0
    %542 = vmatprep.subr.bf16.mxu0 0
    %543 = vmatpush1.bf16.msra.mxu0 0
    %544 = vmatprep.subr.bf16.mxu0 0
    %545 = vmatpush1.bf16.msra.mxu0 0
    %546 = vmatprep.subr.bf16.mxu0 0
    %547 = vmatpush1.bf16.msra.mxu0 0
    %548 = vmatprep.subr.bf16.mxu0 0
    %549 = vmatpush1.bf16.msra.mxu0 0
    %550 = vmatprep.subr.bf16.mxu0 0
    %551 = vmatpush1.bf16.msra.mxu0 0
    %552 = vmatprep.subr.bf16.mxu0 0
    %553 = vmatpush1.bf16.msra.mxu0 0
    %554 = vmatprep.subr.bf16.mxu0 0
    %555 = vmatpush1.bf16.msra.mxu0 0
    %556 = vmatprep.subr.bf16.mxu0 0
    %557 = vmatpush1.bf16.msra.mxu0 0
    %558 = vmatprep.subr.bf16.mxu0 0
    %559 = vmatpush1.bf16.msra.mxu0 0
    %560 = vmatprep.subr.bf16.mxu0 0
    %561 = vmatpush1.bf16.msra.mxu0 0
    %562 = vmatprep.subr.bf16.mxu0 0
    %563 = vmatpush1.bf16.msra.mxu0 0
    %564 = vmatprep.mubr.bf16.mxu0 0
    %565 = vmatmul.mubr.bf16.gmra.mrb[0].mxu0 %v526
    %v566 = vpop.f32.mrb[0].mxu0
    %v567 = vadd.f32 0.0, %v566
    %v568 = vpop.f32.mrb[0].mxu0
    %v569 = vpop.f32.mrb[0].mxu0
    %v570 = vadd.f32 0.0, %v569
    %v571 = vpop.f32.mrb[0].mxu0
    %572 = vdwg.mxu0
    %v574 = vsel %vm273, %v396, 0
    %v577 = vsel %vm528, %v397, 0
    %579 = vmatprep.subr.bf16.mxu0 0
    %580 = vmatpush1.bf16.msra.mxu0 %v577
    %581 = vmatprep.subr.bf16.mxu0 0
    %582 = vmatpush1.bf16.msra.mxu0 0
    %583 = vmatprep.subr.bf16.mxu0 0
    %584 = vmatpush1.bf16.msra.mxu0 0
    %585 = vmatprep.subr.bf16.mxu0 0
    %586 = vmatpush1.bf16.msra.mxu0 0
    %587 = vmatprep.subr.bf16.mxu0 0
    %588 = vmatpush1.bf16.msra.mxu0 0
    %589 = vmatprep.subr.bf16.mxu0 0
    %590 = vmatpush1.bf16.msra.mxu0 0
    %591 = vmatprep.subr.bf16.mxu0 0
    %592 = vmatpush1.bf16.msra.mxu0 0
    %593 = vmatprep.subr.bf16.mxu0 0
    %594 = vmatpush1.bf16.msra.mxu0 0
    %595 = vmatprep.subr.bf16.mxu0 0
    %596 = vmatpush1.bf16.msra.mxu0 0
    %597 = vmatprep.subr.bf16.mxu0 0
    %598 = vmatpush1.bf16.msra.mxu0 0
    %599 = vmatprep.subr.bf16.mxu0 0
    %600 = vmatpush1.bf16.msra.mxu0 0
    %601 = vmatprep.subr.bf16.mxu0 0
    %602 = vmatpush1.bf16.msra.mxu0 0
    %603 = vmatprep.subr.bf16.mxu0 0
    %604 = vmatpush1.bf16.msra.mxu0 0
    %605 = vmatprep.subr.bf16.mxu0 0
    %606 = vmatpush1.bf16.msra.mxu0 0
    %607 = vmatprep.subr.bf16.mxu0 0
    %608 = vmatpush1.bf16.msra.mxu0 0
    %609 = vmatprep.subr.bf16.mxu0 0
    %610 = vmatpush1.bf16.msra.mxu0 0
    %611 = vmatprep.mubr.bf16.mxu0 0
    %612 = vmatmul.mubr.bf16.gmra.mrb[0].mxu0 %v574
    %v613 = vpop.f32.mrb[0].mxu0
    %v614 = vadd.f32 %v567, %v613
    %v615 = vpop.f32.mrb[0].mxu0
    %v616 = vpop.f32.mrb[0].mxu0
    %v617 = vadd.f32 %v570, %v616
    %v618 = vpop.f32.mrb[0].mxu0
    %619 = vdwg.mxu0
    %620 = vrot.lane.b32.xlu0 %v269, 112
    %v621 = vpop.permute.xlu0 %620
    %622 = vrot.lane.b32.xlu0 %v269, 80
    %v623 = vpop.permute.xlu0 %622
    %v625 = vsel %vm273, %v621, 0
    %v628 = vsel %vm273, %v623, 0
    %630 = vmatprep.subr.bf16.mxu0 0
    %631 = vmatpush1.bf16.xpose.msra.mxu0 %v628
    %632 = vmatprep.subr.bf16.mxu0 0
    %633 = vmatpush1.bf16.xpose.msra.mxu0 0
    %634 = vmatprep.subr.bf16.mxu0 0
    %635 = vmatpush1.bf16.xpose.msra.mxu0 0
    %636 = vmatprep.subr.bf16.mxu0 0
    %637 = vmatpush1.bf16.xpose.msra.mxu0 0
    %638 = vmatprep.subr.bf16.mxu0 0
    %639 = vmatpush1.bf16.xpose.msra.mxu0 0
    %640 = vmatprep.subr.bf16.mxu0 0
    %641 = vmatpush1.bf16.xpose.msra.mxu0 0
    %642 = vmatprep.subr.bf16.mxu0 0
    %643 = vmatpush1.bf16.xpose.msra.mxu0 0
    %644 = vmatprep.subr.bf16.mxu0 0
    %645 = vmatpush1.bf16.xpose.msra.mxu0 0
    %646 = vmatprep.subr.bf16.mxu0 0
    %647 = vmatpush1.bf16.xpose.msra.mxu0 0
    %648 = vmatprep.subr.bf16.mxu0 0
    %649 = vmatpush1.bf16.xpose.msra.mxu0 0
    %650 = vmatprep.subr.bf16.mxu0 0
    %651 = vmatpush1.bf16.xpose.msra.mxu0 0
    %652 = vmatprep.subr.bf16.mxu0 0
    %653 = vmatpush1.bf16.xpose.msra.mxu0 0
    %654 = vmatprep.subr.bf16.mxu0 0
    %655 = vmatpush1.bf16.xpose.msra.mxu0 0
    %656 = vmatprep.subr.bf16.mxu0 0
    %657 = vmatpush1.bf16.xpose.msra.mxu0 0
    %658 = vmatprep.subr.bf16.mxu0 0
    %659 = vmatpush1.bf16.xpose.msra.mxu0 0
    %660 = vmatprep.subr.bf16.mxu0 0
    %661 = vmatpush1.bf16.xpose.msra.mxu0 0
    %662 = vmatprep.mubr.bf16.mxu0 0
    %663 = vmatmul.mubr.bf16.gmra.mrb[0].mxu0 %v625
    %v664 = vpop.f32.mrb[0].mxu0
    %v665 = vadd.f32 0.0, %v664
    %v666 = vpop.f32.mrb[0].mxu0
    %v667 = vpop.f32.mrb[0].mxu0
    %v668 = vadd.f32 0.0, %v667
    %v669 = vpop.f32.mrb[0].mxu0
    %670 = vdwg.mxu0
    %v671 = vmul.f32 %v665, 0.35355338
    %v672 = vmul.f32 %v668, 0.35355338
    %v673 = vadd.f32 %v671, %v158
    %v674 = vadd.f32 %v672, %v159
    %v675 = vsel %vm325, %v673, -inf
    %676 = vmax.xlane.f32.xlu0 %v675
    %v677 = vpop.xlane.xlu0 %676
    %v678 = vsel %vm325, %v674, -inf
    %679 = vmax.xlane.f32.xlu0 %v678
    %v680 = vpop.xlane.xlu0 %679
    %v681 = vsub.f32 %v673, %v677
    %v682 = vsub.f32 %v674, %v680
    %v683 = vmul.f32 %v681, 1.442695
    %v684 = vpow.pop %v683
    %v685 = vmul.f32 %v682, 1.442695
    %v686 = vpow.pop %v685
    %v687 = vsel %vm325, %v684, 0.0
    %688 = vadd.xlane.f32.xlu0 %v687
    %v689 = vpop.xlane.xlu0 %688
    %v690 = vsel %vm325, %v686, 0.0
    %691 = vadd.xlane.f32.xlu0 %v690
    %v692 = vpop.xlane.xlu0 %691
    %v693 = vrcp.pop %v689
    %v694 = vrcp.pop %v692
    %v695 = vmul.f32 %v684, %v693
    %v696 = vmul.f32 %v686, %v694
    %v697 = vpack.c.bf16 %v696, %v695
    %698 = vrot.lane.b32.xlu0 %v269, 48
    %v699 = vpop.permute.xlu0 %698
    %v702 = vsel %vm325, %v697, 0
    %704 = vmatprep.subr.bf16.mxu0 0
    %705 = vmatpush1.bf16.msra.mxu0 %v699
    %706 = vmatprep.subr.bf16.mxu0 0
    %707 = vmatpush1.bf16.msra.mxu0 0
    %708 = vmatprep.subr.bf16.mxu0 0
    %709 = vmatpush1.bf16.msra.mxu0 0
    %710 = vmatprep.subr.bf16.mxu0 0
    %711 = vmatpush1.bf16.msra.mxu0 0
    %712 = vmatprep.subr.bf16.mxu0 0
    %713 = vmatpush1.bf16.msra.mxu0 0
    %714 = vmatprep.subr.bf16.mxu0 0
    %715 = vmatpush1.bf16.msra.mxu0 0
    %716 = vmatprep.subr.bf16.mxu0 0
    %717 = vmatpush1.bf16.msra.mxu0 0
    %718 = vmatprep.subr.bf16.mxu0 0
    %719 = vmatpush1.bf16.msra.mxu0 0
    %720 = vmatprep.subr.bf16.mxu0 0
    %721 = vmatpush1.bf16.msra.mxu0 0
    %722 = vmatprep.subr.bf16.mxu0 0
    %723 = vmatpush1.bf16.msra.mxu0 0
    %724 = vmatprep.subr.bf16.mxu0 0
    %725 = vmatpush1.bf16.msra.mxu0 0
    %726 = vmatprep.subr.bf16.mxu0 0
    %727 = vmatpush1.bf16.msra.mxu0 0
    %728 = vmatprep.subr.bf16.mxu0 0
    %729 = vmatpush1.bf16.msra.mxu0 0
    %730 = vmatprep.subr.bf16.mxu0 0
    %731 = vmatpush1.bf16.msra.mxu0 0
    %732 = vmatprep.subr.bf16.mxu0 0
    %733 = vmatpush1.bf16.msra.mxu0 0
    %734 = vmatprep.subr.bf16.mxu0 0
    %735 = vmatpush1.bf16.msra.mxu0 0
    %736 = vmatprep.mubr.bf16.mxu0 0
    %737 = vmatmul.mubr.bf16.gmra.mrb[0].mxu0 %v702
    %v738 = vpop.f32.mrb[0].mxu0
    %v739 = vadd.f32 0.0, %v738
    %v740 = vpop.f32.mrb[0].mxu0
    %v741 = vpop.f32.mrb[0].mxu0
    %v742 = vadd.f32 0.0, %v741
    %v743 = vpop.f32.mrb[0].mxu0
    %744 = vdwg.mxu0
    %v745 = vpack.c.bf16 %v742, %v739
    %v746 = vpack.c.bf16 %v169, %v169
    %v748 = vsel %vm273, %v745, 0
    %v751 = vsel %vm528, %v746, 0
    %753 = vmatprep.subr.bf16.mxu0 0
    %754 = vmatpush1.bf16.msra.mxu0 %v751
    %755 = vmatprep.subr.bf16.mxu0 0
    %756 = vmatpush1.bf16.msra.mxu0 0
    %757 = vmatprep.subr.bf16.mxu0 0
    %758 = vmatpush1.bf16.msra.mxu0 0
    %759 = vmatprep.subr.bf16.mxu0 0
    %760 = vmatpush1.bf16.msra.mxu0 0
    %761 = vmatprep.subr.bf16.mxu0 0
    %762 = vmatpush1.bf16.msra.mxu0 0
    %763 = vmatprep.subr.bf16.mxu0 0
    %764 = vmatpush1.bf16.msra.mxu0 0
    %765 = vmatprep.subr.bf16.mxu0 0
    %766 = vmatpush1.bf16.msra.mxu0 0
    %767 = vmatprep.subr.bf16.mxu0 0
    %768 = vmatpush1.bf16.msra.mxu0 0
    %769 = vmatprep.subr.bf16.mxu0 0
    %770 = vmatpush1.bf16.msra.mxu0 0
    %771 = vmatprep.subr.bf16.mxu0 0
    %772 = vmatpush1.bf16.msra.mxu0 0
    %773 = vmatprep.subr.bf16.mxu0 0
    %774 = vmatpush1.bf16.msra.mxu0 0
    %775 = vmatprep.subr.bf16.mxu0 0
    %776 = vmatpush1.bf16.msra.mxu0 0
    %777 = vmatprep.subr.bf16.mxu0 0
    %778 = vmatpush1.bf16.msra.mxu0 0
    %779 = vmatprep.subr.bf16.mxu0 0
    %780 = vmatpush1.bf16.msra.mxu0 0
    %781 = vmatprep.subr.bf16.mxu0 0
    %782 = vmatpush1.bf16.msra.mxu0 0
    %783 = vmatprep.subr.bf16.mxu0 0
    %784 = vmatpush1.bf16.msra.mxu0 0
    %785 = vmatprep.mubr.bf16.mxu0 0
    %786 = vmatmul.mubr.bf16.gmra.mrb[0].mxu0 %v748
    %v787 = vpop.f32.mrb[0].mxu0
    %v788 = vadd.f32 0.0, %v787
    %v789 = vpop.f32.mrb[0].mxu0
    %v790 = vpop.f32.mrb[0].mxu0
    %v791 = vadd.f32 0.0, %v790
    %v792 = vpop.f32.mrb[0].mxu0
    %793 = vdwg.mxu0
    %v794 = vadd.f32 %v614, %v788
    %v795 = vadd.f32 %v617, %v791
    %796 = vrot.lane.b32.xlu0 %v269, 104
    %v797 = vpop.permute.xlu0 %796
    %798 = vrot.lane.b32.xlu0 %v269, 72
    %v799 = vpop.permute.xlu0 %798
    %v801 = vsel %vm273, %v797, 0
    %v804 = vsel %vm273, %v799, 0
    %806 = vmatprep.subr.bf16.mxu0 0
    %807 = vmatpush1.bf16.xpose.msra.mxu0 %v804
    %808 = vmatprep.subr.bf16.mxu0 0
    %809 = vmatpush1.bf16.xpose.msra.mxu0 0
    %810 = vmatprep.subr.bf16.mxu0 0
    %811 = vmatpush1.bf16.xpose.msra.mxu0 0
    %812 = vmatprep.subr.bf16.mxu0 0
    %813 = vmatpush1.bf16.xpose.msra.mxu0 0
    %814 = vmatprep.subr.bf16.mxu0 0
    %815 = vmatpush1.bf16.xpose.msra.mxu0 0
    %816 = vmatprep.subr.bf16.mxu0 0
    %817 = vmatpush1.bf16.xpose.msra.mxu0 0
    %818 = vmatprep.subr.bf16.mxu0 0
    %819 = vmatpush1.bf16.xpose.msra.mxu0 0
    %820 = vmatprep.subr.bf16.mxu0 0
    %821 = vmatpush1.bf16.xpose.msra.mxu0 0
    %822 = vmatprep.subr.bf16.mxu0 0
    %823 = vmatpush1.bf16.xpose.msra.mxu0 0
    %824 = vmatprep.subr.bf16.mxu0 0
    %825 = vmatpush1.bf16.xpose.msra.mxu0 0
    %826 = vmatprep.subr.bf16.mxu0 0
    %827 = vmatpush1.bf16.xpose.msra.mxu0 0
    %828 = vmatprep.subr.bf16.mxu0 0
    %829 = vmatpush1.bf16.xpose.msra.mxu0 0
    %830 = vmatprep.subr.bf16.mxu0 0
    %831 = vmatpush1.bf16.xpose.msra.mxu0 0
    %832 = vmatprep.subr.bf16.mxu0 0
    %833 = vmatpush1.bf16.xpose.msra.mxu0 0
    %834 = vmatprep.subr.bf16.mxu0 0
    %835 = vmatpush1.bf16.xpose.msra.mxu0 0
    %836 = vmatprep.subr.bf16.mxu0 0
    %837 = vmatpush1.bf16.xpose.msra.mxu0 0
    %838 = vmatprep.mubr.bf16.mxu0 0
    %839 = vmatmul.mubr.bf16.gmra.mrb[0].mxu0 %v801
    %v840 = vpop.f32.mrb[0].mxu0
    %v841 = vadd.f32 0.0, %v840
    %v842 = vpop.f32.mrb[0].mxu0
    %v843 = vpop.f32.mrb[0].mxu0
    %v844 = vadd.f32 0.0, %v843
    %v845 = vpop.f32.mrb[0].mxu0
    %846 = vdwg.mxu0
    %v847 = vmul.f32 %v841, 0.35355338
    %v848 = vmul.f32 %v844, 0.35355338
    %v849 = vadd.f32 %v847, %v158
    %v850 = vadd.f32 %v848, %v159
    %v851 = vsel %vm325, %v849, -inf
    %852 = vmax.xlane.f32.xlu0 %v851
    %v853 = vpop.xlane.xlu0 %852
    %v854 = vsel %vm325, %v850, -inf
    %855 = vmax.xlane.f32.xlu0 %v854
    %v856 = vpop.xlane.xlu0 %855
    %v857 = vsub.f32 %v849, %v853
    %v858 = vsub.f32 %v850, %v856
    %v859 = vmul.f32 %v857, 1.442695
    %v860 = vpow.pop %v859
    %v861 = vmul.f32 %v858, 1.442695
    %v862 = vpow.pop %v861
    %v863 = vsel %vm325, %v860, 0.0
    %864 = vadd.xlane.f32.xlu0 %v863
    %v865 = vpop.xlane.xlu0 %864
    %v866 = vsel %vm325, %v862, 0.0
    %867 = vadd.xlane.f32.xlu0 %v866
    %v868 = vpop.xlane.xlu0 %867
    %v869 = vrcp.pop %v865
    %v870 = vrcp.pop %v868
    %v871 = vmul.f32 %v860, %v869
    %v872 = vmul.f32 %v862, %v870
    %v873 = vpack.c.bf16 %v872, %v871
    %874 = vrot.lane.b32.xlu0 %v269, 40
    %v875 = vpop.permute.xlu0 %874
    %v878 = vsel %vm325, %v873, 0
    %880 = vmatprep.subr.bf16.mxu0 0
    %881 = vmatpush1.bf16.msra.mxu0 %v875
    %882 = vmatprep.subr.bf16.mxu0 0
    %883 = vmatpush1.bf16.msra.mxu0 0
    %884 = vmatprep.subr.bf16.mxu0 0
    %885 = vmatpush1.bf16.msra.mxu0 0
    %886 = vmatprep.subr.bf16.mxu0 0
    %887 = vmatpush1.bf16.msra.mxu0 0
    %888 = vmatprep.subr.bf16.mxu0 0
    %889 = vmatpush1.bf16.msra.mxu0 0
    %890 = vmatprep.subr.bf16.mxu0 0
    %891 = vmatpush1.bf16.msra.mxu0 0
    %892 = vmatprep.subr.bf16.mxu0 0
    %893 = vmatpush1.bf16.msra.mxu0 0
    %894 = vmatprep.subr.bf16.mxu0 0
    %895 = vmatpush1.bf16.msra.mxu0 0
    %896 = vmatprep.subr.bf16.mxu0 0
    %897 = vmatpush1.bf16.msra.mxu0 0
    %898 = vmatprep.subr.bf16.mxu0 0
    %899 = vmatpush1.bf16.msra.mxu0 0
    %900 = vmatprep.subr.bf16.mxu0 0
    %901 = vmatpush1.bf16.msra.mxu0 0
    %902 = vmatprep.subr.bf16.mxu0 0
    %903 = vmatpush1.bf16.msra.mxu0 0
    %904 = vmatprep.subr.bf16.mxu0 0
    %905 = vmatpush1.bf16.msra.mxu0 0
    %906 = vmatprep.subr.bf16.mxu0 0
    %907 = vmatpush1.bf16.msra.mxu0 0
    %908 = vmatprep.subr.bf16.mxu0 0
    %909 = vmatpush1.bf16.msra.mxu0 0
    %910 = vmatprep.subr.bf16.mxu0 0
    %911 = vmatpush1.bf16.msra.mxu0 0
    %912 = vmatprep.mubr.bf16.mxu0 0
    %913 = vmatmul.mubr.bf16.gmra.mrb[0].mxu0 %v878
    %v914 = vpop.f32.mrb[0].mxu0
    %v915 = vadd.f32 0.0, %v914
    %v916 = vpop.f32.mrb[0].mxu0
    %v917 = vpop.f32.mrb[0].mxu0
    %v918 = vadd.f32 0.0, %v917
    %v919 = vpop.f32.mrb[0].mxu0
    %920 = vdwg.mxu0
    %v921 = vpack.c.bf16 %v918, %v915
    %v922 = vpack.c.bf16 %v170, %v170
    %v924 = vsel %vm273, %v921, 0
    %v927 = vsel %vm528, %v922, 0
    %929 = vmatprep.subr.bf16.mxu0 0
    %930 = vmatpush1.bf16.msra.mxu0 %v927
    %931 = vmatprep.subr.bf16.mxu0 0
    %932 = vmatpush1.bf16.msra.mxu0 0
    %933 = vmatprep.subr.bf16.mxu0 0
    %934 = vmatpush1.bf16.msra.mxu0 0
    %935 = vmatprep.subr.bf16.mxu0 0
    %936 = vmatpush1.bf16.msra.mxu0 0
    %937 = vmatprep.subr.bf16.mxu0 0
    %938 = vmatpush1.bf16.msra.mxu0 0
    %939 = vmatprep.subr.bf16.mxu0 0
    %940 = vmatpush1.bf16.msra.mxu0 0
    %941 = vmatprep.subr.bf16.mxu0 0
    %942 = vmatpush1.bf16.msra.mxu0 0
    %943 = vmatprep.subr.bf16.mxu0 0
    %944 = vmatpush1.bf16.msra.mxu0 0
    %945 = vmatprep.subr.bf16.mxu0 0
    %946 = vmatpush1.bf16.msra.mxu0 0
    %947 = vmatprep.subr.bf16.mxu0 0
    %948 = vmatpush1.bf16.msra.mxu0 0
    %949 = vmatprep.subr.bf16.mxu0 0
    %950 = vmatpush1.bf16.msra.mxu0 0
    %951 = vmatprep.subr.bf16.mxu0 0
    %952 = vmatpush1.bf16.msra.mxu0 0
    %953 = vmatprep.subr.bf16.mxu0 0
    %954 = vmatpush1.bf16.msra.mxu0 0
    %955 = vmatprep.subr.bf16.mxu0 0
    %956 = vmatpush1.bf16.msra.mxu0 0
    %957 = vmatprep.subr.bf16.mxu0 0
    %958 = vmatpush1.bf16.msra.mxu0 0
    %959 = vmatprep.subr.bf16.mxu0 0
    %960 = vmatpush1.bf16.msra.mxu0 0
    %961 = vmatprep.mubr.bf16.mxu0 0
    %962 = vmatmul.mubr.bf16.gmra.mrb[0].mxu0 %v924
    %v963 = vpop.f32.mrb[0].mxu0
    %v964 = vadd.f32 0.0, %v963
    %v965 = vpop.f32.mrb[0].mxu0
    %v966 = vpop.f32.mrb[0].mxu0
    %v967 = vadd.f32 0.0, %v966
    %v968 = vpop.f32.mrb[0].mxu0
    %969 = vdwg.mxu0
    %v970 = vadd.f32 %v794, %v964
    %v971 = vadd.f32 %v795, %v967
    %v972 = vadd.f32 %v156, %v970
    %v973 = vadd.f32 %v157, %v971
    %v975 = vlaneseq
    %v976 = vshrl.u32 %v975, 7
    %v977 = vsub.s32 0, %v976
    %v978 = vrot.slane %v171, %v977
    %v980 = vadd.f32 %v972, %v978
    %v981 = vadd.f32 %v973, %v978
    %v982 = vld [vmem:[#allocation11] sm:$0x1]
    %v983 = vld [vmem:[#allocation13] sm:$0x1]
    %v984 = vsel %vm172, %v980, 0.0
    %985 = vadd.xlane.f32.xlu0 %v984
    %v986 = vpop.xlane.xlu0 %985
    %v987 = vsel %vm172, %v981, 0.0
    %988 = vadd.xlane.f32.xlu0 %v987
    %v989 = vpop.xlane.xlu0 %988
    %v990 = vmul.f32 %v986, %v179
    %v991 = vmul.f32 %v989, %v179
    %v992 = vsub.f32 %v980, %v990
    %v993 = vsub.f32 %v981, %v991
    %v994 = vmul.f32 %v992, %v992
    %v995 = vmul.f32 %v993, %v993
    %v996 = vsel %vm172, %v994, 0.0
    %997 = vadd.xlane.f32.xlu0 %v996
    %v998 = vpop.xlane.xlu0 %997
    %v999 = vsel %vm172, %v995, 0.0
    %1000 = vadd.xlane.f32.xlu0 %v999
    %v1001 = vpop.xlane.xlu0 %1000
    %v1002 = vmul.f32 %v998, %v179
    %v1003 = vmul.f32 %v1001, %v179
    %v1004 = vadd.f32 %v1002, 1e-05
    %v1005 = vadd.f32 %v1003, 1e-05
    %v1006 = vrsqrt.pop %v1004
    %v1007 = vrsqrt.pop %v1005
    %v1008 = vmul.f32 %v992, %v1006
    %v1009 = vmul.f32 %v993, %v1007
    %v1011 = vlaneseq
    %v1012 = vshrl.u32 %v1011, 7
    %v1013 = vsub.s32 0, %v1012
    %v1014 = vrot.slane %v982, %v1013
    %v1016 = vmul.f32 %v1008, %v1014
    %v1017 = vmul.f32 %v1009, %v1014
    %v1019 = vlaneseq
    %v1020 = vshrl.u32 %v1019, 7
    %v1021 = vsub.s32 0, %v1020
    %v1022 = vrot.slane %v983, %v1021
    %v1024 = vadd.f32 %v1016, %v1022
    %v1025 = vadd.f32 %v1017, %v1022
    %v1026 = vld [vmem:[%s10] sm:$0xff]
    %v1027 = vld [vmem:[%s10 + $0x8] sm:$0xff]
    %v1028 = vld [vmem:[%s10 + $0x10] sm:$0xff]
    %v1029 = vld [vmem:[%s10 + $0x18] sm:$0xff]
    %v1030 = vpack.c.bf16 %v1025, %v1024
    %v1031 = vpack.c.bf16 %v1027, %v1026
    %v1032 = vpack.c.bf16 %v1029, %v1028
    %v1033 = vld [vmem:[%s11] sm:$0x1]
    %v1035 = vlaneseq
    %v1036 = vshrl.u32 %v1035, 7
    %v1037 = vsub.s32 0, %v1036
    %v1038 = vrot.slane %v1033, %v1037
    %v1041 = vsel %vm172, %v1030, 0
    %1043 = vmatprep.subr.bf16.mxu0 0
    %1044 = vmatpush1.bf16.msra.mxu0 %v1031
    %1045 = vmatprep.subr.bf16.mxu0 0
    %1046 = vmatpush1.bf16.msra.mxu0 %v1032
    %1047 = vmatprep.subr.bf16.mxu0 0
    %1048 = vmatpush1.bf16.msra.mxu0 0
    %1049 = vmatprep.subr.bf16.mxu0 0
    %1050 = vmatpush1.bf16.msra.mxu0 0
    %1051 = vmatprep.subr.bf16.mxu0 0
    %1052 = vmatpush1.bf16.msra.mxu0 0
    %1053 = vmatprep.subr.bf16.mxu0 0
    %1054 = vmatpush1.bf16.msra.mxu0 0
    %1055 = vmatprep.subr.bf16.mxu0 0
    %1056 = vmatpush1.bf16.msra.mxu0 0
    %1057 = vmatprep.subr.bf16.mxu0 0
    %1058 = vmatpush1.bf16.msra.mxu0 0
    %1059 = vmatprep.subr.bf16.mxu0 0
    %1060 = vmatpush1.bf16.msra.mxu0 0
    %1061 = vmatprep.subr.bf16.mxu0 0
    %1062 = vmatpush1.bf16.msra.mxu0 0
    %1063 = vmatprep.subr.bf16.mxu0 0
    %1064 = vmatpush1.bf16.msra.mxu0 0
    %1065 = vmatprep.subr.bf16.mxu0 0
    %1066 = vmatpush1.bf16.msra.mxu0 0
    %1067 = vmatprep.subr.bf16.mxu0 0
    %1068 = vmatpush1.bf16.msra.mxu0 0
    %1069 = vmatprep.subr.bf16.mxu0 0
    %1070 = vmatpush1.bf16.msra.mxu0 0
    %1071 = vmatprep.subr.bf16.mxu0 0
    %1072 = vmatpush1.bf16.msra.mxu0 0
    %1073 = vmatprep.subr.bf16.mxu0 0
    %1074 = vmatpush1.bf16.msra.mxu0 0
    %1075 = vmatprep.mubr.bf16.mxu0 0
    %1076 = vmatmul.mubr.bf16.gmra.mrb[0].mxu0 %v1041
    %v1077 = vpop.f32.mrb[0].mxu0
    %v1078 = vadd.f32 %v1038, %v1077
    %v1079 = vpop.f32.mrb[0].mxu0
    %v1080 = vpop.f32.mrb[0].mxu0
    %v1081 = vadd.f32 %v1038, %v1080
    %v1082 = vpop.f32.mrb[0].mxu0
    %1083 = vdwg.mxu0
    %v1084 = vmax.f32 %v1078, 0.0
    %v1085 = vmax.f32 %v1081, 0.0
    %v1086 = vld [vmem:[%s12] sm:$0xff]
    %v1087 = vld [vmem:[%s12 + $0x8] sm:$0xff]
    %v1088 = vld [vmem:[%s12 + $0x10] sm:$0xff]
    %v1089 = vld [vmem:[%s12 + $0x18] sm:$0xff]
    %v1090 = vld [vmem:[%s12 + $0x20] sm:$0xff]
    %v1091 = vld [vmem:[%s12 + $0x28] sm:$0xff]
    %v1092 = vld [vmem:[%s12 + $0x30] sm:$0xff]
    %v1093 = vld [vmem:[%s12 + $0x38] sm:$0xff]
    %v1094 = vpack.c.bf16 %v1085, %v1084
    %v1095 = vpack.c.bf16 %v1087, %v1086
    %v1096 = vpack.c.bf16 %v1089, %v1088
    %v1097 = vpack.c.bf16 %v1091, %v1090
    %v1098 = vpack.c.bf16 %v1093, %v1092
    %vm1099 = vcmask 523264
    %v1101 = vsel %vm1099, %v1094, 0
    %1103 = vmatprep.subr.bf16.mxu0 0
    %1104 = vmatpush1.bf16.msra.mxu0 %v1095
    %1105 = vmatprep.subr.bf16.mxu0 0
    %1106 = vmatpush1.bf16.msra.mxu0 %v1096
    %1107 = vmatprep.subr.bf16.mxu0 0
    %1108 = vmatpush1.bf16.msra.mxu0 %v1097
    %1109 = vmatprep.subr.bf16.mxu0 0
    %1110 = vmatpush1.bf16.msra.mxu0 %v1098
    %1111 = vmatprep.subr.bf16.mxu0 0
    %1112 = vmatpush1.bf16.msra.mxu0 0
    %1113 = vmatprep.subr.bf16.mxu0 0
    %1114 = vmatpush1.bf16.msra.mxu0 0
    %1115 = vmatprep.subr.bf16.mxu0 0
    %1116 = vmatpush1.bf16.msra.mxu0 0
    %1117 = vmatprep.subr.bf16.mxu0 0
    %1118 = vmatpush1.bf16.msra.mxu0 0
    %1119 = vmatprep.subr.bf16.mxu0 0
    %1120 = vmatpush1.bf16.msra.mxu0 0
    %1121 = vmatprep.subr.bf16.mxu0 0
    %1122 = vmatpush1.bf16.msra.mxu0 0
    %1123 = vmatprep.subr.bf16.mxu0 0
    %1124 = vmatpush1.bf16.msra.mxu0 0
    %1125 = vmatprep.subr.bf16.mxu0 0
    %1126 = vmatpush1.bf16.msra.mxu0 0
    %1127 = vmatprep.subr.bf16.mxu0 0
    %1128 = vmatpush1.bf16.msra.mxu0 0
    %1129 = vmatprep.subr.bf16.mxu0 0
    %1130 = vmatpush1.bf16.msra.mxu0 0
    %1131 = vmatprep.subr.bf16.mxu0 0
    %1132 = vmatpush1.bf16.msra.mxu0 0
    %1133 = vmatprep.subr.bf16.mxu0 0
    %1134 = vmatpush1.bf16.msra.mxu0 0
    %1135 = vmatprep.mubr.bf16.mxu0 0
    %1136 = vmatmul.mubr.bf16.gmra.mrb[0].mxu0 %v1101
    %v1137 = vpop.f32.mrb[0].mxu0
    %v1138 = vadd.f32 0.0, %v1137
    %v1139 = vpop.f32.mrb[0].mxu0
    %v1140 = vpop.f32.mrb[0].mxu0
    %v1141 = vadd.f32 0.0, %v1140
    %v1142 = vpop.f32.mrb[0].mxu0
    %1143 = vdwg.mxu0
    %v1144 = vadd.f32 %v980, %v1138
    %v1145 = vadd.f32 %v981, %v1141
    %v1146 = vld [vmem:[%s13] sm:$0x1]
    %v1148 = vlaneseq
    %v1149 = vshrl.u32 %v1148, 7
    %v1150 = vsub.s32 0, %v1149
    %v1151 = vrot.slane %v1146, %v1150
    %v1153 = vadd.f32 %v1144, %v1151
    %v1154 = vadd.f32 %v1145, %v1151
    %s1155 = scalar_lea.vmem %s2, 1
    %v1156 = vld [vmem:[%s1155] sm:$0x1]
    %s1157 = scalar_lea.vmem [#allocation7], 1
    %v1158 = vld [vmem:[%s1157] sm:$0x1]
    %s1159 = scalar_lea.vmem %s4, 32
    %v1160 = vld [vmem:[%s1159] sm:$0xff]
    %v1161 = vld [vmem:[%s1159 + $0x8] sm:$0xff]
    %v1162 = vld [vmem:[%s1159 + $0x10] sm:$0xff]
    %v1163 = vld [vmem:[%s1159 + $0x18] sm:$0xff]
    %s1164 = scalar_lea.vmem [#allocation8], 1
    %v1165 = vld [vmem:[%s1164] sm:$0x1]
    %s1166 = scalar_lea.vmem %s6, 32
    %v1167 = vld [vmem:[%s1166] sm:$0xff]
    %v1168 = vld [vmem:[%s1166 + $0x8] sm:$0xff]
    %v1169 = vld [vmem:[%s1166 + $0x10] sm:$0xff]
    %v1170 = vld [vmem:[%s1166 + $0x18] sm:$0xff]
    %s1171 = scalar_lea.vmem [#allocation10], 1
    %v1172 = vld [vmem:[%s1171] sm:$0x1]
    %v1173 = vsel %vm172, %v1153, 0.0
    %1174 = vadd.xlane.f32.xlu0 %v1173
    %v1175 = vpop.xlane.xlu0 %1174
    %v1176 = vsel %vm172, %v1154, 0.0
    %1177 = vadd.xlane.f32.xlu0 %v1176
    %v1178 = vpop.xlane.xlu0 %1177
    %v1179 = vmul.f32 %v1175, %v179
    %v1180 = vmul.f32 %v1178, %v179
    %v1181 = vsub.f32 %v1153, %v1179
    %v1182 = vsub.f32 %v1154, %v1180
    %v1183 = vmul.f32 %v1181, %v1181
    %v1184 = vmul.f32 %v1182, %v1182
    %v1185 = vsel %vm172, %v1183, 0.0
    %1186 = vadd.xlane.f32.xlu0 %v1185
    %v1187 = vpop.xlane.xlu0 %1186
    %v1188 = vsel %vm172, %v1184, 0.0
    %1189 = vadd.xlane.f32.xlu0 %v1188
    %v1190 = vpop.xlane.xlu0 %1189
    %v1191 = vmul.f32 %v1187, %v179
    %v1192 = vmul.f32 %v1190, %v179
    %v1193 = vadd.f32 %v1191, 1e-05
    %v1194 = vadd.f32 %v1192, 1e-05
    %v1195 = vrsqrt.pop %v1193
    %v1196 = vrsqrt.pop %v1194
    %v1197 = vmul.f32 %v1181, %v1195
    %v1198 = vmul.f32 %v1182, %v1196
    %v1200 = vlaneseq
    %v1201 = vshrl.u32 %v1200, 7
    %v1202 = vsub.s32 0, %v1201
    %v1203 = vrot.slane %v1156, %v1202
    %v1205 = vmul.f32 %v1197, %v1203
    %v1206 = vmul.f32 %v1198, %v1203
    %v1208 = vlaneseq
    %v1209 = vshrl.u32 %v1208, 7
    %v1210 = vsub.s32 0, %v1209
    %v1211 = vrot.slane %v1158, %v1210
    %v1213 = vadd.f32 %v1205, %v1211
    %v1214 = vadd.f32 %v1206, %v1211
    %v1215 = vpack.c.bf16 %v1214, %v1213
    %v1216 = vpack.c.bf16 %v1161, %v1160
    %v1217 = vpack.c.bf16 %v1163, %v1162
    %v1219 = vlaneseq
    %v1220 = vshrl.u32 %v1219, 7
    %v1221 = vsub.s32 0, %v1220
    %v1222 = vrot.slane %v1165, %v1221
    %v1225 = vsel %vm172, %v1215, 0
    %1227 = vmatprep.subr.bf16.mxu0 0
    %1228 = vmatpush1.bf16.msra.mxu0 %v1216
    %1229 = vmatprep.subr.bf16.mxu0 0
    %1230 = vmatpush1.bf16.msra.mxu0 %v1217
    %1231 = vmatprep.subr.bf16.mxu0 0
    %1232 = vmatpush1.bf16.msra.mxu0 0
    %1233 = vmatprep.subr.bf16.mxu0 0
    %1234 = vmatpush1.bf16.msra.mxu0 0
    %1235 = vmatprep.subr.bf16.mxu0 0
    %1236 = vmatpush1.bf16.msra.mxu0 0
    %1237 = vmatprep.subr.bf16.mxu0 0
    %1238 = vmatpush1.bf16.msra.mxu0 0
    %1239 = vmatprep.subr.bf16.mxu0 0
    %1240 = vmatpush1.bf16.msra.mxu0 0
    %1241 = vmatprep.subr.bf16.mxu0 0
    %1242 = vmatpush1.bf16.msra.mxu0 0
    %1243 = vmatprep.subr.bf16.mxu0 0
    %1244 = vmatpush1.bf16.msra.mxu0 0
    %1245 = vmatprep.subr.bf16.mxu0 0
    %1246 = vmatpush1.bf16.msra.mxu0 0
    %1247 = vmatprep.subr.bf16.mxu0 0
    %1248 = vmatpush1.bf16.msra.mxu0 0
    %1249 = vmatprep.subr.bf16.mxu0 0
    %1250 = vmatpush1.bf16.msra.mxu0 0
    %1251 = vmatprep.subr.bf16.mxu0 0
    %1252 = vmatpush1.bf16.msra.mxu0 0
    %1253 = vmatprep.subr.bf16.mxu0 0
    %1254 = vmatpush1.bf16.msra.mxu0 0
    %1255 = vmatprep.subr.bf16.mxu0 0
    %1256 = vmatpush1.bf16.msra.mxu0 0
    %1257 = vmatprep.subr.bf16.mxu0 0
    %1258 = vmatpush1.bf16.msra.mxu0 0
    %1259 = vmatprep.mubr.bf16.mxu0 0
    %1260 = vmatmul.mubr.bf16.gmra.mrb[0].mxu0 %v1225
    %v1261 = vpop.f32.mrb[0].mxu0
    %v1262 = vadd.f32 %v1222, %v1261
    %v1263 = vpop.f32.mrb[0].mxu0
    %v1264 = vpop.f32.mrb[0].mxu0
    %v1265 = vadd.f32 %v1222, %v1264
    %v1266 = vpop.f32.mrb[0].mxu0
    %1267 = vdwg.mxu0
    %v1268 = vpack.c.bf16 %v1265, %v1262
    %1270 = vrot.lane.b32.xlu0 %v1268, 96
    %v1271 = vpop.permute.xlu0 %1270
    %v1273 = vsel %vm273, %v1268, 0
    %v1276 = vsel %vm273, %v1271, 0
    %1278 = vmatprep.subr.bf16.mxu0 0
    %1279 = vmatpush1.bf16.xpose.msra.mxu0 %v1276
    %1280 = vmatprep.subr.bf16.mxu0 0
    %1281 = vmatpush1.bf16.xpose.msra.mxu0 0
    %1282 = vmatprep.subr.bf16.mxu0 0
    %1283 = vmatpush1.bf16.xpose.msra.mxu0 0
    %1284 = vmatprep.subr.bf16.mxu0 0
    %1285 = vmatpush1.bf16.xpose.msra.mxu0 0
    %1286 = vmatprep.subr.bf16.mxu0 0
    %1287 = vmatpush1.bf16.xpose.msra.mxu0 0
    %1288 = vmatprep.subr.bf16.mxu0 0
    %1289 = vmatpush1.bf16.xpose.msra.mxu0 0
    %1290 = vmatprep.subr.bf16.mxu0 0
    %1291 = vmatpush1.bf16.xpose.msra.mxu0 0
    %1292 = vmatprep.subr.bf16.mxu0 0
    %1293 = vmatpush1.bf16.xpose.msra.mxu0 0
    %1294 = vmatprep.subr.bf16.mxu0 0
    %1295 = vmatpush1.bf16.xpose.msra.mxu0 0
    %1296 = vmatprep.subr.bf16.mxu0 0
    %1297 = vmatpush1.bf16.xpose.msra.mxu0 0
    %1298 = vmatprep.subr.bf16.mxu0 0
    %1299 = vmatpush1.bf16.xpose.msra.mxu0 0
    %1300 = vmatprep.subr.bf16.mxu0 0
    %1301 = vmatpush1.bf16.xpose.msra.mxu0 0
    %1302 = vmatprep.subr.bf16.mxu0 0
    %1303 = vmatpush1.bf16.xpose.msra.mxu0 0
    %1304 = vmatprep.subr.bf16.mxu0 0
    %1305 = vmatpush1.bf16.xpose.msra.mxu0 0
    %1306 = vmatprep.subr.bf16.mxu0 0
    %1307 = vmatpush1.bf16.xpose.msra.mxu0 0
    %1308 = vmatprep.subr.bf16.mxu0 0
    %1309 = vmatpush1.bf16.xpose.msra.mxu0 0
    %1310 = vmatprep.mubr.bf16.mxu0 0
    %1311 = vmatmul.mubr.bf16.gmra.mrb[0].mxu0 %v1273
    %v1312 = vpop.f32.mrb[0].mxu0
    %v1313 = vadd.f32 0.0, %v1312
    %v1314 = vpop.f32.mrb[0].mxu0
    %v1315 = vpop.f32.mrb[0].mxu0
    %v1316 = vadd.f32 0.0, %v1315
    %v1317 = vpop.f32.mrb[0].mxu0
    %1318 = vdwg.mxu0
    %v1319 = vmul.f32 %v1313, 0.35355338
    %v1320 = vmul.f32 %v1316, 0.35355338
    %v1321 = vadd.f32 %v1319, %v158
    %v1322 = vadd.f32 %v1320, %v159
    %v1323 = vsel %vm325, %v1321, -inf
    %1324 = vmax.xlane.f32.xlu0 %v1323
    %v1325 = vpop.xlane.xlu0 %1324
    %v1326 = vsel %vm325, %v1322, -inf
    %1327 = vmax.xlane.f32.xlu0 %v1326
    %v1328 = vpop.xlane.xlu0 %1327
    %v1329 = vsub.f32 %v1321, %v1325
    %v1330 = vsub.f32 %v1322, %v1328
    %v1331 = vmul.f32 %v1329, 1.442695
    %v1332 = vpow.pop %v1331
    %v1333 = vmul.f32 %v1330, 1.442695
    %v1334 = vpow.pop %v1333
    %v1335 = vsel %vm325, %v1332, 0.0
    %1336 = vadd.xlane.f32.xlu0 %v1335
    %v1337 = vpop.xlane.xlu0 %1336
    %v1338 = vsel %vm325, %v1334, 0.0
    %1339 = vadd.xlane.f32.xlu0 %v1338
    %v1340 = vpop.xlane.xlu0 %1339
    %v1341 = vrcp.pop %v1337
    %v1342 = vrcp.pop %v1340
    %v1343 = vmul.f32 %v1332, %v1341
    %v1344 = vmul.f32 %v1334, %v1342
    %v1345 = vpack.c.bf16 %v1344, %v1343
    %1346 = vrot.lane.b32.xlu0 %v1268, 64
    %v1347 = vpop.permute.xlu0 %1346
    %v1350 = vsel %vm325, %v1345, 0
    %1352 = vmatprep.subr.bf16.mxu0 0
    %1353 = vmatpush1.bf16.msra.mxu0 %v1347
    %1354 = vmatprep.subr.bf16.mxu0 0
    %1355 = vmatpush1.bf16.msra.mxu0 0
    %1356 = vmatprep.subr.bf16.mxu0 0
    %1357 = vmatpush1.bf16.msra.mxu0 0
    %1358 = vmatprep.subr.bf16.mxu0 0
    %1359 = vmatpush1.bf16.msra.mxu0 0
    %1360 = vmatprep.subr.bf16.mxu0 0
    %1361 = vmatpush1.bf16.msra.mxu0 0
    %1362 = vmatprep.subr.bf16.mxu0 0
    %1363 = vmatpush1.bf16.msra.mxu0 0
    %1364 = vmatprep.subr.bf16.mxu0 0
    %1365 = vmatpush1.bf16.msra.mxu0 0
    %1366 = vmatprep.subr.bf16.mxu0 0
    %1367 = vmatpush1.bf16.msra.mxu0 0
    %1368 = vmatprep.subr.bf16.mxu0 0
    %1369 = vmatpush1.bf16.msra.mxu0 0
    %1370 = vmatprep.subr.bf16.mxu0 0
    %1371 = vmatpush1.bf16.msra.mxu0 0
    %1372 = vmatprep.subr.bf16.mxu0 0
    %1373 = vmatpush1.bf16.msra.mxu0 0
    %1374 = vmatprep.subr.bf16.mxu0 0
    %1375 = vmatpush1.bf16.msra.mxu0 0
    %1376 = vmatprep.subr.bf16.mxu0 0
    %1377 = vmatpush1.bf16.msra.mxu0 0
    %1378 = vmatprep.subr.bf16.mxu0 0
    %1379 = vmatpush1.bf16.msra.mxu0 0
    %1380 = vmatprep.subr.bf16.mxu0 0
    %1381 = vmatpush1.bf16.msra.mxu0 0
    %1382 = vmatprep.subr.bf16.mxu0 0
    %1383 = vmatpush1.bf16.msra.mxu0 0
    %1384 = vmatprep.mubr.bf16.mxu0 0
    %1385 = vmatmul.mubr.bf16.gmra.mrb[0].mxu0 %v1350
    %v1386 = vpop.f32.mrb[0].mxu0
    %v1387 = vadd.f32 0.0, %v1386
    %v1388 = vpop.f32.mrb[0].mxu0
    %v1389 = vpop.f32.mrb[0].mxu0
    %v1390 = vadd.f32 0.0, %v1389
    %v1391 = vpop.f32.mrb[0].mxu0
    %1392 = vdwg.mxu0
    %v1393 = vpack.c.bf16 %v1390, %v1387
    %v1394 = vpack.c.bf16 %v1167, %v1167
    %1395 = vrot.lane.b32.xlu0 %v1268, 120
    %v1396 = vpop.permute.xlu0 %1395
    %1397 = vrot.lane.b32.xlu0 %v1268, 88
    %v1398 = vpop.permute.xlu0 %1397
    %v1400 = vsel %vm273, %v1396, 0
    %v1403 = vsel %vm273, %v1398, 0
    %1405 = vmatprep.subr.bf16.mxu0 0
    %1406 = vmatpush1.bf16.xpose.msra.mxu0 %v1403
    %1407 = vmatprep.subr.bf16.mxu0 0
    %1408 = vmatpush1.bf16.xpose.msra.mxu0 0
    %1409 = vmatprep.subr.bf16.mxu0 0
    %1410 = vmatpush1.bf16.xpose.msra.mxu0 0
    %1411 = vmatprep.subr.bf16.mxu0 0
    %1412 = vmatpush1.bf16.xpose.msra.mxu0 0
    %1413 = vmatprep.subr.bf16.mxu0 0
    %1414 = vmatpush1.bf16.xpose.msra.mxu0 0
    %1415 = vmatprep.subr.bf16.mxu0 0
    %1416 = vmatpush1.bf16.xpose.msra.mxu0 0
    %1417 = vmatprep.subr.bf16.mxu0 0
    %1418 = vmatpush1.bf16.xpose.msra.mxu0 0
    %1419 = vmatprep.subr.bf16.mxu0 0
    %1420 = vmatpush1.bf16.xpose.msra.mxu0 0
    %1421 = vmatprep.subr.bf16.mxu0 0
    %1422 = vmatpush1.bf16.xpose.msra.mxu0 0
    %1423 = vmatprep.subr.bf16.mxu0 0
    %1424 = vmatpush1.bf16.xpose.msra.mxu0 0
    %1425 = vmatprep.subr.bf16.mxu0 0
    %1426 = vmatpush1.bf16.xpose.msra.mxu0 0
    %1427 = vmatprep.subr.bf16.mxu0 0
    %1428 = vmatpush1.bf16.xpose.msra.mxu0 0
    %1429 = vmatprep.subr.bf16.mxu0 0
    %1430 = vmatpush1.bf16.xpose.msra.mxu0 0
    %1431 = vmatprep.subr.bf16.mxu0 0
    %1432 = vmatpush1.bf16.xpose.msra.mxu0 0
    %1433 = vmatprep.subr.bf16.mxu0 0
    %1434 = vmatpush1.bf16.xpose.msra.mxu0 0
    %1435 = vmatprep.subr.bf16.mxu0 0
    %1436 = vmatpush1.bf16.xpose.msra.mxu0 0
    %1437 = vmatprep.mubr.bf16.mxu0 0
    %1438 = vmatmul.mubr.bf16.gmra.mrb[0].mxu0 %v1400
    %v1439 = vpop.f32.mrb[0].mxu0
    %v1440 = vadd.f32 0.0, %v1439
    %v1441 = vpop.f32.mrb[0].mxu0
    %v1442 = vpop.f32.mrb[0].mxu0
    %v1443 = vadd.f32 0.0, %v1442
    %v1444 = vpop.f32.mrb[0].mxu0
    %1445 = vdwg.mxu0
    %v1446 = vmul.f32 %v1440, 0.35355338
    %v1447 = vmul.f32 %v1443, 0.35355338
    %v1448 = vadd.f32 %v1446, %v158
    %v1449 = vadd.f32 %v1447, %v159
    %v1450 = vsel %vm325, %v1448, -inf
    %1451 = vmax.xlane.f32.xlu0 %v1450
    %v1452 = vpop.xlane.xlu0 %1451
    %v1453 = vsel %vm325, %v1449, -inf
    %1454 = vmax.xlane.f32.xlu0 %v1453
    %v1455 = vpop.xlane.xlu0 %1454
    %v1456 = vsub.f32 %v1448, %v1452
    %v1457 = vsub.f32 %v1449, %v1455
    %v1458 = vmul.f32 %v1456, 1.442695
    %v1459 = vpow.pop %v1458
    %v1460 = vmul.f32 %v1457, 1.442695
    %v1461 = vpow.pop %v1460
    %v1462 = vsel %vm325, %v1459, 0.0
    %1463 = vadd.xlane.f32.xlu0 %v1462
    %v1464 = vpop.xlane.xlu0 %1463
    %v1465 = vsel %vm325, %v1461, 0.0
    %1466 = vadd.xlane.f32.xlu0 %v1465
    %v1467 = vpop.xlane.xlu0 %1466
    %v1468 = vrcp.pop %v1464
    %v1469 = vrcp.pop %v1467
    %v1470 = vmul.f32 %v1459, %v1468
    %v1471 = vmul.f32 %v1461, %v1469
    %v1472 = vpack.c.bf16 %v1471, %v1470
    %1473 = vrot.lane.b32.xlu0 %v1268, 56
    %v1474 = vpop.permute.xlu0 %1473
    %v1477 = vsel %vm325, %v1472, 0
    %1479 = vmatprep.subr.bf16.mxu0 0
    %1480 = vmatpush1.bf16.msra.mxu0 %v1474
    %1481 = vmatprep.subr.bf16.mxu0 0
    %1482 = vmatpush1.bf16.msra.mxu0 0
    %1483 = vmatprep.subr.bf16.mxu0 0
    %1484 = vmatpush1.bf16.msra.mxu0 0
    %1485 = vmatprep.subr.bf16.mxu0 0
    %1486 = vmatpush1.bf16.msra.mxu0 0
    %1487 = vmatprep.subr.bf16.mxu0 0
    %1488 = vmatpush1.bf16.msra.mxu0 0
    %1489 = vmatprep.subr.bf16.mxu0 0
    %1490 = vmatpush1.bf16.msra.mxu0 0
    %1491 = vmatprep.subr.bf16.mxu0 0
    %1492 = vmatpush1.bf16.msra.mxu0 0
    %1493 = vmatprep.subr.bf16.mxu0 0
    %1494 = vmatpush1.bf16.msra.mxu0 0
    %1495 = vmatprep.subr.bf16.mxu0 0
    %1496 = vmatpush1.bf16.msra.mxu0 0
    %1497 = vmatprep.subr.bf16.mxu0 0
    %1498 = vmatpush1.bf16.msra.mxu0 0
    %1499 = vmatprep.subr.bf16.mxu0 0
    %1500 = vmatpush1.bf16.msra.mxu0 0
    %1501 = vmatprep.subr.bf16.mxu0 0
    %1502 = vmatpush1.bf16.msra.mxu0 0
    %1503 = vmatprep.subr.bf16.mxu0 0
    %1504 = vmatpush1.bf16.msra.mxu0 0
    %1505 = vmatprep.subr.bf16.mxu0 0
    %1506 = vmatpush1.bf16.msra.mxu0 0
    %1507 = vmatprep.subr.bf16.mxu0 0
    %1508 = vmatpush1.bf16.msra.mxu0 0
    %1509 = vmatprep.subr.bf16.mxu0 0
    %1510 = vmatpush1.bf16.msra.mxu0 0
    %1511 = vmatprep.mubr.bf16.mxu0 0
    %1512 = vmatmul.mubr.bf16.gmra.mrb[0].mxu0 %v1477
    %v1513 = vpop.f32.mrb[0].mxu0
    %v1514 = vadd.f32 0.0, %v1513
    %v1515 = vpop.f32.mrb[0].mxu0
    %v1516 = vpop.f32.mrb[0].mxu0
    %v1517 = vadd.f32 0.0, %v1516
    %v1518 = vpop.f32.mrb[0].mxu0
    %1519 = vdwg.mxu0
    %v1520 = vpack.c.bf16 %v1517, %v1514
    %v1521 = vpack.c.bf16 %v1168, %v1168
    %v1523 = vsel %vm273, %v1520, 0
    %v1526 = vsel %vm528, %v1521, 0
    %1528 = vmatprep.subr.bf16.mxu0 0
    %1529 = vmatpush1.bf16.msra.mxu0 %v1526
    %1530 = vmatprep.subr.bf16.mxu0 0
    %1531 = vmatpush1.bf16.msra.mxu0 0
    %1532 = vmatprep.subr.bf16.mxu0 0
    %1533 = vmatpush1.bf16.msra.mxu0 0
    %1534 = vmatprep.subr.bf16.mxu0 0
    %1535 = vmatpush1.bf16.msra.mxu0 0
    %1536 = vmatprep.subr.bf16.mxu0 0
    %1537 = vmatpush1.bf16.msra.mxu0 0
    %1538 = vmatprep.subr.bf16.mxu0 0
    %1539 = vmatpush1.bf16.msra.mxu0 0
    %1540 = vmatprep.subr.bf16.mxu0 0
    %1541 = vmatpush1.bf16.msra.mxu0 0
    %1542 = vmatprep.subr.bf16.mxu0 0
    %1543 = vmatpush1.bf16.msra.mxu0 0
    %1544 = vmatprep.subr.bf16.mxu0 0
    %1545 = vmatpush1.bf16.msra.mxu0 0
    %1546 = vmatprep.subr.bf16.mxu0 0
    %1547 = vmatpush1.bf16.msra.mxu0 0
    %1548 = vmatprep.subr.bf16.mxu0 0
    %1549 = vmatpush1.bf16.msra.mxu0 0
    %1550 = vmatprep.subr.bf16.mxu0 0
    %1551 = vmatpush1.bf16.msra.mxu0 0
    %1552 = vmatprep.subr.bf16.mxu0 0
    %1553 = vmatpush1.bf16.msra.mxu0 0
    %1554 = vmatprep.subr.bf16.mxu0 0
    %1555 = vmatpush1.bf16.msra.mxu0 0
    %1556 = vmatprep.subr.bf16.mxu0 0
    %1557 = vmatpush1.bf16.msra.mxu0 0
    %1558 = vmatprep.subr.bf16.mxu0 0
    %1559 = vmatpush1.bf16.msra.mxu0 0
    %1560 = vmatprep.mubr.bf16.mxu0 0
    %1561 = vmatmul.mubr.bf16.gmra.mrb[0].mxu0 %v1523
    %v1562 = vpop.f32.mrb[0].mxu0
    %v1563 = vadd.f32 0.0, %v1562
    %v1564 = vpop.f32.mrb[0].mxu0
    %v1565 = vpop.f32.mrb[0].mxu0
    %v1566 = vadd.f32 0.0, %v1565
    %v1567 = vpop.f32.mrb[0].mxu0
    %1568 = vdwg.mxu0
    %v1570 = vsel %vm273, %v1393, 0
    %v1573 = vsel %vm528, %v1394, 0
    %1575 = vmatprep.subr.bf16.mxu0 0
    %1576 = vmatpush1.bf16.msra.mxu0 %v1573
    %1577 = vmatprep.subr.bf16.mxu0 0
    %1578 = vmatpush1.bf16.msra.mxu0 0
    %1579 = vmatprep.subr.bf16.mxu0 0
    %1580 = vmatpush1.bf16.msra.mxu0 0
    %1581 = vmatprep.subr.bf16.mxu0 0
    %1582 = vmatpush1.bf16.msra.mxu0 0
    %1583 = vmatprep.subr.bf16.mxu0 0
    %1584 = vmatpush1.bf16.msra.mxu0 0
    %1585 = vmatprep.subr.bf16.mxu0 0
    %1586 = vmatpush1.bf16.msra.mxu0 0
    %1587 = vmatprep.subr.bf16.mxu0 0
    %1588 = vmatpush1.bf16.msra.mxu0 0
    %1589 = vmatprep.subr.bf16.mxu0 0
    %1590 = vmatpush1.bf16.msra.mxu0 0
    %1591 = vmatprep.subr.bf16.mxu0 0
    %1592 = vmatpush1.bf16.msra.mxu0 0
    %1593 = vmatprep.subr.bf16.mxu0 0
    %1594 = vmatpush1.bf16.msra.mxu0 0
    %1595 = vmatprep.subr.bf16.mxu0 0
    %1596 = vmatpush1.bf16.msra.mxu0 0
    %1597 = vmatprep.subr.bf16.mxu0 0
    %1598 = vmatpush1.bf16.msra.mxu0 0
    %1599 = vmatprep.subr.bf16.mxu0 0
    %1600 = vmatpush1.bf16.msra.mxu0 0
    %1601 = vmatprep.subr.bf16.mxu0 0
    %1602 = vmatpush1.bf16.msra.mxu0 0
    %1603 = vmatprep.subr.bf16.mxu0 0
    %1604 = vmatpush1.bf16.msra.mxu0 0
    %1605 = vmatprep.subr.bf16.mxu0 0
    %1606 = vmatpush1.bf16.msra.mxu0 0
    %1607 = vmatprep.mubr.bf16.mxu0 0
    %1608 = vmatmul.mubr.bf16.gmra.mrb[0].mxu0 %v1570
    %v1609 = vpop.f32.mrb[0].mxu0
    %v1610 = vadd.f32 %v1563, %v1609
    %v1611 = vpop.f32.mrb[0].mxu0
    %v1612 = vpop.f32.mrb[0].mxu0
    %v1613 = vadd.f32 %v1566, %v1612
    %v1614 = vpop.f32.mrb[0].mxu0
    %1615 = vdwg.mxu0
    %1616 = vrot.lane.b32.xlu0 %v1268, 112
    %v1617 = vpop.permute.xlu0 %1616
    %1618 = vrot.lane.b32.xlu0 %v1268, 80
    %v1619 = vpop.permute.xlu0 %1618
    %v1621 = vsel %vm273, %v1617, 0
    %v1624 = vsel %vm273, %v1619, 0
    %1626 = vmatprep.subr.bf16.mxu0 0
    %1627 = vmatpush1.bf16.xpose.msra.mxu0 %v1624
    %1628 = vmatprep.subr.bf16.mxu0 0
    %1629 = vmatpush1.bf16.xpose.msra.mxu0 0
    %1630 = vmatprep.subr.bf16.mxu0 0
    %1631 = vmatpush1.bf16.xpose.msra.mxu0 0
    %1632 = vmatprep.subr.bf16.mxu0 0
    %1633 = vmatpush1.bf16.xpose.msra.mxu0 0
    %1634 = vmatprep.subr.bf16.mxu0 0
    %1635 = vmatpush1.bf16.xpose.msra.mxu0 0
    %1636 = vmatprep.subr.bf16.mxu0 0
    %1637 = vmatpush1.bf16.xpose.msra.mxu0 0
    %1638 = vmatprep.subr.bf16.mxu0 0
    %1639 = vmatpush1.bf16.xpose.msra.mxu0 0
    %1640 = vmatprep.subr.bf16.mxu0 0
    %1641 = vmatpush1.bf16.xpose.msra.mxu0 0
    %1642 = vmatprep.subr.bf16.mxu0 0
    %1643 = vmatpush1.bf16.xpose.msra.mxu0 0
    %1644 = vmatprep.subr.bf16.mxu0 0
    %1645 = vmatpush1.bf16.xpose.msra.mxu0 0
    %1646 = vmatprep.subr.bf16.mxu0 0
    %1647 = vmatpush1.bf16.xpose.msra.mxu0 0
    %1648 = vmatprep.subr.bf16.mxu0 0
    %1649 = vmatpush1.bf16.xpose.msra.mxu0 0
    %1650 = vmatprep.subr.bf16.mxu0 0
    %1651 = vmatpush1.bf16.xpose.msra.mxu0 0
    %1652 = vmatprep.subr.bf16.mxu0 0
    %1653 = vmatpush1.bf16.xpose.msra.mxu0 0
    %1654 = vmatprep.subr.bf16.mxu0 0
    %1655 = vmatpush1.bf16.xpose.msra.mxu0 0
    %1656 = vmatprep.subr.bf16.mxu0 0
    %1657 = vmatpush1.bf16.xpose.msra.mxu0 0
    %1658 = vmatprep.mubr.bf16.mxu0 0
    %1659 = vmatmul.mubr.bf16.gmra.mrb[0].mxu0 %v1621
    %v1660 = vpop.f32.mrb[0].mxu0
    %v1661 = vadd.f32 0.0, %v1660
    %v1662 = vpop.f32.mrb[0].mxu0
    %v1663 = vpop.f32.mrb[0].mxu0
    %v1664 = vadd.f32 0.0, %v1663
    %v1665 = vpop.f32.mrb[0].mxu0
    %1666 = vdwg.mxu0
    %v1667 = vmul.f32 %v1661, 0.35355338
    %v1668 = vmul.f32 %v1664, 0.35355338
    %v1669 = vadd.f32 %v1667, %v158
    %v1670 = vadd.f32 %v1668, %v159
    %v1671 = vsel %vm325, %v1669, -inf
    %1672 = vmax.xlane.f32.xlu0 %v1671
    %v1673 = vpop.xlane.xlu0 %1672
    %v1674 = vsel %vm325, %v1670, -inf
    %1675 = vmax.xlane.f32.xlu0 %v1674
    %v1676 = vpop.xlane.xlu0 %1675
    %v1677 = vsub.f32 %v1669, %v1673
    %v1678 = vsub.f32 %v1670, %v1676
    %v1679 = vmul.f32 %v1677, 1.442695
    %v1680 = vpow.pop %v1679
    %v1681 = vmul.f32 %v1678, 1.442695
    %v1682 = vpow.pop %v1681
    %v1683 = vsel %vm325, %v1680, 0.0
    %1684 = vadd.xlane.f32.xlu0 %v1683
    %v1685 = vpop.xlane.xlu0 %1684
    %v1686 = vsel %vm325, %v1682, 0.0
    %1687 = vadd.xlane.f32.xlu0 %v1686
    %v1688 = vpop.xlane.xlu0 %1687
    %v1689 = vrcp.pop %v1685
    %v1690 = vrcp.pop %v1688
    %v1691 = vmul.f32 %v1680, %v1689
    %v1692 = vmul.f32 %v1682, %v1690
    %v1693 = vpack.c.bf16 %v1692, %v1691
    %1694 = vrot.lane.b32.xlu0 %v1268, 48
    %v1695 = vpop.permute.xlu0 %1694
    %v1698 = vsel %vm325, %v1693, 0
    %1700 = vmatprep.subr.bf16.mxu0 0
    %1701 = vmatpush1.bf16.msra.mxu0 %v1695
    %1702 = vmatprep.subr.bf16.mxu0 0
    %1703 = vmatpush1.bf16.msra.mxu0 0
    %1704 = vmatprep.subr.bf16.mxu0 0
    %1705 = vmatpush1.bf16.msra.mxu0 0
    %1706 = vmatprep.subr.bf16.mxu0 0
    %1707 = vmatpush1.bf16.msra.mxu0 0
    %1708 = vmatprep.subr.bf16.mxu0 0
    %1709 = vmatpush1.bf16.msra.mxu0 0
    %1710 = vmatprep.subr.bf16.mxu0 0
    %1711 = vmatpush1.bf16.msra.mxu0 0
    %1712 = vmatprep.subr.bf16.mxu0 0
    %1713 = vmatpush1.bf16.msra.mxu0 0
    %1714 = vmatprep.subr.bf16.mxu0 0
    %1715 = vmatpush1.bf16.msra.mxu0 0
    %1716 = vmatprep.subr.bf16.mxu0 0
    %1717 = vmatpush1.bf16.msra.mxu0 0
    %1718 = vmatprep.subr.bf16.mxu0 0
    %1719 = vmatpush1.bf16.msra.mxu0 0
    %1720 = vmatprep.subr.bf16.mxu0 0
    %1721 = vmatpush1.bf16.msra.mxu0 0
    %1722 = vmatprep.subr.bf16.mxu0 0
    %1723 = vmatpush1.bf16.msra.mxu0 0
    %1724 = vmatprep.subr.bf16.mxu0 0
    %1725 = vmatpush1.bf16.msra.mxu0 0
    %1726 = vmatprep.subr.bf16.mxu0 0
    %1727 = vmatpush1.bf16.msra.mxu0 0
    %1728 = vmatprep.subr.bf16.mxu0 0
    %1729 = vmatpush1.bf16.msra.mxu0 0
    %1730 = vmatprep.subr.bf16.mxu0 0
    %1731 = vmatpush1.bf16.msra.mxu0 0
    %1732 = vmatprep.mubr.bf16.mxu0 0
    %1733 = vmatmul.mubr.bf16.gmra.mrb[0].mxu0 %v1698
    %v1734 = vpop.f32.mrb[0].mxu0
    %v1735 = vadd.f32 0.0, %v1734
    %v1736 = vpop.f32.mrb[0].mxu0
    %v1737 = vpop.f32.mrb[0].mxu0
    %v1738 = vadd.f32 0.0, %v1737
    %v1739 = vpop.f32.mrb[0].mxu0
    %1740 = vdwg.mxu0
    %v1741 = vpack.c.bf16 %v1738, %v1735
    %v1742 = vpack.c.bf16 %v1169, %v1169
    %v1744 = vsel %vm273, %v1741, 0
    %v1747 = vsel %vm528, %v1742, 0
    %1749 = vmatprep.subr.bf16.mxu0 0
    %1750 = vmatpush1.bf16.msra.mxu0 %v1747
    %1751 = vmatprep.subr.bf16.mxu0 0
    %1752 = vmatpush1.bf16.msra.mxu0 0
    %1753 = vmatprep.subr.bf16.mxu0 0
    %1754 = vmatpush1.bf16.msra.mxu0 0
    %1755 = vmatprep.subr.bf16.mxu0 0
    %1756 = vmatpush1.bf16.msra.mxu0 0
    %1757 = vmatprep.subr.bf16.mxu0 0
    %1758 = vmatpush1.bf16.msra.mxu0 0
    %1759 = vmatprep.subr.bf16.mxu0 0
    %1760 = vmatpush1.bf16.msra.mxu0 0
    %1761 = vmatprep.subr.bf16.mxu0 0
    %1762 = vmatpush1.bf16.msra.mxu0 0
    %1763 = vmatprep.subr.bf16.mxu0 0
    %1764 = vmatpush1.bf16.msra.mxu0 0
    %1765 = vmatprep.subr.bf16.mxu0 0
    %1766 = vmatpush1.bf16.msra.mxu0 0
    %1767 = vmatprep.subr.bf16.mxu0 0
    %1768 = vmatpush1.bf16.msra.mxu0 0
    %1769 = vmatprep.subr.bf16.mxu0 0
    %1770 = vmatpush1.bf16.msra.mxu0 0
    %1771 = vmatprep.subr.bf16.mxu0 0
    %1772 = vmatpush1.bf16.msra.mxu0 0
    %1773 = vmatprep.subr.bf16.mxu0 0
    %1774 = vmatpush1.bf16.msra.mxu0 0
    %1775 = vmatprep.subr.bf16.mxu0 0
    %1776 = vmatpush1.bf16.msra.mxu0 0
    %1777 = vmatprep.subr.bf16.mxu0 0
    %1778 = vmatpush1.bf16.msra.mxu0 0
    %1779 = vmatprep.subr.bf16.mxu0 0
    %1780 = vmatpush1.bf16.msra.mxu0 0
    %1781 = vmatprep.mubr.bf16.mxu0 0
    %1782 = vmatmul.mubr.bf16.gmra.mrb[0].mxu0 %v1744
    %v1783 = vpop.f32.mrb[0].mxu0
    %v1784 = vadd.f32 0.0, %v1783
    %v1785 = vpop.f32.mrb[0].mxu0
    %v1786 = vpop.f32.mrb[0].mxu0
    %v1787 = vadd.f32 0.0, %v1786
    %v1788 = vpop.f32.mrb[0].mxu0
    %1789 = vdwg.mxu0
    %v1790 = vadd.f32 %v1610, %v1784
    %v1791 = vadd.f32 %v1613, %v1787
    %1792 = vrot.lane.b32.xlu0 %v1268, 104
    %v1793 = vpop.permute.xlu0 %1792
    %1794 = vrot.lane.b32.xlu0 %v1268, 72
    %v1795 = vpop.permute.xlu0 %1794
    %v1797 = vsel %vm273, %v1793, 0
    %v1800 = vsel %vm273, %v1795, 0
    %1802 = vmatprep.subr.bf16.mxu0 0
    %1803 = vmatpush1.bf16.xpose.msra.mxu0 %v1800
    %1804 = vmatprep.subr.bf16.mxu0 0
    %1805 = vmatpush1.bf16.xpose.msra.mxu0 0
    %1806 = vmatprep.subr.bf16.mxu0 0
    %1807 = vmatpush1.bf16.xpose.msra.mxu0 0
    %1808 = vmatprep.subr.bf16.mxu0 0
    %1809 = vmatpush1.bf16.xpose.msra.mxu0 0
    %1810 = vmatprep.subr.bf16.mxu0 0
    %1811 = vmatpush1.bf16.xpose.msra.mxu0 0
    %1812 = vmatprep.subr.bf16.mxu0 0
    %1813 = vmatpush1.bf16.xpose.msra.mxu0 0
    %1814 = vmatprep.subr.bf16.mxu0 0
    %1815 = vmatpush1.bf16.xpose.msra.mxu0 0
    %1816 = vmatprep.subr.bf16.mxu0 0
    %1817 = vmatpush1.bf16.xpose.msra.mxu0 0
    %1818 = vmatprep.subr.bf16.mxu0 0
    %1819 = vmatpush1.bf16.xpose.msra.mxu0 0
    %1820 = vmatprep.subr.bf16.mxu0 0
    %1821 = vmatpush1.bf16.xpose.msra.mxu0 0
    %1822 = vmatprep.subr.bf16.mxu0 0
    %1823 = vmatpush1.bf16.xpose.msra.mxu0 0
    %1824 = vmatprep.subr.bf16.mxu0 0
    %1825 = vmatpush1.bf16.xpose.msra.mxu0 0
    %1826 = vmatprep.subr.bf16.mxu0 0
    %1827 = vmatpush1.bf16.xpose.msra.mxu0 0
    %1828 = vmatprep.subr.bf16.mxu0 0
    %1829 = vmatpush1.bf16.xpose.msra.mxu0 0
    %1830 = vmatprep.subr.bf16.mxu0 0
    %1831 = vmatpush1.bf16.xpose.msra.mxu0 0
    %1832 = vmatprep.subr.bf16.mxu0 0
    %1833 = vmatpush1.bf16.xpose.msra.mxu0 0
    %1834 = vmatprep.mubr.bf16.mxu0 0
    %1835 = vmatmul.mubr.bf16.gmra.mrb[0].mxu0 %v1797
    %v1836 = vpop.f32.mrb[0].mxu0
    %v1837 = vadd.f32 0.0, %v1836
    %v1838 = vpop.f32.mrb[0].mxu0
    %v1839 = vpop.f32.mrb[0].mxu0
    %v1840 = vadd.f32 0.0, %v1839
    %v1841 = vpop.f32.mrb[0].mxu0
    %1842 = vdwg.mxu0
    %v1843 = vmul.f32 %v1837, 0.35355338
    %v1844 = vmul.f32 %v1840, 0.35355338
    %v1845 = vadd.f32 %v1843, %v158
    %v1846 = vadd.f32 %v1844, %v159
    %v1847 = vsel %vm325, %v1845, -inf
    %1848 = vmax.xlane.f32.xlu0 %v1847
    %v1849 = vpop.xlane.xlu0 %1848
    %v1850 = vsel %vm325, %v1846, -inf
    %1851 = vmax.xlane.f32.xlu0 %v1850
    %v1852 = vpop.xlane.xlu0 %1851
    %v1853 = vsub.f32 %v1845, %v1849
    %v1854 = vsub.f32 %v1846, %v1852
    %v1855 = vmul.f32 %v1853, 1.442695
    %v1856 = vpow.pop %v1855
    %v1857 = vmul.f32 %v1854, 1.442695
    %v1858 = vpow.pop %v1857
    %v1859 = vsel %vm325, %v1856, 0.0
    %1860 = vadd.xlane.f32.xlu0 %v1859
    %v1861 = vpop.xlane.xlu0 %1860
    %v1862 = vsel %vm325, %v1858, 0.0
    %1863 = vadd.xlane.f32.xlu0 %v1862
    %v1864 = vpop.xlane.xlu0 %1863
    %v1865 = vrcp.pop %v1861
    %v1866 = vrcp.pop %v1864
    %v1867 = vmul.f32 %v1856, %v1865
    %v1868 = vmul.f32 %v1858, %v1866
    %v1869 = vpack.c.bf16 %v1868, %v1867
    %1870 = vrot.lane.b32.xlu0 %v1268, 40
    %v1871 = vpop.permute.xlu0 %1870
    %v1874 = vsel %vm325, %v1869, 0
    %1876 = vmatprep.subr.bf16.mxu0 0
    %1877 = vmatpush1.bf16.msra.mxu0 %v1871
    %1878 = vmatprep.subr.bf16.mxu0 0
    %1879 = vmatpush1.bf16.msra.mxu0 0
    %1880 = vmatprep.subr.bf16.mxu0 0
    %1881 = vmatpush1.bf16.msra.mxu0 0
    %1882 = vmatprep.subr.bf16.mxu0 0
    %1883 = vmatpush1.bf16.msra.mxu0 0
    %1884 = vmatprep.subr.bf16.mxu0 0
    %1885 = vmatpush1.bf16.msra.mxu0 0
    %1886 = vmatprep.subr.bf16.mxu0 0
    %1887 = vmatpush1.bf16.msra.mxu0 0
    %1888 = vmatprep.subr.bf16.mxu0 0
    %1889 = vmatpush1.bf16.msra.mxu0 0
    %1890 = vmatprep.subr.bf16.mxu0 0
    %1891 = vmatpush1.bf16.msra.mxu0 0
    %1892 = vmatprep.subr.bf16.mxu0 0
    %1893 = vmatpush1.bf16.msra.mxu0 0
    %1894 = vmatprep.subr.bf16.mxu0 0
    %1895 = vmatpush1.bf16.msra.mxu0 0
    %1896 = vmatprep.subr.bf16.mxu0 0
    %1897 = vmatpush1.bf16.msra.mxu0 0
    %1898 = vmatprep.subr.bf16.mxu0 0
    %1899 = vmatpush1.bf16.msra.mxu0 0
    %1900 = vmatprep.subr.bf16.mxu0 0
    %1901 = vmatpush1.bf16.msra.mxu0 0
    %1902 = vmatprep.subr.bf16.mxu0 0
    %1903 = vmatpush1.bf16.msra.mxu0 0
    %1904 = vmatprep.subr.bf16.mxu0 0
    %1905 = vmatpush1.bf16.msra.mxu0 0
    %1906 = vmatprep.subr.bf16.mxu0 0
    %1907 = vmatpush1.bf16.msra.mxu0 0
    %1908 = vmatprep.mubr.bf16.mxu0 0
    %1909 = vmatmul.mubr.bf16.gmra.mrb[0].mxu0 %v1874
    %v1910 = vpop.f32.mrb[0].mxu0
    %v1911 = vadd.f32 0.0, %v1910
    %v1912 = vpop.f32.mrb[0].mxu0
    %v1913 = vpop.f32.mrb[0].mxu0
    %v1914 = vadd.f32 0.0, %v1913
    %v1915 = vpop.f32.mrb[0].mxu0
    %1916 = vdwg.mxu0
    %v1917 = vpack.c.bf16 %v1914, %v1911
    %v1918 = vpack.c.bf16 %v1170, %v1170
    %v1920 = vsel %vm273, %v1917, 0
    %v1923 = vsel %vm528, %v1918, 0
    %1925 = vmatprep.subr.bf16.mxu0 0
    %1926 = vmatpush1.bf16.msra.mxu0 %v1923
    %1927 = vmatprep.subr.bf16.mxu0 0
    %1928 = vmatpush1.bf16.msra.mxu0 0
    %1929 = vmatprep.subr.bf16.mxu0 0
    %1930 = vmatpush1.bf16.msra.mxu0 0
    %1931 = vmatprep.subr.bf16.mxu0 0
    %1932 = vmatpush1.bf16.msra.mxu0 0
    %1933 = vmatprep.subr.bf16.mxu0 0
    %1934 = vmatpush1.bf16.msra.mxu0 0
    %1935 = vmatprep.subr.bf16.mxu0 0
    %1936 = vmatpush1.bf16.msra.mxu0 0
    %1937 = vmatprep.subr.bf16.mxu0 0
    %1938 = vmatpush1.bf16.msra.mxu0 0
    %1939 = vmatprep.subr.bf16.mxu0 0
    %1940 = vmatpush1.bf16.msra.mxu0 0
    %1941 = vmatprep.subr.bf16.mxu0 0
    %1942 = vmatpush1.bf16.msra.mxu0 0
    %1943 = vmatprep.subr.bf16.mxu0 0
    %1944 = vmatpush1.bf16.msra.mxu0 0
    %1945 = vmatprep.subr.bf16.mxu0 0
    %1946 = vmatpush1.bf16.msra.mxu0 0
    %1947 = vmatprep.subr.bf16.mxu0 0
    %1948 = vmatpush1.bf16.msra.mxu0 0
    %1949 = vmatprep.subr.bf16.mxu0 0
    %1950 = vmatpush1.bf16.msra.mxu0 0
    %1951 = vmatprep.subr.bf16.mxu0 0
    %1952 = vmatpush1.bf16.msra.mxu0 0
    %1953 = vmatprep.subr.bf16.mxu0 0
    %1954 = vmatpush1.bf16.msra.mxu0 0
    %1955 = vmatprep.subr.bf16.mxu0 0
    %1956 = vmatpush1.bf16.msra.mxu0 0
    %1957 = vmatprep.mubr.bf16.mxu0 0
    %1958 = vmatmul.mubr.bf16.gmra.mrb[0].mxu0 %v1920
    %v1959 = vpop.f32.mrb[0].mxu0
    %v1960 = vadd.f32 0.0, %v1959
    %v1961 = vpop.f32.mrb[0].mxu0
    %v1962 = vpop.f32.mrb[0].mxu0
    %v1963 = vadd.f32 0.0, %v1962
    %v1964 = vpop.f32.mrb[0].mxu0
    %1965 = vdwg.mxu0
    %v1966 = vadd.f32 %v1790, %v1960
    %v1967 = vadd.f32 %v1791, %v1963
    %v1968 = vadd.f32 %v1153, %v1966
    %v1969 = vadd.f32 %v1154, %v1967
    %v1971 = vlaneseq
    %v1972 = vshrl.u32 %v1971, 7
    %v1973 = vsub.s32 0, %v1972
    %v1974 = vrot.slane %v1172, %v1973
    %v1976 = vadd.f32 %v1968, %v1974
    %v1977 = vadd.f32 %v1969, %v1974
    %s1978 = scalar_lea.vmem [#allocation11], 1
    %v1979 = vld [vmem:[%s1978] sm:$0x1]
    %s1980 = scalar_lea.vmem [#allocation13], 1
    %v1981 = vld [vmem:[%s1980] sm:$0x1]
    %v1982 = vsel %vm172, %v1976, 0.0
    %1983 = vadd.xlane.f32.xlu0 %v1982
    %v1984 = vpop.xlane.xlu0 %1983
    %v1985 = vsel %vm172, %v1977, 0.0
    %1986 = vadd.xlane.f32.xlu0 %v1985
    %v1987 = vpop.xlane.xlu0 %1986
    %v1988 = vmul.f32 %v1984, %v179
    %v1989 = vmul.f32 %v1987, %v179
    %v1990 = vsub.f32 %v1976, %v1988
    %v1991 = vsub.f32 %v1977, %v1989
    %v1992 = vmul.f32 %v1990, %v1990
    %v1993 = vmul.f32 %v1991, %v1991
    %v1994 = vsel %vm172, %v1992, 0.0
    %1995 = vadd.xlane.f32.xlu0 %v1994
    %v1996 = vpop.xlane.xlu0 %1995
    %v1997 = vsel %vm172, %v1993, 0.0
    %1998 = vadd.xlane.f32.xlu0 %v1997
    %v1999 = vpop.xlane.xlu0 %1998
    %v2000 = vmul.f32 %v1996, %v179
    %v2001 = vmul.f32 %v1999, %v179
    %v2002 = vadd.f32 %v2000, 1e-05
    %v2003 = vadd.f32 %v2001, 1e-05
    %v2004 = vrsqrt.pop %v2002
    %v2005 = vrsqrt.pop %v2003
    %v2006 = vmul.f32 %v1990, %v2004
    %v2007 = vmul.f32 %v1991, %v2005
    %v2009 = vlaneseq
    %v2010 = vshrl.u32 %v2009, 7
    %v2011 = vsub.s32 0, %v2010
    %v2012 = vrot.slane %v1979, %v2011
    %v2014 = vmul.f32 %v2006, %v2012
    %v2015 = vmul.f32 %v2007, %v2012
    %v2017 = vlaneseq
    %v2018 = vshrl.u32 %v2017, 7
    %v2019 = vsub.s32 0, %v2018
    %v2020 = vrot.slane %v1981, %v2019
    %v2022 = vadd.f32 %v2014, %v2020
    %v2023 = vadd.f32 %v2015, %v2020
    %s2024 = scalar_lea.vmem %s10, 32
    %v2025 = vld [vmem:[%s2024] sm:$0xff]
    %v2026 = vld [vmem:[%s2024 + $0x8] sm:$0xff]
    %v2027 = vld [vmem:[%s2024 + $0x10] sm:$0xff]
    %v2028 = vld [vmem:[%s2024 + $0x18] sm:$0xff]
    %v2029 = vpack.c.bf16 %v2023, %v2022
    %v2030 = vpack.c.bf16 %v2026, %v2025
    %v2031 = vpack.c.bf16 %v2028, %v2027
    %s2032 = scalar_lea.vmem %s11, 1
    %v2033 = vld [vmem:[%s2032] sm:$0x1]
    %v2035 = vlaneseq
    %v2036 = vshrl.u32 %v2035, 7
    %v2037 = vsub.s32 0, %v2036
    %v2038 = vrot.slane %v2033, %v2037
    %v2041 = vsel %vm172, %v2029, 0
    %2043 = vmatprep.subr.bf16.mxu0 0
    %2044 = vmatpush1.bf16.msra.mxu0 %v2030
    %2045 = vmatprep.subr.bf16.mxu0 0
    %2046 = vmatpush1.bf16.msra.mxu0 %v2031
    %2047 = vmatprep.subr.bf16.mxu0 0
    %2048 = vmatpush1.bf16.msra.mxu0 0
    %2049 = vmatprep.subr.bf16.mxu0 0
    %2050 = vmatpush1.bf16.msra.mxu0 0
    %2051 = vmatprep.subr.bf16.mxu0 0
    %2052 = vmatpush1.bf16.msra.mxu0 0
    %2053 = vmatprep.subr.bf16.mxu0 0
    %2054 = vmatpush1.bf16.msra.mxu0 0
    %2055 = vmatprep.subr.bf16.mxu0 0
    %2056 = vmatpush1.bf16.msra.mxu0 0
    %2057 = vmatprep.subr.bf16.mxu0 0
    %2058 = vmatpush1.bf16.msra.mxu0 0
    %2059 = vmatprep.subr.bf16.mxu0 0
    %2060 = vmatpush1.bf16.msra.mxu0 0
    %2061 = vmatprep.subr.bf16.mxu0 0
    %2062 = vmatpush1.bf16.msra.mxu0 0
    %2063 = vmatprep.subr.bf16.mxu0 0
    %2064 = vmatpush1.bf16.msra.mxu0 0
    %2065 = vmatprep.subr.bf16.mxu0 0
    %2066 = vmatpush1.bf16.msra.mxu0 0
    %2067 = vmatprep.subr.bf16.mxu0 0
    %2068 = vmatpush1.bf16.msra.mxu0 0
    %2069 = vmatprep.subr.bf16.mxu0 0
    %2070 = vmatpush1.bf16.msra.mxu0 0
    %2071 = vmatprep.subr.bf16.mxu0 0
    %2072 = vmatpush1.bf16.msra.mxu0 0
    %2073 = vmatprep.subr.bf16.mxu0 0
    %2074 = vmatpush1.bf16.msra.mxu0 0
    %2075 = vmatprep.mubr.bf16.mxu0 0
    %2076 = vmatmul.mubr.bf16.gmra.mrb[0].mxu0 %v2041
    %v2077 = vpop.f32.mrb[0].mxu0
    %v2078 = vadd.f32 %v2038, %v2077
    %v2079 = vpop.f32.mrb[0].mxu0
    %v2080 = vpop.f32.mrb[0].mxu0
    %v2081 = vadd.f32 %v2038, %v2080
    %v2082 = vpop.f32.mrb[0].mxu0
    %2083 = vdwg.mxu0
    %v2084 = vmax.f32 %v2078, 0.0
    %v2085 = vmax.f32 %v2081, 0.0
    %s2086 = scalar_lea.vmem %s12, 64
    %v2087 = vld [vmem:[%s2086] sm:$0xff]
    %v2088 = vld [vmem:[%s2086 + $0x8] sm:$0xff]
    %v2089 = vld [vmem:[%s2086 + $0x10] sm:$0xff]
    %v2090 = vld [vmem:[%s2086 + $0x18] sm:$0xff]
    %v2091 = vld [vmem:[%s2086 + $0x20] sm:$0xff]
    %v2092 = vld [vmem:[%s2086 + $0x28] sm:$0xff]
    %v2093 = vld [vmem:[%s2086 + $0x30] sm:$0xff]
    %v2094 = vld [vmem:[%s2086 + $0x38] sm:$0xff]
    %v2095 = vpack.c.bf16 %v2085, %v2084
    %v2096 = vpack.c.bf16 %v2088, %v2087
    %v2097 = vpack.c.bf16 %v2090, %v2089
    %v2098 = vpack.c.bf16 %v2092, %v2091
    %v2099 = vpack.c.bf16 %v2094, %v2093
    %v2101 = vsel %vm1099, %v2095, 0
    %2103 = vmatprep.subr.bf16.mxu0 0
    %2104 = vmatpush1.bf16.msra.mxu0 %v2096
    %2105 = vmatprep.subr.bf16.mxu0 0
    %2106 = vmatpush1.bf16.msra.mxu0 %v2097
    %2107 = vmatprep.subr.bf16.mxu0 0
    %2108 = vmatpush1.bf16.msra.mxu0 %v2098
    %2109 = vmatprep.subr.bf16.mxu0 0
    %2110 = vmatpush1.bf16.msra.mxu0 %v2099
    %2111 = vmatprep.subr.bf16.mxu0 0
    %2112 = vmatpush1.bf16.msra.mxu0 0
    %2113 = vmatprep.subr.bf16.mxu0 0
    %2114 = vmatpush1.bf16.msra.mxu0 0
    %2115 = vmatprep.subr.bf16.mxu0 0
    %2116 = vmatpush1.bf16.msra.mxu0 0
    %2117 = vmatprep.subr.bf16.mxu0 0
    %2118 = vmatpush1.bf16.msra.mxu0 0
    %2119 = vmatprep.subr.bf16.mxu0 0
    %2120 = vmatpush1.bf16.msra.mxu0 0
    %2121 = vmatprep.subr.bf16.mxu0 0
    %2122 = vmatpush1.bf16.msra.mxu0 0
    %2123 = vmatprep.subr.bf16.mxu0 0
    %2124 = vmatpush1.bf16.msra.mxu0 0
    %2125 = vmatprep.subr.bf16.mxu0 0
    %2126 = vmatpush1.bf16.msra.mxu0 0
    %2127 = vmatprep.subr.bf16.mxu0 0
    %2128 = vmatpush1.bf16.msra.mxu0 0
    %2129 = vmatprep.subr.bf16.mxu0 0
    %2130 = vmatpush1.bf16.msra.mxu0 0
    %2131 = vmatprep.subr.bf16.mxu0 0
    %2132 = vmatpush1.bf16.msra.mxu0 0
    %2133 = vmatprep.subr.bf16.mxu0 0
    %2134 = vmatpush1.bf16.msra.mxu0 0
    %2135 = vmatprep.mubr.bf16.mxu0 0
    %2136 = vmatmul.mubr.bf16.gmra.mrb[0].mxu0 %v2101
    %v2137 = vpop.f32.mrb[0].mxu0
    %v2138 = vadd.f32 0.0, %v2137
    %v2139 = vpop.f32.mrb[0].mxu0
    %v2140 = vpop.f32.mrb[0].mxu0
    %v2141 = vadd.f32 0.0, %v2140
    %v2142 = vpop.f32.mrb[0].mxu0
    %2143 = vdwg.mxu0
    %v2144 = vadd.f32 %v1976, %v2138
    %v2145 = vadd.f32 %v1977, %v2141
    %s2146 = scalar_lea.vmem %s13, 1
    %v2147 = vld [vmem:[%s2146] sm:$0x1]
    %v2149 = vlaneseq
    %v2150 = vshrl.u32 %v2149, 7
    %v2151 = vsub.s32 0, %v2150
    %v2152 = vrot.slane %v2147, %v2151
    %v2154 = vadd.f32 %v2144, %v2152
    %v2155 = vadd.f32 %v2145, %v2152
    %v2156 = vld [vmem:[%s14] sm:$0x1]
    %v2157 = vld [vmem:[%s15] sm:$0x1]
    %v2158 = vsel %vm172, %v2154, 0.0
    %2159 = vadd.xlane.f32.xlu0 %v2158
    %v2160 = vpop.xlane.xlu0 %2159
    %v2161 = vsel %vm172, %v2155, 0.0
    %2162 = vadd.xlane.f32.xlu0 %v2161
    %v2163 = vpop.xlane.xlu0 %2162
    %v2164 = vmul.f32 %v2160, %v179
    %v2165 = vmul.f32 %v2163, %v179
    %v2166 = vsub.f32 %v2154, %v2164
    %v2167 = vsub.f32 %v2155, %v2165
    %v2168 = vmul.f32 %v2166, %v2166
    %v2169 = vmul.f32 %v2167, %v2167
    %v2170 = vsel %vm172, %v2168, 0.0
    %2171 = vadd.xlane.f32.xlu0 %v2170
    %v2172 = vpop.xlane.xlu0 %2171
    %v2173 = vsel %vm172, %v2169, 0.0
    %2174 = vadd.xlane.f32.xlu0 %v2173
    %v2175 = vpop.xlane.xlu0 %2174
    %v2176 = vmul.f32 %v2172, %v179
    %v2177 = vmul.f32 %v2175, %v179
    %v2178 = vadd.f32 %v2176, 1e-05
    %v2179 = vadd.f32 %v2177, 1e-05
    %v2180 = vrsqrt.pop %v2178
    %v2181 = vrsqrt.pop %v2179
    %v2182 = vmul.f32 %v2166, %v2180
    %v2183 = vmul.f32 %v2167, %v2181
    %v2185 = vlaneseq
    %v2186 = vshrl.u32 %v2185, 7
    %v2187 = vsub.s32 0, %v2186
    %v2188 = vrot.slane %v2156, %v2187
    %v2190 = vmul.f32 %v2182, %v2188
    %v2191 = vmul.f32 %v2183, %v2188
    %v2193 = vlaneseq
    %v2194 = vshrl.u32 %v2193, 7
    %v2195 = vsub.s32 0, %v2194
    %v2196 = vrot.slane %v2157, %v2195
    %v2198 = vadd.f32 %v2190, %v2196
    %v2199 = vadd.f32 %v2191, %v2196
    %v2200 = vld [vmem:[%s16] sm:$0xff]
    %v2201 = vld [vmem:[%s16 + $0x8] sm:$0xff]
    %v2202 = vld [vmem:[%s16 + $0x10] sm:$0xff]
    %v2203 = vld [vmem:[%s16 + $0x18] sm:$0xff]
    %v2204 = vpack.c.bf16 %v2199, %v2198
    %v2205 = vpack.c.bf16 %v2201, %v2200
    %v2206 = vpack.c.bf16 %v2203, %v2202
    %v2207 = vld [vmem:[%s17] sm:$0x1]
    %v2209 = vlaneseq
    %v2210 = vshrl.u32 %v2209, 7
    %v2211 = vsub.s32 0, %v2210
    %v2212 = vrot.slane %v2207, %v2211
    %v2215 = vsel %vm172, %v2204, 0
    %2217 = vmatprep.subr.bf16.mxu0 0
    %2218 = vmatpush1.bf16.msra.mxu0 %v2205
    %2219 = vmatprep.subr.bf16.mxu0 0
    %2220 = vmatpush1.bf16.msra.mxu0 %v2206
    %2221 = vmatprep.subr.bf16.mxu0 0
    %2222 = vmatpush1.bf16.msra.mxu0 0
    %2223 = vmatprep.subr.bf16.mxu0 0
    %2224 = vmatpush1.bf16.msra.mxu0 0
    %2225 = vmatprep.subr.bf16.mxu0 0
    %2226 = vmatpush1.bf16.msra.mxu0 0
    %2227 = vmatprep.subr.bf16.mxu0 0
    %2228 = vmatpush1.bf16.msra.mxu0 0
    %2229 = vmatprep.subr.bf16.mxu0 0
    %2230 = vmatpush1.bf16.msra.mxu0 0
    %2231 = vmatprep.subr.bf16.mxu0 0
    %2232 = vmatpush1.bf16.msra.mxu0 0
    %2233 = vmatprep.subr.bf16.mxu0 0
    %2234 = vmatpush1.bf16.msra.mxu0 0
    %2235 = vmatprep.subr.bf16.mxu0 0
    %2236 = vmatpush1.bf16.msra.mxu0 0
    %2237 = vmatprep.subr.bf16.mxu0 0
    %2238 = vmatpush1.bf16.msra.mxu0 0
    %2239 = vmatprep.subr.bf16.mxu0 0
    %2240 = vmatpush1.bf16.msra.mxu0 0
    %2241 = vmatprep.subr.bf16.mxu0 0
    %2242 = vmatpush1.bf16.msra.mxu0 0
    %2243 = vmatprep.subr.bf16.mxu0 0
    %2244 = vmatpush1.bf16.msra.mxu0 0
    %2245 = vmatprep.subr.bf16.mxu0 0
    %2246 = vmatpush1.bf16.msra.mxu0 0
    %2247 = vmatprep.subr.bf16.mxu0 0
    %2248 = vmatpush1.bf16.msra.mxu0 0
    %2249 = vmatprep.mubr.bf16.mxu0 0
    %2250 = vmatmul.mubr.bf16.gmra.mrb[0].mxu0 %v2215
    %v2251 = vpop.f32.mrb[0].mxu0
    %v2252 = vadd.f32 %v2212, %v2251
    %v2253 = vpop.f32.mrb[0].mxu0
    %v2254 = vpop.f32.mrb[0].mxu0
    %v2255 = vadd.f32 %v2212, %v2254
    %v2256 = vpop.f32.mrb[0].mxu0
    %2257 = vdwg.mxu0
    %v2258 = vsel %vm1099, %v2252, -inf
    %2259 = vmax.xlane.f32.xlu0 %v2258
    %v2260 = vpop.xlane.xlu0 %2259
    %v2261 = vsel %vm1099, %v2255, -inf
    %2262 = vmax.xlane.f32.xlu0 %v2261
    %v2263 = vpop.xlane.xlu0 %2262
    %v2264 = vsub.f32 %v2252, %v2260
    %v2265 = vsub.f32 %v2255, %v2263
    %v2266 = vmul.f32 %v2264, 1.442695
    %v2267 = vpow.pop %v2266
    %v2268 = vmul.f32 %v2265, 1.442695
    %v2269 = vpow.pop %v2268
    %v2270 = vsel %vm1099, %v2267, 0.0
    %2271 = vadd.xlane.f32.xlu0 %v2270
    %v2272 = vpop.xlane.xlu0 %2271
    %v2273 = vsel %vm1099, %v2269, 0.0
    %2274 = vadd.xlane.f32.xlu0 %v2273
    %v2275 = vpop.xlane.xlu0 %2274
    %v2276 = vlog2.pop %v2272
    %v2277 = vmul.f32 %v2276, 0.6931472
    %v2278 = vlog2.pop %v2275
    %v2279 = vmul.f32 %v2278, 0.6931472
    %v2280 = vsub.f32 %v2264, %v2277
    %v2281 = vsub.f32 %v2265, %v2279
    %2282 = vst.msk [vmem:[#allocation14] sm:$0xff] %vm1099, %v2280
    %2283 = vst.msk [vmem:[#allocation14 + $0x8] sm:$0xff] %vm1099, %v2281
    // Predicated region
    $region102: #{tpu_custom_call.1} parent=1 // pred_check
      _
    $region103: #{tpu_custom_call.1} parent=1 // pred_check_branch
      %2285 = sbr.rel (0) target = $region105
    $region104: #{tpu_custom_call.1} parent=1 // pred_region
      %s2287 = ssub.s32 256, 256
      %2288 = vsyncadd [#allocation4], %s2287
      %s2289 = sshll.u32 [#allocation14], 4
      %s2290 = int_to_ptr.vmem [resolvable:$true] %s2289
      %2295 = dma.vmem_to_hbm [thread:$0]  %s2290, 256, %s18, [#allocation4], 128, 128, 8
    $region105: #{tpu_custom_call.1} parent=1 // pred_fallthru
      _
    // Predicated region
    $region106: #{tpu_custom_call.1} parent=1 // pred_check
      _
    $region107: #{tpu_custom_call.1} parent=1 // pred_check_branch
      %2297 = sbr.rel (0) target = $region109
    $region108: #{tpu_custom_call.1} parent=1 // pred_region
      %2298 = dma.done [#allocation4], 256
    $region109: #{tpu_custom_call.1} parent=1 // pred_fallthru
      _
    %2299 = vsyncpa [#allocation3], 1
    %2300 = vsyncpa [#allocation6], 1
    %2301 = vsyncpa [#allocation9], 1
    %2302 = vsyncpa [#allocation12], 1
    %2303 = vsyncpa [#allocation4], 1

</llo_original>
